<compile_context>
chip_gen: v5e
topology: v5e:2x2
jax: 0.10.0
libtpu: 0.0.40
codegen_flags: <defaults>
</compile_context>

<pallas_src>
import functools

import numpy as np
import jax
import jax.numpy as jnp
from jax import lax
from jax.experimental import pallas as pl
from jax.experimental.pallas import tpu as pltpu


# --------------------------------------------------------------------------
# Shared math (used both inside the Pallas kernel and in the pure-JAX
# reference; weight arguments may be Refs (kernel) or arrays (reference) and
# are indexed with [...] at their use sites).
# --------------------------------------------------------------------------
def _gelu(x):
    # tanh-approximate GELU: moves the transcendental to the EUP slot instead
    # of a ~10-op VALU erf polynomial on the widest (N, 4C) tensor.
    c = np.float32(0.7978845608028654)  # sqrt(2/pi)
    return 0.5 * x * (1.0 + jnp.tanh(c * (x + np.float32(0.044715) * x * x * x)))


def _layernorm(x, w, b, eps=1e-5):
    mu = jnp.mean(x, axis=-1, keepdims=True)
    xc = x - mu
    var = jnp.mean(xc * xc, axis=-1, keepdims=True)
    return xc * lax.rsqrt(var + np.float32(eps)) * w + b


def _softmax(x):
    m = jnp.max(x, axis=-1, keepdims=True)
    e = jnp.exp(x - m)
    return e / jnp.sum(e, axis=-1, keepdims=True)


_ARF_C4 = np.float32(np.exp(-4.0))


def _arf(x):
    # relu((e^x - e^-x) / (e^x + e^-(x+4)))  ==  (1 - e^{-2 relu(x)}) /
    # (1 + e^{-4} e^{-2 relu(x)}); the factored form never overflows and costs
    # a single exp per element (the relu clamp makes x<=0 map to exactly 0).
    e = jnp.exp(-2.0 * jnp.maximum(x, 0.0))
    return (1.0 - e) / (1.0 + _ARF_C4 * e)


def _mha_heads(q, k, v, num_heads, *, with_attn=False):
    """Per-head attention core on f32 (M, C) q and (Nk, C) k/v.

    q must already be scaled.  Heads are static channel slices; score / AV
    matmuls run with bf16 operands and f32 accumulation.  Returns the
    concatenated head outputs (M, C) in f32 and (optionally) the sum over
    heads of the softmax maps (M, Nk) in f32.
    """
    M, C = q.shape
    hd = C // num_heads
    head_outs = []
    attn_sum = None
    for h in range(num_heads):                      # static, small head count
        c0 = h * hd
        qh = q[:, c0:c0 + hd].astype(jnp.bfloat16)
        kh = k[:, c0:c0 + hd].astype(jnp.bfloat16)
        vh = v[:, c0:c0 + hd].astype(jnp.bfloat16)
        s = lax.dot_general(qh, kh, (((1,), (1,)), ((), ())),
                            preferred_element_type=jnp.float32)
        a = _softmax(s)
        if with_attn:
            attn_sum = a if attn_sum is None else attn_sum + a
        head_outs.append(jnp.dot(a.astype(jnp.bfloat16), vh,
                                 preferred_element_type=jnp.float32))
    return jnp.concatenate(head_outs, axis=-1), attn_sum


def _block_forward(src, tgt, pos,
                   n1w, n1b, n2w, n2b,
                   s_wq, s_wk, s_wv, s_pw, s_pb,
                   c_wq, c_wk, c_wv, c_pw, c_pb,
                   f1w, f1b, f2w, f2b, sa_w,
                   *, num_heads, scale):
    """One MultiscaleBlock forward on (N, C) slabs (f32 residual stream)."""
    N, C = src.shape
    scale = np.float32(scale)
    src = src + pos                                  # pos_embed only on src

    def ln1(x):
        return _layernorm(x, n1w[...], n1b[...])

    def ln2(x):
        return _layernorm(x, n2w[...], n2b[...])

    def mlp(x):
        h = jnp.dot(x.astype(jnp.bfloat16), f1w[...],
                    preferred_element_type=jnp.float32) + f1b[...]
        h = _gelu(h)
        return jnp.dot(h.astype(jnp.bfloat16), f2w[...],
                       preferred_element_type=jnp.float32) + f2b[...]

    # --- self attention (shared sattn weights): stack src & tgt rows so the
    #     QKV and proj matmuls run once on a (2N, C) slab ---
    xs = jnp.concatenate([ln1(src), ln1(tgt)], axis=0).astype(jnp.bfloat16)
    q = jnp.dot(xs, s_wq[...], preferred_element_type=jnp.float32) * scale
    k = jnp.dot(xs, s_wk[...], preferred_element_type=jnp.float32)
    v = jnp.dot(xs, s_wv[...], preferred_element_type=jnp.float32)
    o_src, _ = _mha_heads(q[:N], k[:N], v[:N], num_heads)
    o_tgt, _ = _mha_heads(q[N:], k[N:], v[N:], num_heads)
    o = jnp.concatenate([o_src, o_tgt], axis=0).astype(jnp.bfloat16)
    o = jnp.dot(o, s_pw[...], preferred_element_type=jnp.float32) + s_pb[...]
    srct, tgtt = o[:N], o[N:]

    src = src + srct
    tgt = tgt + tgtt

    # --- MLP on both streams (norm of the attention outputs), rows stacked ---
    xm = jnp.concatenate([ln2(srct), ln2(tgtt)], axis=0)
    m = mlp(xm)
    src = src + m[:N]
    tgt = tgt + m[N:]

    # --- cross attention (src queries, tgt keys/values) ---
    qb = ln1(src).astype(jnp.bfloat16)
    kb = ln1(tgt).astype(jnp.bfloat16)
    q = jnp.dot(qb, c_wq[...], preferred_element_type=jnp.float32) * scale
    k = jnp.dot(kb, c_wk[...], preferred_element_type=jnp.float32)
    v = jnp.dot(kb, c_wv[...], preferred_element_type=jnp.float32)
    o, attn = _mha_heads(q, k, v, num_heads, with_attn=True)     # attn: (N, N)
    srct = jnp.dot(o.astype(jnp.bfloat16), c_pw[...],
                   preferred_element_type=jnp.float32) + c_pb[...]
    srct = _arf(srct)
    src = src + srct
    src = src + mlp(ln2(srct))

    # --- SpatialAttention_heat on tgt:  tgt + tgt * weight * sigmoid(heat) ---
    # column means of attn as an (N, 1) column via one tiny dot_general
    # (no (N,N) identity matrix, no cross-lane relayout).
    ones_col = jnp.full((N, 1), np.float32(1.0 / N), jnp.float32)
    heat = lax.dot_general(attn, ones_col, (((0,), (0,)), ((), ())),
                           preferred_element_type=jnp.float32)   # (N, 1)
    gate = 1.0 / (1.0 + jnp.exp(-heat))
    tgt = tgt + tgt * sa_w[...] * gate

    return src, tgt, attn


# --------------------------------------------------------------------------
# Pallas kernel: one full MultiscaleBlock forward per batch element
# --------------------------------------------------------------------------
def _msblock_kernel(src_ref, tgt_ref, pos_ref,
                    n1w, n1b, n2w, n2b,
                    s_wq, s_wk, s_wv, s_pw, s_pb,
                    c_wq, c_wk, c_wv, c_pw, c_pb,
                    f1w, f1b, f2w, f2b, sa_w,
                    src_out_ref, tgt_out_ref, attn_out_ref,
                    *, num_heads, scale):
    src, tgt, attn = _block_forward(
        src_ref[0], tgt_ref[0], pos_ref[0],
        n1w, n1b, n2w, n2b,
        s_wq, s_wk, s_wv, s_pw, s_pb,
        c_wq, c_wk, c_wv, c_pw, c_pb,
        f1w, f1b, f2w, f2b, sa_w,
        num_heads=num_heads, scale=scale)
    src_out_ref[0] = src
    tgt_out_ref[0] = tgt
    attn_out_ref[0] = attn[1:, 1:]        # [1:,1:] slice done in-kernel


# --------------------------------------------------------------------------
# Wrapper
# --------------------------------------------------------------------------
_BF16_WEIGHTS = ("s_wq", "s_wk", "s_wv", "s_pw",
                 "c_wq", "c_wk", "c_wv", "c_pw",
                 "fc1_w", "fc2_w")

_WEIGHT_ORDER = ("n1_w", "n1_b", "n2_w", "n2_b",
                 "s_wq", "s_wk", "s_wv", "s_pw", "s_pb",
                 "c_wq", "c_wk", "c_wv", "c_pw", "c_pb",
                 "fc1_w", "fc1_b", "fc2_w", "fc2_b", "sa_w")


def _cast_matmul_weights(params):
    p = dict(params)
    for k in _BF16_WEIGHTS:
        p[k] = params[k].astype(jnp.bfloat16)
    return p


def multiscale_block(src, tgt, attm, params, *, num_heads):
    B, N, C = src.shape
    p = _cast_matmul_weights(params)
    scale = float((C // num_heads) ** -0.5)

    kernel = functools.partial(_msblock_kernel, num_heads=num_heads, scale=scale)

    def rep(x):  # weight replicated across the batch grid (constant index map)
        return pl.BlockSpec(x.shape, lambda b: (0,) * x.ndim)

    weight_args = [p[k] for k in _WEIGHT_ORDER]

    in_specs = [
        pl.BlockSpec((1, N, C), lambda b: (b, 0, 0)),   # src
        pl.BlockSpec((1, N, C), lambda b: (b, 0, 0)),   # tgt
        pl.BlockSpec((1, N, C), lambda b: (0, 0, 0)),   # pos_embed
    ] + [rep(w) for w in weight_args]

    out_specs = [
        pl.BlockSpec((1, N, C), lambda b: (b, 0, 0)),
        pl.BlockSpec((1, N, C), lambda b: (b, 0, 0)),
        pl.BlockSpec((1, N - 1, N - 1), lambda b: (b, 0, 0)),
    ]
    out_shape = [
        jax.ShapeDtypeStruct((B, N, C), jnp.float32),
        jax.ShapeDtypeStruct((B, N, C), jnp.float32),
        jax.ShapeDtypeStruct((B, N - 1, N - 1), jnp.float32),
    ]

    src_o, tgt_o, attn_sl = pl.pallas_call(
        kernel,
        out_shape=out_shape,
        grid_spec=pltpu.PrefetchScalarGridSpec(
            num_scalar_prefetch=0, grid=(B,),
            in_specs=in_specs, out_specs=out_specs),
        compiler_params=pltpu.CompilerParams(
            dimension_semantics=("parallel",),          # batch shards over TCs
            vmem_limit_bytes=48 * 1024 * 1024),
    )(src, tgt, p["pos_embed"], *weight_args)

    return src_o, tgt_o, list(attm) + [attn_sl]


# --------------------------------------------------------------------------
# Pure-JAX reference (identical shared math, plain XLA) for validation
# --------------------------------------------------------------------------
def reference(src, tgt, params, num_heads):
    B, N, C = src.shape
    p = _cast_matmul_weights(params)
    scale = float((C // num_heads) ** -0.5)
    w = [p[k] for k in _WEIGHT_ORDER]

    outs = []
    for b in range(B):
        s, t, a = _block_forward(src[b], tgt[b], p["pos_embed"][0], *w,
                                 num_heads=num_heads, scale=scale)
        outs.append((s, t, a[1:, 1:]))
    return (jnp.stack([o[0] for o in outs]),
            jnp.stack([o[1] for o in outs]),
            jnp.stack([o[2] for o in outs]))


# --------------------------------------------------------------------------
# Deterministic parameter init (shapes follow MultiscaleBlock.__init__)
# --------------------------------------------------------------------------
def init_params(key, N, C, mlp_ratio=4.0):
    Hd = int(C * mlp_ratio)
    ks = jax.random.split(key, 16)

    def lin(k, fan_in, shape):
        return jax.random.normal(k, shape, jnp.float32) * np.float32(1.0 / np.sqrt(fan_in))

    return dict(
        pos_embed=0.02 * jax.random.normal(ks[0], (1, N, C), jnp.float32),
        n1_w=jnp.ones((1, C), jnp.float32), n1_b=jnp.zeros((1, C), jnp.float32),
        n2_w=jnp.ones((1, C), jnp.float32), n2_b=jnp.zeros((1, C), jnp.float32),
        # sattn (qkv_bias=False); qkv weight split into Wq/Wk/Wv
        s_wq=lin(ks[1], C, (C, C)), s_wk=lin(ks[2], C, (C, C)), s_wv=lin(ks[3], C, (C, C)),
        s_pw=lin(ks[4], C, (C, C)), s_pb=0.01 * jax.random.normal(ks[5], (1, C), jnp.float32),
        # cattn
        c_wq=lin(ks[6], C, (C, C)), c_wk=lin(ks[7], C, (C, C)), c_wv=lin(ks[8], C, (C, C)),
        c_pw=lin(ks[9], C, (C, C)), c_pb=0.01 * jax.random.normal(ks[10], (1, C), jnp.float32),
        # mlp
        fc1_w=lin(ks[11], C, (C, Hd)), fc1_b=0.01 * jax.random.normal(ks[12], (1, Hd), jnp.float32),
        fc2_w=lin(ks[13], Hd, (Hd, C)), fc2_b=0.01 * jax.random.normal(ks[14], (1, C), jnp.float32),
        # SpatialAttention_heat weight (torch init: ones, shape (1,1,C) -> (1,C))
        sa_w=jnp.ones((1, C), jnp.float32),
    )


if __name__ == "__main__":
    # Small shapes: N = 16 + 1 mirrors the module's "256 + 1" token convention;
    # dim scaled down 768 -> 64, 4 heads, mlp hidden = 4*dim.
    B, N, C, num_heads = 2, 17, 64, 4

    key = jax.random.PRNGKey(0)
    k1, k2, k3 = jax.random.split(key, 3)
    src = jax.random.normal(k1, (B, N, C), jnp.float32)
    tgt = jax.random.normal(k2, (B, N, C), jnp.float32)
    params = init_params(k3, N, C)

    src_o, tgt_o, attm = multiscale_block(src, tgt, [], params, num_heads=num_heads)
    jax.block_until_ready((src_o, tgt_o, attm[-1]))

    rs, rt, rattn = reference(src, tgt, params, num_heads)
    rs, rt, rattn = jax.block_until_ready((rs, rt, rattn))

    # bf16 MXU operands in both paths; tolerance covers XLA-vs-Mosaic rounding.
    np.testing.assert_allclose(np.asarray(src_o), np.asarray(rs), rtol=1e-2, atol=1e-2)
    np.testing.assert_allclose(np.asarray(tgt_o), np.asarray(rt), rtol=1e-2, atol=1e-2)
    np.testing.assert_allclose(np.asarray(attm[-1]), np.asarray(rattn), rtol=1e-2, atol=1e-2)
    print("KERNEL_OK")
</pallas_src>

<mosaic_0001>
module attributes {stable_mosaic.version = 11 : i64} {
  func.func @_msblock_kernel(%arg0: i32, %arg1: memref<1x17x64xf32, #tpu.memory_space<vmem>>, %arg2: memref<1x17x64xf32, #tpu.memory_space<vmem>>, %arg3: memref<1x17x64xf32, #tpu.memory_space<vmem>>, %arg4: memref<1x64xf32, #tpu.memory_space<vmem>>, %arg5: memref<1x64xf32, #tpu.memory_space<vmem>>, %arg6: memref<1x64xf32, #tpu.memory_space<vmem>>, %arg7: memref<1x64xf32, #tpu.memory_space<vmem>>, %arg8: memref<64x64xbf16, #tpu.memory_space<vmem>>, %arg9: memref<64x64xbf16, #tpu.memory_space<vmem>>, %arg10: memref<64x64xbf16, #tpu.memory_space<vmem>>, %arg11: memref<64x64xbf16, #tpu.memory_space<vmem>>, %arg12: memref<1x64xf32, #tpu.memory_space<vmem>>, %arg13: memref<64x64xbf16, #tpu.memory_space<vmem>>, %arg14: memref<64x64xbf16, #tpu.memory_space<vmem>>, %arg15: memref<64x64xbf16, #tpu.memory_space<vmem>>, %arg16: memref<64x64xbf16, #tpu.memory_space<vmem>>, %arg17: memref<1x64xf32, #tpu.memory_space<vmem>>, %arg18: memref<64x256xbf16, #tpu.memory_space<vmem>>, %arg19: memref<1x256xf32, #tpu.memory_space<vmem>>, %arg20: memref<256x64xbf16, #tpu.memory_space<vmem>>, %arg21: memref<1x64xf32, #tpu.memory_space<vmem>>, %arg22: memref<1x64xf32, #tpu.memory_space<vmem>>, %arg23: memref<1x17x64xf32, #tpu.memory_space<vmem>>, %arg24: memref<1x17x64xf32, #tpu.memory_space<vmem>>, %arg25: memref<1x16x16xf32, #tpu.memory_space<vmem>>) attributes {dimension_semantics = [#tpu.dimension_semantics<parallel>], iteration_bounds = array<i64: 2>, scalar_prefetch = 0 : i64, scratch_operands = 0 : i64, tpu.core_type = #tpu.core_type<tc>, window_params = [{transform_indices = @transform_0, window_bounds = array<i64: 1, 17, 64>}, {transform_indices = @transform_1, window_bounds = array<i64: 1, 17, 64>}, {pipeline_mode = #tpu.pipeline_mode<synchronous>, transform_indices = @transform_2, window_bounds = array<i64: 1, 17, 64>}, {pipeline_mode = #tpu.pipeline_mode<synchronous>, transform_indices = @transform_3, window_bounds = array<i64: 1, 64>}, {pipeline_mode = #tpu.pipeline_mode<synchronous>, transform_indices = @transform_4, window_bounds = array<i64: 1, 64>}, {pipeline_mode = #tpu.pipeline_mode<synchronous>, transform_indices = @transform_5, window_bounds = array<i64: 1, 64>}, {pipeline_mode = #tpu.pipeline_mode<synchronous>, transform_indices = @transform_6, window_bounds = array<i64: 1, 64>}, {pipeline_mode = #tpu.pipeline_mode<synchronous>, transform_indices = @transform_7, window_bounds = array<i64: 64, 64>}, {pipeline_mode = #tpu.pipeline_mode<synchronous>, transform_indices = @transform_8, window_bounds = array<i64: 64, 64>}, {pipeline_mode = #tpu.pipeline_mode<synchronous>, transform_indices = @transform_9, window_bounds = array<i64: 64, 64>}, {pipeline_mode = #tpu.pipeline_mode<synchronous>, transform_indices = @transform_10, window_bounds = array<i64: 64, 64>}, {pipeline_mode = #tpu.pipeline_mode<synchronous>, transform_indices = @transform_11, window_bounds = array<i64: 1, 64>}, {pipeline_mode = #tpu.pipeline_mode<synchronous>, transform_indices = @transform_12, window_bounds = array<i64: 64, 64>}, {pipeline_mode = #tpu.pipeline_mode<synchronous>, transform_indices = @transform_13, window_bounds = array<i64: 64, 64>}, {pipeline_mode = #tpu.pipeline_mode<synchronous>, transform_indices = @transform_14, window_bounds = array<i64: 64, 64>}, {pipeline_mode = #tpu.pipeline_mode<synchronous>, transform_indices = @transform_15, window_bounds = array<i64: 64, 64>}, {pipeline_mode = #tpu.pipeline_mode<synchronous>, transform_indices = @transform_16, window_bounds = array<i64: 1, 64>}, {pipeline_mode = #tpu.pipeline_mode<synchronous>, transform_indices = @transform_17, window_bounds = array<i64: 64, 256>}, {pipeline_mode = #tpu.pipeline_mode<synchronous>, transform_indices = @transform_18, window_bounds = array<i64: 1, 256>}, {pipeline_mode = #tpu.pipeline_mode<synchronous>, transform_indices = @transform_19, window_bounds = array<i64: 256, 64>}, {pipeline_mode = #tpu.pipeline_mode<synchronous>, transform_indices = @transform_20, window_bounds = array<i64: 1, 64>}, {pipeline_mode = #tpu.pipeline_mode<synchronous>, transform_indices = @transform_21, window_bounds = array<i64: 1, 64>}, {transform_indices = @transform_22, window_bounds = array<i64: 1, 17, 64>}, {transform_indices = @transform_23, window_bounds = array<i64: 1, 17, 64>}, {transform_indices = @transform_24, window_bounds = array<i64: 1, 16, 16>}]} {
    %c0 = arith.constant 0 : index
    %c0_0 = arith.constant 0 : index
    %c0_1 = arith.constant 0 : index
    %0 = vector.load %arg1[%c0, %c0_0, %c0_1] : memref<1x17x64xf32, #tpu.memory_space<vmem>>, vector<1x17x64xf32>
    %1 = vector.shape_cast %0 : vector<1x17x64xf32> to vector<17x64xf32>
    %c0_2 = arith.constant 0 : index
    %c0_3 = arith.constant 0 : index
    %c0_4 = arith.constant 0 : index
    %2 = vector.load %arg2[%c0_2, %c0_3, %c0_4] : memref<1x17x64xf32, #tpu.memory_space<vmem>>, vector<1x17x64xf32>
    %3 = vector.shape_cast %2 : vector<1x17x64xf32> to vector<17x64xf32>
    %c0_5 = arith.constant 0 : index
    %c0_6 = arith.constant 0 : index
    %c0_7 = arith.constant 0 : index
    %4 = vector.load %arg3[%c0_5, %c0_6, %c0_7] : memref<1x17x64xf32, #tpu.memory_space<vmem>>, vector<1x17x64xf32>
    %5 = vector.shape_cast %4 : vector<1x17x64xf32> to vector<17x64xf32>
    %6 = arith.addf %1, %5 : vector<17x64xf32>
    %c0_8 = arith.constant 0 : index
    %c0_9 = arith.constant 0 : index
    %7 = vector.load %arg4[%c0_8, %c0_9] : memref<1x64xf32, #tpu.memory_space<vmem>>, vector<1x64xf32>
    %c0_10 = arith.constant 0 : index
    %c0_11 = arith.constant 0 : index
    %8 = vector.load %arg5[%c0_10, %c0_11] : memref<1x64xf32, #tpu.memory_space<vmem>>, vector<1x64xf32>
    %cst = arith.constant dense<0.000000e+00> : vector<17xf32>
    %9 = vector.multi_reduction <add>, %6, %cst [1] : vector<17x64xf32> to vector<17xf32>
    %10 = vector.shape_cast %9 : vector<17xf32> to vector<17x1xf32>
    %cst_12 = arith.constant 6.400000e+01 : f32
    %11 = vector.broadcast %cst_12 : f32 to vector<17x1xf32>
    %12 = arith.divf %10, %11 : vector<17x1xf32>
    %13 = vector.broadcast %12 : vector<17x1xf32> to vector<17x64xf32>
    %14 = arith.subf %6, %13 : vector<17x64xf32>
    %15 = arith.mulf %14, %14 : vector<17x64xf32>
    %cst_13 = arith.constant dense<0.000000e+00> : vector<17xf32>
    %16 = vector.multi_reduction <add>, %15, %cst_13 [1] : vector<17x64xf32> to vector<17xf32>
    %17 = vector.shape_cast %16 : vector<17xf32> to vector<17x1xf32>
    %cst_14 = arith.constant 6.400000e+01 : f32
    %18 = vector.broadcast %cst_14 : f32 to vector<17x1xf32>
    %19 = arith.divf %17, %18 : vector<17x1xf32>
    %cst_15 = arith.constant 9.99999974E-6 : f32
    %20 = vector.broadcast %cst_15 : f32 to vector<17x1xf32>
    %21 = arith.addf %19, %20 : vector<17x1xf32>
    %22 = math.rsqrt %21 : vector<17x1xf32>
    %23 = vector.broadcast %22 : vector<17x1xf32> to vector<17x64xf32>
    %24 = arith.mulf %14, %23 : vector<17x64xf32>
    %25 = vector.broadcast %7 : vector<1x64xf32> to vector<17x64xf32>
    %26 = arith.mulf %24, %25 : vector<17x64xf32>
    %27 = vector.broadcast %8 : vector<1x64xf32> to vector<17x64xf32>
    %28 = arith.addf %26, %27 : vector<17x64xf32>
    %c0_16 = arith.constant 0 : index
    %c0_17 = arith.constant 0 : index
    %29 = vector.load %arg4[%c0_16, %c0_17] : memref<1x64xf32, #tpu.memory_space<vmem>>, vector<1x64xf32>
    %c0_18 = arith.constant 0 : index
    %c0_19 = arith.constant 0 : index
    %30 = vector.load %arg5[%c0_18, %c0_19] : memref<1x64xf32, #tpu.memory_space<vmem>>, vector<1x64xf32>
    %cst_20 = arith.constant dense<0.000000e+00> : vector<17xf32>
    %31 = vector.multi_reduction <add>, %3, %cst_20 [1] : vector<17x64xf32> to vector<17xf32>
    %32 = vector.shape_cast %31 : vector<17xf32> to vector<17x1xf32>
    %cst_21 = arith.constant 6.400000e+01 : f32
    %33 = vector.broadcast %cst_21 : f32 to vector<17x1xf32>
    %34 = arith.divf %32, %33 : vector<17x1xf32>
    %35 = vector.broadcast %34 : vector<17x1xf32> to vector<17x64xf32>
    %36 = arith.subf %3, %35 : vector<17x64xf32>
    %37 = arith.mulf %36, %36 : vector<17x64xf32>
    %cst_22 = arith.constant dense<0.000000e+00> : vector<17xf32>
    %38 = vector.multi_reduction <add>, %37, %cst_22 [1] : vector<17x64xf32> to vector<17xf32>
    %39 = vector.shape_cast %38 : vector<17xf32> to vector<17x1xf32>
    %cst_23 = arith.constant 6.400000e+01 : f32
    %40 = vector.broadcast %cst_23 : f32 to vector<17x1xf32>
    %41 = arith.divf %39, %40 : vector<17x1xf32>
    %cst_24 = arith.constant 9.99999974E-6 : f32
    %42 = vector.broadcast %cst_24 : f32 to vector<17x1xf32>
    %43 = arith.addf %41, %42 : vector<17x1xf32>
    %44 = math.rsqrt %43 : vector<17x1xf32>
    %45 = vector.broadcast %44 : vector<17x1xf32> to vector<17x64xf32>
    %46 = arith.mulf %36, %45 : vector<17x64xf32>
    %47 = vector.broadcast %29 : vector<1x64xf32> to vector<17x64xf32>
    %48 = arith.mulf %46, %47 : vector<17x64xf32>
    %49 = vector.broadcast %30 : vector<1x64xf32> to vector<17x64xf32>
    %50 = arith.addf %48, %49 : vector<17x64xf32>
    %51 = tpu.concatenate %28, %50 in 0 : vector<17x64xf32>, vector<17x64xf32> -> vector<34x64xf32>
    %52 = arith.truncf %51 : vector<34x64xf32> to vector<34x64xbf16>
    %c0_25 = arith.constant 0 : index
    %c0_26 = arith.constant 0 : index
    %53 = vector.load %arg8[%c0_25, %c0_26] : memref<64x64xbf16, #tpu.memory_space<vmem>>, vector<64x64xbf16>
    %cst_27 = arith.constant dense<0.000000e+00> : vector<34x64xf32>
    %54 = tpu.matmul %52, %53, %cst_27 {dimension_numbers = #tpu.dot_dimension_numbers<[1], [0], [0], [1], [0, 0, 1, 1], [], []>} : vector<34x64xbf16>, vector<64x64xbf16>, vector<34x64xf32> -> vector<34x64xf32>
    %cst_28 = arith.constant 2.500000e-01 : f32
    %55 = vector.broadcast %cst_28 : f32 to vector<34x64xf32>
    %56 = arith.mulf %54, %55 : vector<34x64xf32>
    %c0_29 = arith.constant 0 : index
    %c0_30 = arith.constant 0 : index
    %57 = vector.load %arg9[%c0_29, %c0_30] : memref<64x64xbf16, #tpu.memory_space<vmem>>, vector<64x64xbf16>
    %cst_31 = arith.constant dense<0.000000e+00> : vector<34x64xf32>
    %58 = tpu.matmul %52, %57, %cst_31 {dimension_numbers = #tpu.dot_dimension_numbers<[1], [0], [0], [1], [0, 0, 1, 1], [], []>} : vector<34x64xbf16>, vector<64x64xbf16>, vector<34x64xf32> -> vector<34x64xf32>
    %c0_32 = arith.constant 0 : index
    %c0_33 = arith.constant 0 : index
    %59 = vector.load %arg10[%c0_32, %c0_33] : memref<64x64xbf16, #tpu.memory_space<vmem>>, vector<64x64xbf16>
    %cst_34 = arith.constant dense<0.000000e+00> : vector<34x64xf32>
    %60 = tpu.matmul %52, %59, %cst_34 {dimension_numbers = #tpu.dot_dimension_numbers<[1], [0], [0], [1], [0, 0, 1, 1], [], []>} : vector<34x64xbf16>, vector<64x64xbf16>, vector<34x64xf32> -> vector<34x64xf32>
    %61 = vector.extract_strided_slice %56 {offsets = [0, 0], sizes = [17, 64], strides = [1, 1]} : vector<34x64xf32> to vector<17x64xf32>
    %62 = vector.extract_strided_slice %58 {offsets = [0, 0], sizes = [17, 64], strides = [1, 1]} : vector<34x64xf32> to vector<17x64xf32>
    %63 = vector.extract_strided_slice %60 {offsets = [0, 0], sizes = [17, 64], strides = [1, 1]} : vector<34x64xf32> to vector<17x64xf32>
    %64 = vector.extract_strided_slice %61 {offsets = [0, 0], sizes = [17, 16], strides = [1, 1]} : vector<17x64xf32> to vector<17x16xf32>
    %65 = arith.truncf %64 : vector<17x16xf32> to vector<17x16xbf16>
    %66 = vector.extract_strided_slice %62 {offsets = [0, 0], sizes = [17, 16], strides = [1, 1]} : vector<17x64xf32> to vector<17x16xf32>
    %67 = arith.truncf %66 : vector<17x16xf32> to vector<17x16xbf16>
    %68 = vector.extract_strided_slice %63 {offsets = [0, 0], sizes = [17, 16], strides = [1, 1]} : vector<17x64xf32> to vector<17x16xf32>
    %69 = arith.truncf %68 : vector<17x16xf32> to vector<17x16xbf16>
    %cst_35 = arith.constant dense<0.000000e+00> : vector<17x17xf32>
    %70 = tpu.matmul %65, %67, %cst_35 {dimension_numbers = #tpu.dot_dimension_numbers<[1], [1], [0], [0], [0, 0, 1, 0], [], []>} : vector<17x16xbf16>, vector<17x16xbf16>, vector<17x17xf32> -> vector<17x17xf32>
    %cst_36 = arith.constant dense<0xFF800000> : vector<17xf32>
    %71 = vector.multi_reduction <maximumf>, %70, %cst_36 [1] : vector<17x17xf32> to vector<17xf32>
    %72 = vector.shape_cast %71 : vector<17xf32> to vector<17x1xf32>
    %73 = vector.broadcast %72 : vector<17x1xf32> to vector<17x17xf32>
    %74 = arith.subf %70, %73 : vector<17x17xf32>
    %75 = math.exp %74 : vector<17x17xf32>
    %cst_37 = arith.constant dense<0.000000e+00> : vector<17xf32>
    %76 = vector.multi_reduction <add>, %75, %cst_37 [1] : vector<17x17xf32> to vector<17xf32>
    %77 = vector.shape_cast %76 : vector<17xf32> to vector<17x1xf32>
    %78 = vector.broadcast %77 : vector<17x1xf32> to vector<17x17xf32>
    %79 = arith.divf %75, %78 : vector<17x17xf32>
    %80 = arith.truncf %79 : vector<17x17xf32> to vector<17x17xbf16>
    %cst_38 = arith.constant dense<0.000000e+00> : vector<17x16xf32>
    %81 = tpu.matmul %80, %69, %cst_38 {dimension_numbers = #tpu.dot_dimension_numbers<[1], [0], [0], [1], [0, 0, 1, 1], [], []>} : vector<17x17xbf16>, vector<17x16xbf16>, vector<17x16xf32> -> vector<17x16xf32>
    %82 = vector.extract_strided_slice %61 {offsets = [0, 16], sizes = [17, 16], strides = [1, 1]} : vector<17x64xf32> to vector<17x16xf32>
    %83 = arith.truncf %82 : vector<17x16xf32> to vector<17x16xbf16>
    %84 = vector.extract_strided_slice %62 {offsets = [0, 16], sizes = [17, 16], strides = [1, 1]} : vector<17x64xf32> to vector<17x16xf32>
    %85 = arith.truncf %84 : vector<17x16xf32> to vector<17x16xbf16>
    %86 = vector.extract_strided_slice %63 {offsets = [0, 16], sizes = [17, 16], strides = [1, 1]} : vector<17x64xf32> to vector<17x16xf32>
    %87 = arith.truncf %86 : vector<17x16xf32> to vector<17x16xbf16>
    %cst_39 = arith.constant dense<0.000000e+00> : vector<17x17xf32>
    %88 = tpu.matmul %83, %85, %cst_39 {dimension_numbers = #tpu.dot_dimension_numbers<[1], [1], [0], [0], [0, 0, 1, 0], [], []>} : vector<17x16xbf16>, vector<17x16xbf16>, vector<17x17xf32> -> vector<17x17xf32>
    %cst_40 = arith.constant dense<0xFF800000> : vector<17xf32>
    %89 = vector.multi_reduction <maximumf>, %88, %cst_40 [1] : vector<17x17xf32> to vector<17xf32>
    %90 = vector.shape_cast %89 : vector<17xf32> to vector<17x1xf32>
    %91 = vector.broadcast %90 : vector<17x1xf32> to vector<17x17xf32>
    %92 = arith.subf %88, %91 : vector<17x17xf32>
    %93 = math.exp %92 : vector<17x17xf32>
    %cst_41 = arith.constant dense<0.000000e+00> : vector<17xf32>
    %94 = vector.multi_reduction <add>, %93, %cst_41 [1] : vector<17x17xf32> to vector<17xf32>
    %95 = vector.shape_cast %94 : vector<17xf32> to vector<17x1xf32>
    %96 = vector.broadcast %95 : vector<17x1xf32> to vector<17x17xf32>
    %97 = arith.divf %93, %96 : vector<17x17xf32>
    %98 = arith.truncf %97 : vector<17x17xf32> to vector<17x17xbf16>
    %cst_42 = arith.constant dense<0.000000e+00> : vector<17x16xf32>
    %99 = tpu.matmul %98, %87, %cst_42 {dimension_numbers = #tpu.dot_dimension_numbers<[1], [0], [0], [1], [0, 0, 1, 1], [], []>} : vector<17x17xbf16>, vector<17x16xbf16>, vector<17x16xf32> -> vector<17x16xf32>
    %100 = vector.extract_strided_slice %61 {offsets = [0, 32], sizes = [17, 16], strides = [1, 1]} : vector<17x64xf32> to vector<17x16xf32>
    %101 = arith.truncf %100 : vector<17x16xf32> to vector<17x16xbf16>
    %102 = vector.extract_strided_slice %62 {offsets = [0, 32], sizes = [17, 16], strides = [1, 1]} : vector<17x64xf32> to vector<17x16xf32>
    %103 = arith.truncf %102 : vector<17x16xf32> to vector<17x16xbf16>
    %104 = vector.extract_strided_slice %63 {offsets = [0, 32], sizes = [17, 16], strides = [1, 1]} : vector<17x64xf32> to vector<17x16xf32>
    %105 = arith.truncf %104 : vector<17x16xf32> to vector<17x16xbf16>
    %cst_43 = arith.constant dense<0.000000e+00> : vector<17x17xf32>
    %106 = tpu.matmul %101, %103, %cst_43 {dimension_numbers = #tpu.dot_dimension_numbers<[1], [1], [0], [0], [0, 0, 1, 0], [], []>} : vector<17x16xbf16>, vector<17x16xbf16>, vector<17x17xf32> -> vector<17x17xf32>
    %cst_44 = arith.constant dense<0xFF800000> : vector<17xf32>
    %107 = vector.multi_reduction <maximumf>, %106, %cst_44 [1] : vector<17x17xf32> to vector<17xf32>
    %108 = vector.shape_cast %107 : vector<17xf32> to vector<17x1xf32>
    %109 = vector.broadcast %108 : vector<17x1xf32> to vector<17x17xf32>
    %110 = arith.subf %106, %109 : vector<17x17xf32>
    %111 = math.exp %110 : vector<17x17xf32>
    %cst_45 = arith.constant dense<0.000000e+00> : vector<17xf32>
    %112 = vector.multi_reduction <add>, %111, %cst_45 [1] : vector<17x17xf32> to vector<17xf32>
    %113 = vector.shape_cast %112 : vector<17xf32> to vector<17x1xf32>
    %114 = vector.broadcast %113 : vector<17x1xf32> to vector<17x17xf32>
    %115 = arith.divf %111, %114 : vector<17x17xf32>
    %116 = arith.truncf %115 : vector<17x17xf32> to vector<17x17xbf16>
    %cst_46 = arith.constant dense<0.000000e+00> : vector<17x16xf32>
    %117 = tpu.matmul %116, %105, %cst_46 {dimension_numbers = #tpu.dot_dimension_numbers<[1], [0], [0], [1], [0, 0, 1, 1], [], []>} : vector<17x17xbf16>, vector<17x16xbf16>, vector<17x16xf32> -> vector<17x16xf32>
    %118 = vector.extract_strided_slice %61 {offsets = [0, 48], sizes = [17, 16], strides = [1, 1]} : vector<17x64xf32> to vector<17x16xf32>
    %119 = arith.truncf %118 : vector<17x16xf32> to vector<17x16xbf16>
    %120 = vector.extract_strided_slice %62 {offsets = [0, 48], sizes = [17, 16], strides = [1, 1]} : vector<17x64xf32> to vector<17x16xf32>
    %121 = arith.truncf %120 : vector<17x16xf32> to vector<17x16xbf16>
    %122 = vector.extract_strided_slice %63 {offsets = [0, 48], sizes = [17, 16], strides = [1, 1]} : vector<17x64xf32> to vector<17x16xf32>
    %123 = arith.truncf %122 : vector<17x16xf32> to vector<17x16xbf16>
    %cst_47 = arith.constant dense<0.000000e+00> : vector<17x17xf32>
    %124 = tpu.matmul %119, %121, %cst_47 {dimension_numbers = #tpu.dot_dimension_numbers<[1], [1], [0], [0], [0, 0, 1, 0], [], []>} : vector<17x16xbf16>, vector<17x16xbf16>, vector<17x17xf32> -> vector<17x17xf32>
    %cst_48 = arith.constant dense<0xFF800000> : vector<17xf32>
    %125 = vector.multi_reduction <maximumf>, %124, %cst_48 [1] : vector<17x17xf32> to vector<17xf32>
    %126 = vector.shape_cast %125 : vector<17xf32> to vector<17x1xf32>
    %127 = vector.broadcast %126 : vector<17x1xf32> to vector<17x17xf32>
    %128 = arith.subf %124, %127 : vector<17x17xf32>
    %129 = math.exp %128 : vector<17x17xf32>
    %cst_49 = arith.constant dense<0.000000e+00> : vector<17xf32>
    %130 = vector.multi_reduction <add>, %129, %cst_49 [1] : vector<17x17xf32> to vector<17xf32>
    %131 = vector.shape_cast %130 : vector<17xf32> to vector<17x1xf32>
    %132 = vector.broadcast %131 : vector<17x1xf32> to vector<17x17xf32>
    %133 = arith.divf %129, %132 : vector<17x17xf32>
    %134 = arith.truncf %133 : vector<17x17xf32> to vector<17x17xbf16>
    %cst_50 = arith.constant dense<0.000000e+00> : vector<17x16xf32>
    %135 = tpu.matmul %134, %123, %cst_50 {dimension_numbers = #tpu.dot_dimension_numbers<[1], [0], [0], [1], [0, 0, 1, 1], [], []>} : vector<17x17xbf16>, vector<17x16xbf16>, vector<17x16xf32> -> vector<17x16xf32>
    %136 = tpu.concatenate %81, %99, %117, %135 in 1 : vector<17x16xf32>, vector<17x16xf32>, vector<17x16xf32>, vector<17x16xf32> -> vector<17x64xf32>
    %137 = vector.extract_strided_slice %56 {offsets = [17, 0], sizes = [17, 64], strides = [1, 1]} : vector<34x64xf32> to vector<17x64xf32>
    %138 = vector.extract_strided_slice %58 {offsets = [17, 0], sizes = [17, 64], strides = [1, 1]} : vector<34x64xf32> to vector<17x64xf32>
    %139 = vector.extract_strided_slice %60 {offsets = [17, 0], sizes = [17, 64], strides = [1, 1]} : vector<34x64xf32> to vector<17x64xf32>
    %140 = vector.extract_strided_slice %137 {offsets = [0, 0], sizes = [17, 16], strides = [1, 1]} : vector<17x64xf32> to vector<17x16xf32>
    %141 = arith.truncf %140 : vector<17x16xf32> to vector<17x16xbf16>
    %142 = vector.extract_strided_slice %138 {offsets = [0, 0], sizes = [17, 16], strides = [1, 1]} : vector<17x64xf32> to vector<17x16xf32>
    %143 = arith.truncf %142 : vector<17x16xf32> to vector<17x16xbf16>
    %144 = vector.extract_strided_slice %139 {offsets = [0, 0], sizes = [17, 16], strides = [1, 1]} : vector<17x64xf32> to vector<17x16xf32>
    %145 = arith.truncf %144 : vector<17x16xf32> to vector<17x16xbf16>
    %cst_51 = arith.constant dense<0.000000e+00> : vector<17x17xf32>
    %146 = tpu.matmul %141, %143, %cst_51 {dimension_numbers = #tpu.dot_dimension_numbers<[1], [1], [0], [0], [0, 0, 1, 0], [], []>} : vector<17x16xbf16>, vector<17x16xbf16>, vector<17x17xf32> -> vector<17x17xf32>
    %cst_52 = arith.constant dense<0xFF800000> : vector<17xf32>
    %147 = vector.multi_reduction <maximumf>, %146, %cst_52 [1] : vector<17x17xf32> to vector<17xf32>
    %148 = vector.shape_cast %147 : vector<17xf32> to vector<17x1xf32>
    %149 = vector.broadcast %148 : vector<17x1xf32> to vector<17x17xf32>
    %150 = arith.subf %146, %149 : vector<17x17xf32>
    %151 = math.exp %150 : vector<17x17xf32>
    %cst_53 = arith.constant dense<0.000000e+00> : vector<17xf32>
    %152 = vector.multi_reduction <add>, %151, %cst_53 [1] : vector<17x17xf32> to vector<17xf32>
    %153 = vector.shape_cast %152 : vector<17xf32> to vector<17x1xf32>
    %154 = vector.broadcast %153 : vector<17x1xf32> to vector<17x17xf32>
    %155 = arith.divf %151, %154 : vector<17x17xf32>
    %156 = arith.truncf %155 : vector<17x17xf32> to vector<17x17xbf16>
    %cst_54 = arith.constant dense<0.000000e+00> : vector<17x16xf32>
    %157 = tpu.matmul %156, %145, %cst_54 {dimension_numbers = #tpu.dot_dimension_numbers<[1], [0], [0], [1], [0, 0, 1, 1], [], []>} : vector<17x17xbf16>, vector<17x16xbf16>, vector<17x16xf32> -> vector<17x16xf32>
    %158 = vector.extract_strided_slice %137 {offsets = [0, 16], sizes = [17, 16], strides = [1, 1]} : vector<17x64xf32> to vector<17x16xf32>
    %159 = arith.truncf %158 : vector<17x16xf32> to vector<17x16xbf16>
    %160 = vector.extract_strided_slice %138 {offsets = [0, 16], sizes = [17, 16], strides = [1, 1]} : vector<17x64xf32> to vector<17x16xf32>
    %161 = arith.truncf %160 : vector<17x16xf32> to vector<17x16xbf16>
    %162 = vector.extract_strided_slice %139 {offsets = [0, 16], sizes = [17, 16], strides = [1, 1]} : vector<17x64xf32> to vector<17x16xf32>
    %163 = arith.truncf %162 : vector<17x16xf32> to vector<17x16xbf16>
    %cst_55 = arith.constant dense<0.000000e+00> : vector<17x17xf32>
    %164 = tpu.matmul %159, %161, %cst_55 {dimension_numbers = #tpu.dot_dimension_numbers<[1], [1], [0], [0], [0, 0, 1, 0], [], []>} : vector<17x16xbf16>, vector<17x16xbf16>, vector<17x17xf32> -> vector<17x17xf32>
    %cst_56 = arith.constant dense<0xFF800000> : vector<17xf32>
    %165 = vector.multi_reduction <maximumf>, %164, %cst_56 [1] : vector<17x17xf32> to vector<17xf32>
    %166 = vector.shape_cast %165 : vector<17xf32> to vector<17x1xf32>
    %167 = vector.broadcast %166 : vector<17x1xf32> to vector<17x17xf32>
    %168 = arith.subf %164, %167 : vector<17x17xf32>
    %169 = math.exp %168 : vector<17x17xf32>
    %cst_57 = arith.constant dense<0.000000e+00> : vector<17xf32>
    %170 = vector.multi_reduction <add>, %169, %cst_57 [1] : vector<17x17xf32> to vector<17xf32>
    %171 = vector.shape_cast %170 : vector<17xf32> to vector<17x1xf32>
    %172 = vector.broadcast %171 : vector<17x1xf32> to vector<17x17xf32>
    %173 = arith.divf %169, %172 : vector<17x17xf32>
    %174 = arith.truncf %173 : vector<17x17xf32> to vector<17x17xbf16>
    %cst_58 = arith.constant dense<0.000000e+00> : vector<17x16xf32>
    %175 = tpu.matmul %174, %163, %cst_58 {dimension_numbers = #tpu.dot_dimension_numbers<[1], [0], [0], [1], [0, 0, 1, 1], [], []>} : vector<17x17xbf16>, vector<17x16xbf16>, vector<17x16xf32> -> vector<17x16xf32>
    %176 = vector.extract_strided_slice %137 {offsets = [0, 32], sizes = [17, 16], strides = [1, 1]} : vector<17x64xf32> to vector<17x16xf32>
    %177 = arith.truncf %176 : vector<17x16xf32> to vector<17x16xbf16>
    %178 = vector.extract_strided_slice %138 {offsets = [0, 32], sizes = [17, 16], strides = [1, 1]} : vector<17x64xf32> to vector<17x16xf32>
    %179 = arith.truncf %178 : vector<17x16xf32> to vector<17x16xbf16>
    %180 = vector.extract_strided_slice %139 {offsets = [0, 32], sizes = [17, 16], strides = [1, 1]} : vector<17x64xf32> to vector<17x16xf32>
    %181 = arith.truncf %180 : vector<17x16xf32> to vector<17x16xbf16>
    %cst_59 = arith.constant dense<0.000000e+00> : vector<17x17xf32>
    %182 = tpu.matmul %177, %179, %cst_59 {dimension_numbers = #tpu.dot_dimension_numbers<[1], [1], [0], [0], [0, 0, 1, 0], [], []>} : vector<17x16xbf16>, vector<17x16xbf16>, vector<17x17xf32> -> vector<17x17xf32>
    %cst_60 = arith.constant dense<0xFF800000> : vector<17xf32>
    %183 = vector.multi_reduction <maximumf>, %182, %cst_60 [1] : vector<17x17xf32> to vector<17xf32>
    %184 = vector.shape_cast %183 : vector<17xf32> to vector<17x1xf32>
    %185 = vector.broadcast %184 : vector<17x1xf32> to vector<17x17xf32>
    %186 = arith.subf %182, %185 : vector<17x17xf32>
    %187 = math.exp %186 : vector<17x17xf32>
    %cst_61 = arith.constant dense<0.000000e+00> : vector<17xf32>
    %188 = vector.multi_reduction <add>, %187, %cst_61 [1] : vector<17x17xf32> to vector<17xf32>
    %189 = vector.shape_cast %188 : vector<17xf32> to vector<17x1xf32>
    %190 = vector.broadcast %189 : vector<17x1xf32> to vector<17x17xf32>
    %191 = arith.divf %187, %190 : vector<17x17xf32>
    %192 = arith.truncf %191 : vector<17x17xf32> to vector<17x17xbf16>
    %cst_62 = arith.constant dense<0.000000e+00> : vector<17x16xf32>
    %193 = tpu.matmul %192, %181, %cst_62 {dimension_numbers = #tpu.dot_dimension_numbers<[1], [0], [0], [1], [0, 0, 1, 1], [], []>} : vector<17x17xbf16>, vector<17x16xbf16>, vector<17x16xf32> -> vector<17x16xf32>
    %194 = vector.extract_strided_slice %137 {offsets = [0, 48], sizes = [17, 16], strides = [1, 1]} : vector<17x64xf32> to vector<17x16xf32>
    %195 = arith.truncf %194 : vector<17x16xf32> to vector<17x16xbf16>
    %196 = vector.extract_strided_slice %138 {offsets = [0, 48], sizes = [17, 16], strides = [1, 1]} : vector<17x64xf32> to vector<17x16xf32>
    %197 = arith.truncf %196 : vector<17x16xf32> to vector<17x16xbf16>
    %198 = vector.extract_strided_slice %139 {offsets = [0, 48], sizes = [17, 16], strides = [1, 1]} : vector<17x64xf32> to vector<17x16xf32>
    %199 = arith.truncf %198 : vector<17x16xf32> to vector<17x16xbf16>
    %cst_63 = arith.constant dense<0.000000e+00> : vector<17x17xf32>
    %200 = tpu.matmul %195, %197, %cst_63 {dimension_numbers = #tpu.dot_dimension_numbers<[1], [1], [0], [0], [0, 0, 1, 0], [], []>} : vector<17x16xbf16>, vector<17x16xbf16>, vector<17x17xf32> -> vector<17x17xf32>
    %cst_64 = arith.constant dense<0xFF800000> : vector<17xf32>
    %201 = vector.multi_reduction <maximumf>, %200, %cst_64 [1] : vector<17x17xf32> to vector<17xf32>
    %202 = vector.shape_cast %201 : vector<17xf32> to vector<17x1xf32>
    %203 = vector.broadcast %202 : vector<17x1xf32> to vector<17x17xf32>
    %204 = arith.subf %200, %203 : vector<17x17xf32>
    %205 = math.exp %204 : vector<17x17xf32>
    %cst_65 = arith.constant dense<0.000000e+00> : vector<17xf32>
    %206 = vector.multi_reduction <add>, %205, %cst_65 [1] : vector<17x17xf32> to vector<17xf32>
    %207 = vector.shape_cast %206 : vector<17xf32> to vector<17x1xf32>
    %208 = vector.broadcast %207 : vector<17x1xf32> to vector<17x17xf32>
    %209 = arith.divf %205, %208 : vector<17x17xf32>
    %210 = arith.truncf %209 : vector<17x17xf32> to vector<17x17xbf16>
    %cst_66 = arith.constant dense<0.000000e+00> : vector<17x16xf32>
    %211 = tpu.matmul %210, %199, %cst_66 {dimension_numbers = #tpu.dot_dimension_numbers<[1], [0], [0], [1], [0, 0, 1, 1], [], []>} : vector<17x17xbf16>, vector<17x16xbf16>, vector<17x16xf32> -> vector<17x16xf32>
    %212 = tpu.concatenate %157, %175, %193, %211 in 1 : vector<17x16xf32>, vector<17x16xf32>, vector<17x16xf32>, vector<17x16xf32> -> vector<17x64xf32>
    %213 = tpu.concatenate %136, %212 in 0 : vector<17x64xf32>, vector<17x64xf32> -> vector<34x64xf32>
    %214 = arith.truncf %213 : vector<34x64xf32> to vector<34x64xbf16>
    %c0_67 = arith.constant 0 : index
    %c0_68 = arith.constant 0 : index
    %215 = vector.load %arg11[%c0_67, %c0_68] : memref<64x64xbf16, #tpu.memory_space<vmem>>, vector<64x64xbf16>
    %cst_69 = arith.constant dense<0.000000e+00> : vector<34x64xf32>
    %216 = tpu.matmul %214, %215, %cst_69 {dimension_numbers = #tpu.dot_dimension_numbers<[1], [0], [0], [1], [0, 0, 1, 1], [], []>} : vector<34x64xbf16>, vector<64x64xbf16>, vector<34x64xf32> -> vector<34x64xf32>
    %c0_70 = arith.constant 0 : index
    %c0_71 = arith.constant 0 : index
    %217 = vector.load %arg12[%c0_70, %c0_71] : memref<1x64xf32, #tpu.memory_space<vmem>>, vector<1x64xf32>
    %218 = vector.broadcast %217 : vector<1x64xf32> to vector<34x64xf32>
    %219 = arith.addf %216, %218 : vector<34x64xf32>
    %220 = vector.extract_strided_slice %219 {offsets = [0, 0], sizes = [17, 64], strides = [1, 1]} : vector<34x64xf32> to vector<17x64xf32>
    %221 = vector.extract_strided_slice %219 {offsets = [17, 0], sizes = [17, 64], strides = [1, 1]} : vector<34x64xf32> to vector<17x64xf32>
    %222 = arith.addf %6, %220 : vector<17x64xf32>
    %223 = arith.addf %3, %221 : vector<17x64xf32>
    %c0_72 = arith.constant 0 : index
    %c0_73 = arith.constant 0 : index
    %224 = vector.load %arg6[%c0_72, %c0_73] : memref<1x64xf32, #tpu.memory_space<vmem>>, vector<1x64xf32>
    %c0_74 = arith.constant 0 : index
    %c0_75 = arith.constant 0 : index
    %225 = vector.load %arg7[%c0_74, %c0_75] : memref<1x64xf32, #tpu.memory_space<vmem>>, vector<1x64xf32>
    %cst_76 = arith.constant dense<0.000000e+00> : vector<17xf32>
    %226 = vector.multi_reduction <add>, %220, %cst_76 [1] : vector<17x64xf32> to vector<17xf32>
    %227 = vector.shape_cast %226 : vector<17xf32> to vector<17x1xf32>
    %cst_77 = arith.constant 6.400000e+01 : f32
    %228 = vector.broadcast %cst_77 : f32 to vector<17x1xf32>
    %229 = arith.divf %227, %228 : vector<17x1xf32>
    %230 = vector.broadcast %229 : vector<17x1xf32> to vector<17x64xf32>
    %231 = arith.subf %220, %230 : vector<17x64xf32>
    %232 = arith.mulf %231, %231 : vector<17x64xf32>
    %cst_78 = arith.constant dense<0.000000e+00> : vector<17xf32>
    %233 = vector.multi_reduction <add>, %232, %cst_78 [1] : vector<17x64xf32> to vector<17xf32>
    %234 = vector.shape_cast %233 : vector<17xf32> to vector<17x1xf32>
    %cst_79 = arith.constant 6.400000e+01 : f32
    %235 = vector.broadcast %cst_79 : f32 to vector<17x1xf32>
    %236 = arith.divf %234, %235 : vector<17x1xf32>
    %cst_80 = arith.constant 9.99999974E-6 : f32
    %237 = vector.broadcast %cst_80 : f32 to vector<17x1xf32>
    %238 = arith.addf %236, %237 : vector<17x1xf32>
    %239 = math.rsqrt %238 : vector<17x1xf32>
    %240 = vector.broadcast %239 : vector<17x1xf32> to vector<17x64xf32>
    %241 = arith.mulf %231, %240 : vector<17x64xf32>
    %242 = vector.broadcast %224 : vector<1x64xf32> to vector<17x64xf32>
    %243 = arith.mulf %241, %242 : vector<17x64xf32>
    %244 = vector.broadcast %225 : vector<1x64xf32> to vector<17x64xf32>
    %245 = arith.addf %243, %244 : vector<17x64xf32>
    %c0_81 = arith.constant 0 : index
    %c0_82 = arith.constant 0 : index
    %246 = vector.load %arg6[%c0_81, %c0_82] : memref<1x64xf32, #tpu.memory_space<vmem>>, vector<1x64xf32>
    %c0_83 = arith.constant 0 : index
    %c0_84 = arith.constant 0 : index
    %247 = vector.load %arg7[%c0_83, %c0_84] : memref<1x64xf32, #tpu.memory_space<vmem>>, vector<1x64xf32>
    %cst_85 = arith.constant dense<0.000000e+00> : vector<17xf32>
    %248 = vector.multi_reduction <add>, %221, %cst_85 [1] : vector<17x64xf32> to vector<17xf32>
    %249 = vector.shape_cast %248 : vector<17xf32> to vector<17x1xf32>
    %cst_86 = arith.constant 6.400000e+01 : f32
    %250 = vector.broadcast %cst_86 : f32 to vector<17x1xf32>
    %251 = arith.divf %249, %250 : vector<17x1xf32>
    %252 = vector.broadcast %251 : vector<17x1xf32> to vector<17x64xf32>
    %253 = arith.subf %221, %252 : vector<17x64xf32>
    %254 = arith.mulf %253, %253 : vector<17x64xf32>
    %cst_87 = arith.constant dense<0.000000e+00> : vector<17xf32>
    %255 = vector.multi_reduction <add>, %254, %cst_87 [1] : vector<17x64xf32> to vector<17xf32>
    %256 = vector.shape_cast %255 : vector<17xf32> to vector<17x1xf32>
    %cst_88 = arith.constant 6.400000e+01 : f32
    %257 = vector.broadcast %cst_88 : f32 to vector<17x1xf32>
    %258 = arith.divf %256, %257 : vector<17x1xf32>
    %cst_89 = arith.constant 9.99999974E-6 : f32
    %259 = vector.broadcast %cst_89 : f32 to vector<17x1xf32>
    %260 = arith.addf %258, %259 : vector<17x1xf32>
    %261 = math.rsqrt %260 : vector<17x1xf32>
    %262 = vector.broadcast %261 : vector<17x1xf32> to vector<17x64xf32>
    %263 = arith.mulf %253, %262 : vector<17x64xf32>
    %264 = vector.broadcast %246 : vector<1x64xf32> to vector<17x64xf32>
    %265 = arith.mulf %263, %264 : vector<17x64xf32>
    %266 = vector.broadcast %247 : vector<1x64xf32> to vector<17x64xf32>
    %267 = arith.addf %265, %266 : vector<17x64xf32>
    %268 = tpu.concatenate %245, %267 in 0 : vector<17x64xf32>, vector<17x64xf32> -> vector<34x64xf32>
    %269 = arith.truncf %268 : vector<34x64xf32> to vector<34x64xbf16>
    %c0_90 = arith.constant 0 : index
    %c0_91 = arith.constant 0 : index
    %270 = vector.load %arg18[%c0_90, %c0_91] : memref<64x256xbf16, #tpu.memory_space<vmem>>, vector<64x256xbf16>
    %cst_92 = arith.constant dense<0.000000e+00> : vector<34x256xf32>
    %271 = tpu.matmul %269, %270, %cst_92 {dimension_numbers = #tpu.dot_dimension_numbers<[1], [0], [0], [1], [0, 0, 1, 1], [], []>} : vector<34x64xbf16>, vector<64x256xbf16>, vector<34x256xf32> -> vector<34x256xf32>
    %c0_93 = arith.constant 0 : index
    %c0_94 = arith.constant 0 : index
    %272 = vector.load %arg19[%c0_93, %c0_94] : memref<1x256xf32, #tpu.memory_space<vmem>>, vector<1x256xf32>
    %273 = vector.broadcast %272 : vector<1x256xf32> to vector<34x256xf32>
    %274 = arith.addf %271, %273 : vector<34x256xf32>
    %cst_95 = arith.constant 5.000000e-01 : f32
    %275 = vector.broadcast %cst_95 : f32 to vector<34x256xf32>
    %276 = arith.mulf %275, %274 : vector<34x256xf32>
    %cst_96 = arith.constant 4.471500e-02 : f32
    %277 = vector.broadcast %cst_96 : f32 to vector<34x256xf32>
    %278 = arith.mulf %277, %274 : vector<34x256xf32>
    %279 = arith.mulf %278, %274 : vector<34x256xf32>
    %280 = arith.mulf %279, %274 : vector<34x256xf32>
    %281 = arith.addf %274, %280 : vector<34x256xf32>
    %cst_97 = arith.constant 0.797884583 : f32
    %282 = vector.broadcast %cst_97 : f32 to vector<34x256xf32>
    %283 = arith.mulf %282, %281 : vector<34x256xf32>
    %284 = math.tanh %283 : vector<34x256xf32>
    %cst_98 = arith.constant 1.000000e+00 : f32
    %285 = vector.broadcast %cst_98 : f32 to vector<34x256xf32>
    %286 = arith.addf %285, %284 : vector<34x256xf32>
    %287 = arith.mulf %276, %286 : vector<34x256xf32>
    %288 = arith.truncf %287 : vector<34x256xf32> to vector<34x256xbf16>
    %c0_99 = arith.constant 0 : index
    %c0_100 = arith.constant 0 : index
    %289 = vector.load %arg20[%c0_99, %c0_100] : memref<256x64xbf16, #tpu.memory_space<vmem>>, vector<256x64xbf16>
    %cst_101 = arith.constant dense<0.000000e+00> : vector<34x64xf32>
    %290 = tpu.matmul %288, %289, %cst_101 {dimension_numbers = #tpu.dot_dimension_numbers<[1], [0], [0], [1], [0, 0, 1, 1], [], []>} : vector<34x256xbf16>, vector<256x64xbf16>, vector<34x64xf32> -> vector<34x64xf32>
    %c0_102 = arith.constant 0 : index
    %c0_103 = arith.constant 0 : index
    %291 = vector.load %arg21[%c0_102, %c0_103] : memref<1x64xf32, #tpu.memory_space<vmem>>, vector<1x64xf32>
    %292 = vector.broadcast %291 : vector<1x64xf32> to vector<34x64xf32>
    %293 = arith.addf %290, %292 : vector<34x64xf32>
    %294 = vector.extract_strided_slice %293 {offsets = [0, 0], sizes = [17, 64], strides = [1, 1]} : vector<34x64xf32> to vector<17x64xf32>
    %295 = arith.addf %222, %294 : vector<17x64xf32>
    %296 = vector.extract_strided_slice %293 {offsets = [17, 0], sizes = [17, 64], strides = [1, 1]} : vector<34x64xf32> to vector<17x64xf32>
    %297 = arith.addf %223, %296 : vector<17x64xf32>
    %c0_104 = arith.constant 0 : index
    %c0_105 = arith.constant 0 : index
    %298 = vector.load %arg4[%c0_104, %c0_105] : memref<1x64xf32, #tpu.memory_space<vmem>>, vector<1x64xf32>
    %c0_106 = arith.constant 0 : index
    %c0_107 = arith.constant 0 : index
    %299 = vector.load %arg5[%c0_106, %c0_107] : memref<1x64xf32, #tpu.memory_space<vmem>>, vector<1x64xf32>
    %cst_108 = arith.constant dense<0.000000e+00> : vector<17xf32>
    %300 = vector.multi_reduction <add>, %295, %cst_108 [1] : vector<17x64xf32> to vector<17xf32>
    %301 = vector.shape_cast %300 : vector<17xf32> to vector<17x1xf32>
    %cst_109 = arith.constant 6.400000e+01 : f32
    %302 = vector.broadcast %cst_109 : f32 to vector<17x1xf32>
    %303 = arith.divf %301, %302 : vector<17x1xf32>
    %304 = vector.broadcast %303 : vector<17x1xf32> to vector<17x64xf32>
    %305 = arith.subf %295, %304 : vector<17x64xf32>
    %306 = arith.mulf %305, %305 : vector<17x64xf32>
    %cst_110 = arith.constant dense<0.000000e+00> : vector<17xf32>
    %307 = vector.multi_reduction <add>, %306, %cst_110 [1] : vector<17x64xf32> to vector<17xf32>
    %308 = vector.shape_cast %307 : vector<17xf32> to vector<17x1xf32>
    %cst_111 = arith.constant 6.400000e+01 : f32
    %309 = vector.broadcast %cst_111 : f32 to vector<17x1xf32>
    %310 = arith.divf %308, %309 : vector<17x1xf32>
    %cst_112 = arith.constant 9.99999974E-6 : f32
    %311 = vector.broadcast %cst_112 : f32 to vector<17x1xf32>
    %312 = arith.addf %310, %311 : vector<17x1xf32>
    %313 = math.rsqrt %312 : vector<17x1xf32>
    %314 = vector.broadcast %313 : vector<17x1xf32> to vector<17x64xf32>
    %315 = arith.mulf %305, %314 : vector<17x64xf32>
    %316 = vector.broadcast %298 : vector<1x64xf32> to vector<17x64xf32>
    %317 = arith.mulf %315, %316 : vector<17x64xf32>
    %318 = vector.broadcast %299 : vector<1x64xf32> to vector<17x64xf32>
    %319 = arith.addf %317, %318 : vector<17x64xf32>
    %320 = arith.truncf %319 : vector<17x64xf32> to vector<17x64xbf16>
    %c0_113 = arith.constant 0 : index
    %c0_114 = arith.constant 0 : index
    %321 = vector.load %arg4[%c0_113, %c0_114] : memref<1x64xf32, #tpu.memory_space<vmem>>, vector<1x64xf32>
    %c0_115 = arith.constant 0 : index
    %c0_116 = arith.constant 0 : index
    %322 = vector.load %arg5[%c0_115, %c0_116] : memref<1x64xf32, #tpu.memory_space<vmem>>, vector<1x64xf32>
    %cst_117 = arith.constant dense<0.000000e+00> : vector<17xf32>
    %323 = vector.multi_reduction <add>, %297, %cst_117 [1] : vector<17x64xf32> to vector<17xf32>
    %324 = vector.shape_cast %323 : vector<17xf32> to vector<17x1xf32>
    %cst_118 = arith.constant 6.400000e+01 : f32
    %325 = vector.broadcast %cst_118 : f32 to vector<17x1xf32>
    %326 = arith.divf %324, %325 : vector<17x1xf32>
    %327 = vector.broadcast %326 : vector<17x1xf32> to vector<17x64xf32>
    %328 = arith.subf %297, %327 : vector<17x64xf32>
    %329 = arith.mulf %328, %328 : vector<17x64xf32>
    %cst_119 = arith.constant dense<0.000000e+00> : vector<17xf32>
    %330 = vector.multi_reduction <add>, %329, %cst_119 [1] : vector<17x64xf32> to vector<17xf32>
    %331 = vector.shape_cast %330 : vector<17xf32> to vector<17x1xf32>
    %cst_120 = arith.constant 6.400000e+01 : f32
    %332 = vector.broadcast %cst_120 : f32 to vector<17x1xf32>
    %333 = arith.divf %331, %332 : vector<17x1xf32>
    %cst_121 = arith.constant 9.99999974E-6 : f32
    %334 = vector.broadcast %cst_121 : f32 to vector<17x1xf32>
    %335 = arith.addf %333, %334 : vector<17x1xf32>
    %336 = math.rsqrt %335 : vector<17x1xf32>
    %337 = vector.broadcast %336 : vector<17x1xf32> to vector<17x64xf32>
    %338 = arith.mulf %328, %337 : vector<17x64xf32>
    %339 = vector.broadcast %321 : vector<1x64xf32> to vector<17x64xf32>
    %340 = arith.mulf %338, %339 : vector<17x64xf32>
    %341 = vector.broadcast %322 : vector<1x64xf32> to vector<17x64xf32>
    %342 = arith.addf %340, %341 : vector<17x64xf32>
    %343 = arith.truncf %342 : vector<17x64xf32> to vector<17x64xbf16>
    %c0_122 = arith.constant 0 : index
    %c0_123 = arith.constant 0 : index
    %344 = vector.load %arg13[%c0_122, %c0_123] : memref<64x64xbf16, #tpu.memory_space<vmem>>, vector<64x64xbf16>
    %cst_124 = arith.constant dense<0.000000e+00> : vector<17x64xf32>
    %345 = tpu.matmul %320, %344, %cst_124 {dimension_numbers = #tpu.dot_dimension_numbers<[1], [0], [0], [1], [0, 0, 1, 1], [], []>} : vector<17x64xbf16>, vector<64x64xbf16>, vector<17x64xf32> -> vector<17x64xf32>
    %cst_125 = arith.constant 2.500000e-01 : f32
    %346 = vector.broadcast %cst_125 : f32 to vector<17x64xf32>
    %347 = arith.mulf %345, %346 : vector<17x64xf32>
    %c0_126 = arith.constant 0 : index
    %c0_127 = arith.constant 0 : index
    %348 = vector.load %arg14[%c0_126, %c0_127] : memref<64x64xbf16, #tpu.memory_space<vmem>>, vector<64x64xbf16>
    %cst_128 = arith.constant dense<0.000000e+00> : vector<17x64xf32>
    %349 = tpu.matmul %343, %348, %cst_128 {dimension_numbers = #tpu.dot_dimension_numbers<[1], [0], [0], [1], [0, 0, 1, 1], [], []>} : vector<17x64xbf16>, vector<64x64xbf16>, vector<17x64xf32> -> vector<17x64xf32>
    %c0_129 = arith.constant 0 : index
    %c0_130 = arith.constant 0 : index
    %350 = vector.load %arg15[%c0_129, %c0_130] : memref<64x64xbf16, #tpu.memory_space<vmem>>, vector<64x64xbf16>
    %cst_131 = arith.constant dense<0.000000e+00> : vector<17x64xf32>
    %351 = tpu.matmul %343, %350, %cst_131 {dimension_numbers = #tpu.dot_dimension_numbers<[1], [0], [0], [1], [0, 0, 1, 1], [], []>} : vector<17x64xbf16>, vector<64x64xbf16>, vector<17x64xf32> -> vector<17x64xf32>
    %352 = vector.extract_strided_slice %347 {offsets = [0, 0], sizes = [17, 16], strides = [1, 1]} : vector<17x64xf32> to vector<17x16xf32>
    %353 = arith.truncf %352 : vector<17x16xf32> to vector<17x16xbf16>
    %354 = vector.extract_strided_slice %349 {offsets = [0, 0], sizes = [17, 16], strides = [1, 1]} : vector<17x64xf32> to vector<17x16xf32>
    %355 = arith.truncf %354 : vector<17x16xf32> to vector<17x16xbf16>
    %356 = vector.extract_strided_slice %351 {offsets = [0, 0], sizes = [17, 16], strides = [1, 1]} : vector<17x64xf32> to vector<17x16xf32>
    %357 = arith.truncf %356 : vector<17x16xf32> to vector<17x16xbf16>
    %cst_132 = arith.constant dense<0.000000e+00> : vector<17x17xf32>
    %358 = tpu.matmul %353, %355, %cst_132 {dimension_numbers = #tpu.dot_dimension_numbers<[1], [1], [0], [0], [0, 0, 1, 0], [], []>} : vector<17x16xbf16>, vector<17x16xbf16>, vector<17x17xf32> -> vector<17x17xf32>
    %cst_133 = arith.constant dense<0xFF800000> : vector<17xf32>
    %359 = vector.multi_reduction <maximumf>, %358, %cst_133 [1] : vector<17x17xf32> to vector<17xf32>
    %360 = vector.shape_cast %359 : vector<17xf32> to vector<17x1xf32>
    %361 = vector.broadcast %360 : vector<17x1xf32> to vector<17x17xf32>
    %362 = arith.subf %358, %361 : vector<17x17xf32>
    %363 = math.exp %362 : vector<17x17xf32>
    %cst_134 = arith.constant dense<0.000000e+00> : vector<17xf32>
    %364 = vector.multi_reduction <add>, %363, %cst_134 [1] : vector<17x17xf32> to vector<17xf32>
    %365 = vector.shape_cast %364 : vector<17xf32> to vector<17x1xf32>
    %366 = vector.broadcast %365 : vector<17x1xf32> to vector<17x17xf32>
    %367 = arith.divf %363, %366 : vector<17x17xf32>
    %368 = arith.truncf %367 : vector<17x17xf32> to vector<17x17xbf16>
    %cst_135 = arith.constant dense<0.000000e+00> : vector<17x16xf32>
    %369 = tpu.matmul %368, %357, %cst_135 {dimension_numbers = #tpu.dot_dimension_numbers<[1], [0], [0], [1], [0, 0, 1, 1], [], []>} : vector<17x17xbf16>, vector<17x16xbf16>, vector<17x16xf32> -> vector<17x16xf32>
    %370 = vector.extract_strided_slice %347 {offsets = [0, 16], sizes = [17, 16], strides = [1, 1]} : vector<17x64xf32> to vector<17x16xf32>
    %371 = arith.truncf %370 : vector<17x16xf32> to vector<17x16xbf16>
    %372 = vector.extract_strided_slice %349 {offsets = [0, 16], sizes = [17, 16], strides = [1, 1]} : vector<17x64xf32> to vector<17x16xf32>
    %373 = arith.truncf %372 : vector<17x16xf32> to vector<17x16xbf16>
    %374 = vector.extract_strided_slice %351 {offsets = [0, 16], sizes = [17, 16], strides = [1, 1]} : vector<17x64xf32> to vector<17x16xf32>
    %375 = arith.truncf %374 : vector<17x16xf32> to vector<17x16xbf16>
    %cst_136 = arith.constant dense<0.000000e+00> : vector<17x17xf32>
    %376 = tpu.matmul %371, %373, %cst_136 {dimension_numbers = #tpu.dot_dimension_numbers<[1], [1], [0], [0], [0, 0, 1, 0], [], []>} : vector<17x16xbf16>, vector<17x16xbf16>, vector<17x17xf32> -> vector<17x17xf32>
    %cst_137 = arith.constant dense<0xFF800000> : vector<17xf32>
    %377 = vector.multi_reduction <maximumf>, %376, %cst_137 [1] : vector<17x17xf32> to vector<17xf32>
    %378 = vector.shape_cast %377 : vector<17xf32> to vector<17x1xf32>
    %379 = vector.broadcast %378 : vector<17x1xf32> to vector<17x17xf32>
    %380 = arith.subf %376, %379 : vector<17x17xf32>
    %381 = math.exp %380 : vector<17x17xf32>
    %cst_138 = arith.constant dense<0.000000e+00> : vector<17xf32>
    %382 = vector.multi_reduction <add>, %381, %cst_138 [1] : vector<17x17xf32> to vector<17xf32>
    %383 = vector.shape_cast %382 : vector<17xf32> to vector<17x1xf32>
    %384 = vector.broadcast %383 : vector<17x1xf32> to vector<17x17xf32>
    %385 = arith.divf %381, %384 : vector<17x17xf32>
    %386 = arith.addf %367, %385 : vector<17x17xf32>
    %387 = arith.truncf %385 : vector<17x17xf32> to vector<17x17xbf16>
    %cst_139 = arith.constant dense<0.000000e+00> : vector<17x16xf32>
    %388 = tpu.matmul %387, %375, %cst_139 {dimension_numbers = #tpu.dot_dimension_numbers<[1], [0], [0], [1], [0, 0, 1, 1], [], []>} : vector<17x17xbf16>, vector<17x16xbf16>, vector<17x16xf32> -> vector<17x16xf32>
    %389 = vector.extract_strided_slice %347 {offsets = [0, 32], sizes = [17, 16], strides = [1, 1]} : vector<17x64xf32> to vector<17x16xf32>
    %390 = arith.truncf %389 : vector<17x16xf32> to vector<17x16xbf16>
    %391 = vector.extract_strided_slice %349 {offsets = [0, 32], sizes = [17, 16], strides = [1, 1]} : vector<17x64xf32> to vector<17x16xf32>
    %392 = arith.truncf %391 : vector<17x16xf32> to vector<17x16xbf16>
    %393 = vector.extract_strided_slice %351 {offsets = [0, 32], sizes = [17, 16], strides = [1, 1]} : vector<17x64xf32> to vector<17x16xf32>
    %394 = arith.truncf %393 : vector<17x16xf32> to vector<17x16xbf16>
    %cst_140 = arith.constant dense<0.000000e+00> : vector<17x17xf32>
    %395 = tpu.matmul %390, %392, %cst_140 {dimension_numbers = #tpu.dot_dimension_numbers<[1], [1], [0], [0], [0, 0, 1, 0], [], []>} : vector<17x16xbf16>, vector<17x16xbf16>, vector<17x17xf32> -> vector<17x17xf32>
    %cst_141 = arith.constant dense<0xFF800000> : vector<17xf32>
    %396 = vector.multi_reduction <maximumf>, %395, %cst_141 [1] : vector<17x17xf32> to vector<17xf32>
    %397 = vector.shape_cast %396 : vector<17xf32> to vector<17x1xf32>
    %398 = vector.broadcast %397 : vector<17x1xf32> to vector<17x17xf32>
    %399 = arith.subf %395, %398 : vector<17x17xf32>
    %400 = math.exp %399 : vector<17x17xf32>
    %cst_142 = arith.constant dense<0.000000e+00> : vector<17xf32>
    %401 = vector.multi_reduction <add>, %400, %cst_142 [1] : vector<17x17xf32> to vector<17xf32>
    %402 = vector.shape_cast %401 : vector<17xf32> to vector<17x1xf32>
    %403 = vector.broadcast %402 : vector<17x1xf32> to vector<17x17xf32>
    %404 = arith.divf %400, %403 : vector<17x17xf32>
    %405 = arith.addf %386, %404 : vector<17x17xf32>
    %406 = arith.truncf %404 : vector<17x17xf32> to vector<17x17xbf16>
    %cst_143 = arith.constant dense<0.000000e+00> : vector<17x16xf32>
    %407 = tpu.matmul %406, %394, %cst_143 {dimension_numbers = #tpu.dot_dimension_numbers<[1], [0], [0], [1], [0, 0, 1, 1], [], []>} : vector<17x17xbf16>, vector<17x16xbf16>, vector<17x16xf32> -> vector<17x16xf32>
    %408 = vector.extract_strided_slice %347 {offsets = [0, 48], sizes = [17, 16], strides = [1, 1]} : vector<17x64xf32> to vector<17x16xf32>
    %409 = arith.truncf %408 : vector<17x16xf32> to vector<17x16xbf16>
    %410 = vector.extract_strided_slice %349 {offsets = [0, 48], sizes = [17, 16], strides = [1, 1]} : vector<17x64xf32> to vector<17x16xf32>
    %411 = arith.truncf %410 : vector<17x16xf32> to vector<17x16xbf16>
    %412 = vector.extract_strided_slice %351 {offsets = [0, 48], sizes = [17, 16], strides = [1, 1]} : vector<17x64xf32> to vector<17x16xf32>
    %413 = arith.truncf %412 : vector<17x16xf32> to vector<17x16xbf16>
    %cst_144 = arith.constant dense<0.000000e+00> : vector<17x17xf32>
    %414 = tpu.matmul %409, %411, %cst_144 {dimension_numbers = #tpu.dot_dimension_numbers<[1], [1], [0], [0], [0, 0, 1, 0], [], []>} : vector<17x16xbf16>, vector<17x16xbf16>, vector<17x17xf32> -> vector<17x17xf32>
    %cst_145 = arith.constant dense<0xFF800000> : vector<17xf32>
    %415 = vector.multi_reduction <maximumf>, %414, %cst_145 [1] : vector<17x17xf32> to vector<17xf32>
    %416 = vector.shape_cast %415 : vector<17xf32> to vector<17x1xf32>
    %417 = vector.broadcast %416 : vector<17x1xf32> to vector<17x17xf32>
    %418 = arith.subf %414, %417 : vector<17x17xf32>
    %419 = math.exp %418 : vector<17x17xf32>
    %cst_146 = arith.constant dense<0.000000e+00> : vector<17xf32>
    %420 = vector.multi_reduction <add>, %419, %cst_146 [1] : vector<17x17xf32> to vector<17xf32>
    %421 = vector.shape_cast %420 : vector<17xf32> to vector<17x1xf32>
    %422 = vector.broadcast %421 : vector<17x1xf32> to vector<17x17xf32>
    %423 = arith.divf %419, %422 : vector<17x17xf32>
    %424 = arith.addf %405, %423 : vector<17x17xf32>
    %425 = arith.truncf %423 : vector<17x17xf32> to vector<17x17xbf16>
    %cst_147 = arith.constant dense<0.000000e+00> : vector<17x16xf32>
    %426 = tpu.matmul %425, %413, %cst_147 {dimension_numbers = #tpu.dot_dimension_numbers<[1], [0], [0], [1], [0, 0, 1, 1], [], []>} : vector<17x17xbf16>, vector<17x16xbf16>, vector<17x16xf32> -> vector<17x16xf32>
    %427 = tpu.concatenate %369, %388, %407, %426 in 1 : vector<17x16xf32>, vector<17x16xf32>, vector<17x16xf32>, vector<17x16xf32> -> vector<17x64xf32>
    %428 = arith.truncf %427 : vector<17x64xf32> to vector<17x64xbf16>
    %c0_148 = arith.constant 0 : index
    %c0_149 = arith.constant 0 : index
    %429 = vector.load %arg16[%c0_148, %c0_149] : memref<64x64xbf16, #tpu.memory_space<vmem>>, vector<64x64xbf16>
    %cst_150 = arith.constant dense<0.000000e+00> : vector<17x64xf32>
    %430 = tpu.matmul %428, %429, %cst_150 {dimension_numbers = #tpu.dot_dimension_numbers<[1], [0], [0], [1], [0, 0, 1, 1], [], []>} : vector<17x64xbf16>, vector<64x64xbf16>, vector<17x64xf32> -> vector<17x64xf32>
    %c0_151 = arith.constant 0 : index
    %c0_152 = arith.constant 0 : index
    %431 = vector.load %arg17[%c0_151, %c0_152] : memref<1x64xf32, #tpu.memory_space<vmem>>, vector<1x64xf32>
    %432 = vector.broadcast %431 : vector<1x64xf32> to vector<17x64xf32>
    %433 = arith.addf %430, %432 : vector<17x64xf32>
    %cst_153 = arith.constant 0.000000e+00 : f32
    %434 = vector.broadcast %cst_153 : f32 to vector<17x64xf32>
    %435 = arith.maximumf %433, %434 : vector<17x64xf32>
    %cst_154 = arith.constant -2.000000e+00 : f32
    %436 = vector.broadcast %cst_154 : f32 to vector<17x64xf32>
    %437 = arith.mulf %436, %435 : vector<17x64xf32>
    %438 = math.exp %437 : vector<17x64xf32>
    %cst_155 = arith.constant 1.000000e+00 : f32
    %439 = vector.broadcast %cst_155 : f32 to vector<17x64xf32>
    %440 = arith.subf %439, %438 : vector<17x64xf32>
    %cst_156 = arith.constant 0.0183156393 : f32
    %441 = vector.broadcast %cst_156 : f32 to vector<17x64xf32>
    %442 = arith.mulf %441, %438 : vector<17x64xf32>
    %cst_157 = arith.constant 1.000000e+00 : f32
    %443 = vector.broadcast %cst_157 : f32 to vector<17x64xf32>
    %444 = arith.addf %443, %442 : vector<17x64xf32>
    %445 = arith.divf %440, %444 : vector<17x64xf32>
    %446 = arith.addf %295, %445 : vector<17x64xf32>
    %c0_158 = arith.constant 0 : index
    %c0_159 = arith.constant 0 : index
    %447 = vector.load %arg6[%c0_158, %c0_159] : memref<1x64xf32, #tpu.memory_space<vmem>>, vector<1x64xf32>
    %c0_160 = arith.constant 0 : index
    %c0_161 = arith.constant 0 : index
    %448 = vector.load %arg7[%c0_160, %c0_161] : memref<1x64xf32, #tpu.memory_space<vmem>>, vector<1x64xf32>
    %cst_162 = arith.constant dense<0.000000e+00> : vector<17xf32>
    %449 = vector.multi_reduction <add>, %445, %cst_162 [1] : vector<17x64xf32> to vector<17xf32>
    %450 = vector.shape_cast %449 : vector<17xf32> to vector<17x1xf32>
    %cst_163 = arith.constant 6.400000e+01 : f32
    %451 = vector.broadcast %cst_163 : f32 to vector<17x1xf32>
    %452 = arith.divf %450, %451 : vector<17x1xf32>
    %453 = vector.broadcast %452 : vector<17x1xf32> to vector<17x64xf32>
    %454 = arith.subf %445, %453 : vector<17x64xf32>
    %455 = arith.mulf %454, %454 : vector<17x64xf32>
    %cst_164 = arith.constant dense<0.000000e+00> : vector<17xf32>
    %456 = vector.multi_reduction <add>, %455, %cst_164 [1] : vector<17x64xf32> to vector<17xf32>
    %457 = vector.shape_cast %456 : vector<17xf32> to vector<17x1xf32>
    %cst_165 = arith.constant 6.400000e+01 : f32
    %458 = vector.broadcast %cst_165 : f32 to vector<17x1xf32>
    %459 = arith.divf %457, %458 : vector<17x1xf32>
    %cst_166 = arith.constant 9.99999974E-6 : f32
    %460 = vector.broadcast %cst_166 : f32 to vector<17x1xf32>
    %461 = arith.addf %459, %460 : vector<17x1xf32>
    %462 = math.rsqrt %461 : vector<17x1xf32>
    %463 = vector.broadcast %462 : vector<17x1xf32> to vector<17x64xf32>
    %464 = arith.mulf %454, %463 : vector<17x64xf32>
    %465 = vector.broadcast %447 : vector<1x64xf32> to vector<17x64xf32>
    %466 = arith.mulf %464, %465 : vector<17x64xf32>
    %467 = vector.broadcast %448 : vector<1x64xf32> to vector<17x64xf32>
    %468 = arith.addf %466, %467 : vector<17x64xf32>
    %469 = arith.truncf %468 : vector<17x64xf32> to vector<17x64xbf16>
    %c0_167 = arith.constant 0 : index
    %c0_168 = arith.constant 0 : index
    %470 = vector.load %arg18[%c0_167, %c0_168] : memref<64x256xbf16, #tpu.memory_space<vmem>>, vector<64x256xbf16>
    %cst_169 = arith.constant dense<0.000000e+00> : vector<17x256xf32>
    %471 = tpu.matmul %469, %470, %cst_169 {dimension_numbers = #tpu.dot_dimension_numbers<[1], [0], [0], [1], [0, 0, 1, 1], [], []>} : vector<17x64xbf16>, vector<64x256xbf16>, vector<17x256xf32> -> vector<17x256xf32>
    %c0_170 = arith.constant 0 : index
    %c0_171 = arith.constant 0 : index
    %472 = vector.load %arg19[%c0_170, %c0_171] : memref<1x256xf32, #tpu.memory_space<vmem>>, vector<1x256xf32>
    %473 = vector.broadcast %472 : vector<1x256xf32> to vector<17x256xf32>
    %474 = arith.addf %471, %473 : vector<17x256xf32>
    %cst_172 = arith.constant 5.000000e-01 : f32
    %475 = vector.broadcast %cst_172 : f32 to vector<17x256xf32>
    %476 = arith.mulf %475, %474 : vector<17x256xf32>
    %cst_173 = arith.constant 4.471500e-02 : f32
    %477 = vector.broadcast %cst_173 : f32 to vector<17x256xf32>
    %478 = arith.mulf %477, %474 : vector<17x256xf32>
    %479 = arith.mulf %478, %474 : vector<17x256xf32>
    %480 = arith.mulf %479, %474 : vector<17x256xf32>
    %481 = arith.addf %474, %480 : vector<17x256xf32>
    %cst_174 = arith.constant 0.797884583 : f32
    %482 = vector.broadcast %cst_174 : f32 to vector<17x256xf32>
    %483 = arith.mulf %482, %481 : vector<17x256xf32>
    %484 = math.tanh %483 : vector<17x256xf32>
    %cst_175 = arith.constant 1.000000e+00 : f32
    %485 = vector.broadcast %cst_175 : f32 to vector<17x256xf32>
    %486 = arith.addf %485, %484 : vector<17x256xf32>
    %487 = arith.mulf %476, %486 : vector<17x256xf32>
    %488 = arith.truncf %487 : vector<17x256xf32> to vector<17x256xbf16>
    %c0_176 = arith.constant 0 : index
    %c0_177 = arith.constant 0 : index
    %489 = vector.load %arg20[%c0_176, %c0_177] : memref<256x64xbf16, #tpu.memory_space<vmem>>, vector<256x64xbf16>
    %cst_178 = arith.constant dense<0.000000e+00> : vector<17x64xf32>
    %490 = tpu.matmul %488, %489, %cst_178 {dimension_numbers = #tpu.dot_dimension_numbers<[1], [0], [0], [1], [0, 0, 1, 1], [], []>} : vector<17x256xbf16>, vector<256x64xbf16>, vector<17x64xf32> -> vector<17x64xf32>
    %c0_179 = arith.constant 0 : index
    %c0_180 = arith.constant 0 : index
    %491 = vector.load %arg21[%c0_179, %c0_180] : memref<1x64xf32, #tpu.memory_space<vmem>>, vector<1x64xf32>
    %492 = vector.broadcast %491 : vector<1x64xf32> to vector<17x64xf32>
    %493 = arith.addf %490, %492 : vector<17x64xf32>
    %494 = arith.addf %446, %493 : vector<17x64xf32>
    %cst_181 = arith.constant 0.0588235296 : f32
    %495 = vector.broadcast %cst_181 : f32 to vector<17x1xf32>
    %cst_182 = arith.constant dense<0.000000e+00> : vector<17x1xf32>
    %496 = tpu.matmul %424, %495, %cst_182 {dimension_numbers = #tpu.dot_dimension_numbers<[0], [0], [1], [1], [0, 1, 1, 1], [], []>} : vector<17x17xf32>, vector<17x1xf32>, vector<17x1xf32> -> vector<17x1xf32>
    %cst_183 = arith.constant 0.000000e+00 : f32
    %497 = vector.broadcast %cst_183 : f32 to vector<17x1xf32>
    %498 = arith.subf %497, %496 : vector<17x1xf32>
    %499 = math.exp %498 : vector<17x1xf32>
    %cst_184 = arith.constant 1.000000e+00 : f32
    %500 = vector.broadcast %cst_184 : f32 to vector<17x1xf32>
    %501 = arith.addf %500, %499 : vector<17x1xf32>
    %cst_185 = arith.constant 1.000000e+00 : f32
    %502 = vector.broadcast %cst_185 : f32 to vector<17x1xf32>
    %503 = arith.divf %502, %501 : vector<17x1xf32>
    %c0_186 = arith.constant 0 : index
    %c0_187 = arith.constant 0 : index
    %504 = vector.load %arg22[%c0_186, %c0_187] : memref<1x64xf32, #tpu.memory_space<vmem>>, vector<1x64xf32>
    %505 = vector.broadcast %504 : vector<1x64xf32> to vector<17x64xf32>
    %506 = arith.mulf %297, %505 : vector<17x64xf32>
    %507 = vector.broadcast %503 : vector<17x1xf32> to vector<17x64xf32>
    %508 = arith.mulf %506, %507 : vector<17x64xf32>
    %509 = arith.addf %297, %508 : vector<17x64xf32>
    %c0_188 = arith.constant 0 : index
    %c0_189 = arith.constant 0 : index
    %c0_190 = arith.constant 0 : index
    %510 = vector.load %arg23[%c0_188, %c0_189, %c0_190] : memref<1x17x64xf32, #tpu.memory_space<vmem>>, vector<1x17x64xf32>
    %511 = vector.shape_cast %510 : vector<1x17x64xf32> to vector<17x64xf32>
    %512 = vector.shape_cast %494 : vector<17x64xf32> to vector<1x17x64xf32>
    tpu.vector_store %arg23[%c0_188, %c0_189, %c0_190], %512 {strides = array<i32>} : memref<1x17x64xf32, #tpu.memory_space<vmem>>, vector<1x17x64xf32>,
    %c0_191 = arith.constant 0 : index
    %c0_192 = arith.constant 0 : index
    %c0_193 = arith.constant 0 : index
    %513 = vector.load %arg24[%c0_191, %c0_192, %c0_193] : memref<1x17x64xf32, #tpu.memory_space<vmem>>, vector<1x17x64xf32>
    %514 = vector.shape_cast %513 : vector<1x17x64xf32> to vector<17x64xf32>
    %515 = vector.shape_cast %509 : vector<17x64xf32> to vector<1x17x64xf32>
    tpu.vector_store %arg24[%c0_191, %c0_192, %c0_193], %515 {strides = array<i32>} : memref<1x17x64xf32, #tpu.memory_space<vmem>>, vector<1x17x64xf32>,
    %516 = vector.extract_strided_slice %424 {offsets = [1, 1], sizes = [16, 16], strides = [1, 1]} : vector<17x17xf32> to vector<16x16xf32>
    %c0_194 = arith.constant 0 : index
    %c0_195 = arith.constant 0 : index
    %c0_196 = arith.constant 0 : index
    %517 = vector.load %arg25[%c0_194, %c0_195, %c0_196] : memref<1x16x16xf32, #tpu.memory_space<vmem>>, vector<1x16x16xf32>
    %518 = vector.shape_cast %517 : vector<1x16x16xf32> to vector<16x16xf32>
    %519 = vector.shape_cast %516 : vector<16x16xf32> to vector<1x16x16xf32>
    tpu.vector_store %arg25[%c0_194, %c0_195, %c0_196], %519 {strides = array<i32>} : memref<1x16x16xf32, #tpu.memory_space<vmem>>, vector<1x16x16xf32>,
    return
  }
  func.func @transform_0(%arg0: i32) -> (i32, i32, i32) {
    %c0_i32 = arith.constant 0 : i32
    %c0_i32_0 = arith.constant 0 : i32
    %c0_i32_1 = arith.constant 0 : i32
    return %arg0, %c0_i32, %c0_i32_0 : i32, i32, i32
  }
  func.func @transform_1(%arg0: i32) -> (i32, i32, i32) {
    %c0_i32 = arith.constant 0 : i32
    %c0_i32_0 = arith.constant 0 : i32
    %c0_i32_1 = arith.constant 0 : i32
    return %arg0, %c0_i32, %c0_i32_0 : i32, i32, i32
  }
  func.func @transform_2(%arg0: i32) -> (i32, i32, i32) {
    %c0_i32 = arith.constant 0 : i32
    %c0_i32_0 = arith.constant 0 : i32
    %c0_i32_1 = arith.constant 0 : i32
    %c0_i32_2 = arith.constant 0 : i32
    return %c0_i32, %c0_i32_0, %c0_i32_1 : i32, i32, i32
  }
  func.func @transform_3(%arg0: i32) -> (i32, i32) {
    %c0_i32 = arith.constant 0 : i32
    %c0_i32_0 = arith.constant 0 : i32
    %c0_i32_1 = arith.constant 0 : i32
    return %c0_i32, %c0_i32_0 : i32, i32
  }
  func.func @transform_4(%arg0: i32) -> (i32, i32) {
    %c0_i32 = arith.constant 0 : i32
    %c0_i32_0 = arith.constant 0 : i32
    %c0_i32_1 = arith.constant 0 : i32
    return %c0_i32, %c0_i32_0 : i32, i32
  }
  func.func @transform_5(%arg0: i32) -> (i32, i32) {
    %c0_i32 = arith.constant 0 : i32
    %c0_i32_0 = arith.constant 0 : i32
    %c0_i32_1 = arith.constant 0 : i32
    return %c0_i32, %c0_i32_0 : i32, i32
  }
  func.func @transform_6(%arg0: i32) -> (i32, i32) {
    %c0_i32 = arith.constant 0 : i32
    %c0_i32_0 = arith.constant 0 : i32
    %c0_i32_1 = arith.constant 0 : i32
    return %c0_i32, %c0_i32_0 : i32, i32
  }
  func.func @transform_7(%arg0: i32) -> (i32, i32) {
    %c0_i32 = arith.constant 0 : i32
    %c0_i32_0 = arith.constant 0 : i32
    %c0_i32_1 = arith.constant 0 : i32
    return %c0_i32, %c0_i32_0 : i32, i32
  }
  func.func @transform_8(%arg0: i32) -> (i32, i32) {
    %c0_i32 = arith.constant 0 : i32
    %c0_i32_0 = arith.constant 0 : i32
    %c0_i32_1 = arith.constant 0 : i32
    return %c0_i32, %c0_i32_0 : i32, i32
  }
  func.func @transform_9(%arg0: i32) -> (i32, i32) {
    %c0_i32 = arith.constant 0 : i32
    %c0_i32_0 = arith.constant 0 : i32
    %c0_i32_1 = arith.constant 0 : i32
    return %c0_i32, %c0_i32_0 : i32, i32
  }
  func.func @transform_10(%arg0: i32) -> (i32, i32) {
    %c0_i32 = arith.constant 0 : i32
    %c0_i32_0 = arith.constant 0 : i32
    %c0_i32_1 = arith.constant 0 : i32
    return %c0_i32, %c0_i32_0 : i32, i32
  }
  func.func @transform_11(%arg0: i32) -> (i32, i32) {
    %c0_i32 = arith.constant 0 : i32
    %c0_i32_0 = arith.constant 0 : i32
    %c0_i32_1 = arith.constant 0 : i32
    return %c0_i32, %c0_i32_0 : i32, i32
  }
  func.func @transform_12(%arg0: i32) -> (i32, i32) {
    %c0_i32 = arith.constant 0 : i32
    %c0_i32_0 = arith.constant 0 : i32
    %c0_i32_1 = arith.constant 0 : i32
    return %c0_i32, %c0_i32_0 : i32, i32
  }
  func.func @transform_13(%arg0: i32) -> (i32, i32) {
    %c0_i32 = arith.constant 0 : i32
    %c0_i32_0 = arith.constant 0 : i32
    %c0_i32_1 = arith.constant 0 : i32
    return %c0_i32, %c0_i32_0 : i32, i32
  }
  func.func @transform_14(%arg0: i32) -> (i32, i32) {
    %c0_i32 = arith.constant 0 : i32
    %c0_i32_0 = arith.constant 0 : i32
    %c0_i32_1 = arith.constant 0 : i32
    return %c0_i32, %c0_i32_0 : i32, i32
  }
  func.func @transform_15(%arg0: i32) -> (i32, i32) {
    %c0_i32 = arith.constant 0 : i32
    %c0_i32_0 = arith.constant 0 : i32
    %c0_i32_1 = arith.constant 0 : i32
    return %c0_i32, %c0_i32_0 : i32, i32
  }
  func.func @transform_16(%arg0: i32) -> (i32, i32) {
    %c0_i32 = arith.constant 0 : i32
    %c0_i32_0 = arith.constant 0 : i32
    %c0_i32_1 = arith.constant 0 : i32
    return %c0_i32, %c0_i32_0 : i32, i32
  }
  func.func @transform_17(%arg0: i32) -> (i32, i32) {
    %c0_i32 = arith.constant 0 : i32
    %c0_i32_0 = arith.constant 0 : i32
    %c0_i32_1 = arith.constant 0 : i32
    return %c0_i32, %c0_i32_0 : i32, i32
  }
  func.func @transform_18(%arg0: i32) -> (i32, i32) {
    %c0_i32 = arith.constant 0 : i32
    %c0_i32_0 = arith.constant 0 : i32
    %c0_i32_1 = arith.constant 0 : i32
    return %c0_i32, %c0_i32_0 : i32, i32
  }
  func.func @transform_19(%arg0: i32) -> (i32, i32) {
    %c0_i32 = arith.constant 0 : i32
    %c0_i32_0 = arith.constant 0 : i32
    %c0_i32_1 = arith.constant 0 : i32
    return %c0_i32, %c0_i32_0 : i32, i32
  }
  func.func @transform_20(%arg0: i32) -> (i32, i32) {
    %c0_i32 = arith.constant 0 : i32
    %c0_i32_0 = arith.constant 0 : i32
    %c0_i32_1 = arith.constant 0 : i32
    return %c0_i32, %c0_i32_0 : i32, i32
  }
  func.func @transform_21(%arg0: i32) -> (i32, i32) {
    %c0_i32 = arith.constant 0 : i32
    %c0_i32_0 = arith.constant 0 : i32
    %c0_i32_1 = arith.constant 0 : i32
    return %c0_i32, %c0_i32_0 : i32, i32
  }
  func.func @transform_22(%arg0: i32) -> (i32, i32, i32) {
    %c0_i32 = arith.constant 0 : i32
    %c0_i32_0 = arith.constant 0 : i32
    %c0_i32_1 = arith.constant 0 : i32
    return %arg0, %c0_i32, %c0_i32_0 : i32, i32, i32
  }
  func.func @transform_23(%arg0: i32) -> (i32, i32, i32) {
    %c0_i32 = arith.constant 0 : i32
    %c0_i32_0 = arith.constant 0 : i32
    %c0_i32_1 = arith.constant 0 : i32
    return %arg0, %c0_i32, %c0_i32_0 : i32, i32, i32
  }
  func.func @transform_24(%arg0: i32) -> (i32, i32, i32) {
    %c0_i32 = arith.constant 0 : i32
    %c0_i32_0 = arith.constant 0 : i32
    %c0_i32_1 = arith.constant 0 : i32
    return %arg0, %c0_i32, %c0_i32_0 : i32, i32, i32
  }
}

</mosaic_0001>

<llo_original>
// kernel: tpu_custom_call.1
$region0: #{tpu_custom_call.1}
  #allocation0 [shape = 'u32[]', space=smem, size = 0x4, offset = 0x4, fixed_abs, tag = 'smem constant byte address 0x4 - core index']
  #allocation1 [shape = 'u32[72,128]{1,0:T(1,128)}', space=vmem, size = 0x9000, scoped, tag = 'internal scratch']
  %s0 = inlined_call_operand.vmem [shape: f32[2,17,64], index: 0, kind: input, shape index: {}]
  %s1 = inlined_call_operand.vmem [shape: f32[2,17,64], index: 1, kind: input, shape index: {}]
  %s2 = inlined_call_operand.vmem [shape: f32[1,17,64], index: 2, kind: input, shape index: {}]
  %s3 = inlined_call_operand.vmem [shape: f32[1,64], index: 3, kind: input, shape index: {}]
  %s4 = inlined_call_operand.vmem [shape: f32[1,64], index: 4, kind: input, shape index: {}]
  %s5 = inlined_call_operand.vmem [shape: f32[1,64], index: 5, kind: input, shape index: {}]
  %s6 = inlined_call_operand.vmem [shape: f32[1,64], index: 6, kind: input, shape index: {}]
  %s7 = inlined_call_operand.vmem [shape: bf16[64,64], index: 7, kind: input, shape index: {}]
  %s8 = inlined_call_operand.vmem [shape: bf16[64,64], index: 8, kind: input, shape index: {}]
  %s9 = inlined_call_operand.vmem [shape: bf16[64,64], index: 9, kind: input, shape index: {}]
  %s10 = inlined_call_operand.vmem [shape: bf16[64,64], index: 10, kind: input, shape index: {}]
  %s11 = inlined_call_operand.vmem [shape: f32[1,64], index: 11, kind: input, shape index: {}]
  %s12 = inlined_call_operand.vmem [shape: bf16[64,64], index: 12, kind: input, shape index: {}]
  %s13 = inlined_call_operand.vmem [shape: bf16[64,64], index: 13, kind: input, shape index: {}]
  %s14 = inlined_call_operand.hbm [shape: bf16[64,64], index: 14, kind: input, shape index: {}]
  %s15 = inlined_call_operand.hbm [shape: bf16[64,64], index: 15, kind: input, shape index: {}]
  %s16 = inlined_call_operand.vmem [shape: f32[1,64], index: 16, kind: input, shape index: {}]
  %s17 = inlined_call_operand.vmem [shape: bf16[64,256], index: 17, kind: input, shape index: {}]
  %s18 = inlined_call_operand.vmem [shape: f32[1,256], index: 18, kind: input, shape index: {}]
  %s19 = inlined_call_operand.vmem [shape: bf16[256,64], index: 19, kind: input, shape index: {}]
  %s20 = inlined_call_operand.vmem [shape: f32[1,64], index: 20, kind: input, shape index: {}]
  %s21 = inlined_call_operand.vmem [shape: f32[1,64], index: 21, kind: input, shape index: {}]
  %s22 = inlined_call_operand.vmem [shape: f32[2,17,64], index: 22, kind: output, shape index: {0}]
  %s23 = inlined_call_operand.vmem [shape: f32[2,17,64], index: 23, kind: output, shape index: {1}]
  %s24 = inlined_call_operand.hbm [shape: f32[2,16,16], index: 24, kind: output, shape index: {2}]
  %25 = xla_tuple %s22, %s23, %s24
  %s26 = sld [smem:[#allocation0]]
  $region145: #{tpu_custom_call.1} parent=0
    _
  %s28 = ssub.s32 1, %s26
  %s29 = scalar_select 0, %s28, %s26
  $region1: #{tpu_custom_call.1} parent=0
    #allocation2 [shape = 'u8[16384]{0}', space=vmem, size = 0x4000, scoped, tag = 'input window, operand 14, single buffered']
    #allocation3 [shape = 's32[2]{0}', space=sflag, size = 0x8, scoped, tag = 'scoped memory for tpu_custom_call.1']
    #allocation4 [shape = 's32[2]{0}', space=sflag, size = 0x8, scoped, tag = 'scoped memory for tpu_custom_call.1']
    #allocation5 [shape = 'u8[16384]{0}', space=vmem, size = 0x4000, scoped, tag = 'input window, operand 15, single buffered']
    #allocation6 [shape = 's32[1]{0}', space=sflag, size = 0x4, scoped, tag = 'scoped memory for tpu_custom_call.1']
    #allocation7 [shape = 'u8[16384]{0}', space=vmem, size = 0x4000, scoped, tag = 'output window, operand 2']
    %30 = vsyncpa [#allocation3], 0
    %31 = vsyncpa [#allocation6], 0
    %32 = vsyncpa [#allocation4], 0
    %s33 = scalar_lea.sflag [#allocation4], 1
    %34 = vsyncpa %s33, 0
    loop: start=0, step=1, limit=4
    $region2: #{tpu_custom_call.1} parent=1 // loop_pre_header
      _
    $region3: #{tpu_custom_call.1} parent=1 // loop_header
      %s36 = sphi 0, %s40
      %p37 = scmp.ge.s32.totalorder %s36, 4
      %s46 = sphi 0, %s48
      %s49 = sphi 0, %s46
      %s50 = sphi 0, %s49
      %s66 = sphi 0, %s50
      %s72 = sphi 0, %s74
      %s75 = sphi 0, %s72
      %s76 = sphi 0, %s75
      %s92 = sphi 0, %s76
      %s96 = sphi 0, %s96
      %s98 = sphi 0, %s96
      %s99 = sphi 0, %s98
      %s113 = sphi 0, %s99
      %s117 = sphi 0, %s117
      %s119 = sphi 0, %s117
      %s120 = sphi 0, %s119
      %s134 = sphi 0, %s120
      %s138 = sphi 0, %s138
      %s140 = sphi 0, %s138
      %s141 = sphi 0, %s140
      %s155 = sphi 0, %s141
      %s159 = sphi 0, %s159
      %s161 = sphi 0, %s159
      %s162 = sphi 0, %s161
      %s176 = sphi 0, %s162
      %s180 = sphi 0, %s180
      %s182 = sphi 0, %s180
      %s183 = sphi 0, %s182
      %s197 = sphi 0, %s183
      %s201 = sphi 0, %s201
      %s203 = sphi 0, %s201
      %s204 = sphi 0, %s203
      %s218 = sphi 0, %s204
      %s222 = sphi 0, %s222
      %s224 = sphi 0, %s222
      %s225 = sphi 0, %s224
      %s239 = sphi 0, %s225
      %s243 = sphi 0, %s243
      %s245 = sphi 0, %s243
      %s246 = sphi 0, %s245
      %s260 = sphi 0, %s246
      %s264 = sphi 0, %s264
      %s266 = sphi 0, %s264
      %s267 = sphi 0, %s266
      %s281 = sphi 0, %s267
      %s285 = sphi 0, %s285
      %s287 = sphi 0, %s285
      %s288 = sphi 0, %s287
      %s302 = sphi 0, %s288
      %s306 = sphi 0, %s306
      %s308 = sphi 0, %s306
      %s309 = sphi 0, %s308
      %s323 = sphi 0, %s309
      %s327 = sphi 0, %s327
      %s329 = sphi 0, %s327
      %s330 = sphi 0, %s329
      %s344 = sphi 0, %s330
      %s348 = sphi 0, %s348
      %s350 = sphi 0, %s348
      %s351 = sphi 0, %s350
      %s365 = sphi 0, %s351
      %s369 = sphi 0, %s369
      %s371 = sphi 0, %s369
      %s372 = sphi 0, %s371
      %s386 = sphi 0, %s372
      %s390 = sphi 0, %s390
      %s392 = sphi 0, %s390
      %s393 = sphi 0, %s392
      %s407 = sphi 0, %s393
      %s411 = sphi 0, %s411
      %s413 = sphi 0, %s411
      %s414 = sphi 0, %s413
      %s428 = sphi 0, %s414
      %s432 = sphi 0, %s432
      %s434 = sphi 0, %s432
      %s435 = sphi 0, %s434
      %s449 = sphi 0, %s435
      %s453 = sphi 0, %s453
      %s455 = sphi 0, %s453
      %s456 = sphi 0, %s455
      %s470 = sphi 0, %s456
      %s474 = sphi 0, %s474
      %s476 = sphi 0, %s474
      %s477 = sphi 0, %s476
      %s491 = sphi 0, %s477
      %s495 = sphi 0, %s495
      %s497 = sphi 0, %s495
      %s498 = sphi 0, %s497
      %s512 = sphi 0, %s498
      %s518 = sphi 0, %s520
      %s521 = sphi 0, %s518
      %s522 = sphi 0, %s521
      %s538 = sphi 0, %s522
      %s544 = sphi 0, %s546
      %s547 = sphi 0, %s544
      %s548 = sphi 0, %s547
      %s564 = sphi 0, %s548
      %s570 = sphi 0, %s572
      %s573 = sphi 0, %s570
      %s574 = sphi 0, %s573
      %s590 = sphi 0, %s574
    $region4: #{tpu_custom_call.1} parent=1 // loop_header_branch
      %39 = sbr.rel (%p37) target = $region8
    $region5: #{tpu_custom_call.1} parent=1 // loop_body
      %s41 = ssub.s32 %s36, 1
      %s42 = ssub.s32 %s36, 2
      %s43 = sadd.s32 %s36, 1
      %s44 = ssub.s32 %s36, %s43
      %p45 = scmp.eq.s32.totalorder %s44, 0
      %s47 = sadd.s32 %s46, 1
      %s48 = scalar_select %p45, %s46, %s47
      %p51 = pneg %p45
      %p52 = scmp.eq.s32.totalorder %s36, 1
      %p53 = por %p51, %p52
      %p54 = scmp.ne.s32.totalorder %s46, %s49
      %p55 = scmp.eq.s32.totalorder %s36, 0
      %p56 = por %p54, %p55
      %p57 = scmp.ne.s32.totalorder %s46, %s49
      %p58 = scmp.eq.s32.totalorder %s41, 1
      %p59 = por %p57, %p58
      %p60 = scmp.ne.s32.totalorder %s49, %s50
      %p61 = scmp.eq.s32.totalorder %s41, 0
      %p62 = por %p60, %p61
      %p63 = scmp.ne.s32.totalorder %s49, %s50
      %p64 = scmp.eq.s32.totalorder %s42, 1
      %p65 = por %p63, %p64
      %p67 = scmp.ne.s32.totalorder %s50, %s66
      %p68 = scmp.eq.s32.totalorder %s42, 0
      %p69 = por %p67, %p68
      %s70 = ssub.s32 %s36, %s43
      %p71 = scmp.eq.s32.totalorder %s70, 0
      %s73 = sadd.s32 %s72, 1
      %s74 = scalar_select %p71, %s72, %s73
      %p77 = pneg %p71
      %p78 = scmp.eq.s32.totalorder %s36, 1
      %p79 = por %p77, %p78
      %p80 = scmp.ne.s32.totalorder %s72, %s75
      %p81 = scmp.eq.s32.totalorder %s36, 0
      %p82 = por %p80, %p81
      %p83 = scmp.ne.s32.totalorder %s72, %s75
      %p84 = scmp.eq.s32.totalorder %s41, 1
      %p85 = por %p83, %p84
      %p86 = scmp.ne.s32.totalorder %s75, %s76
      %p87 = scmp.eq.s32.totalorder %s41, 0
      %p88 = por %p86, %p87
      %p89 = scmp.ne.s32.totalorder %s75, %s76
      %p90 = scmp.eq.s32.totalorder %s42, 1
      %p91 = por %p89, %p90
      %p93 = scmp.ne.s32.totalorder %s76, %s92
      %p94 = scmp.eq.s32.totalorder %s42, 0
      %p95 = por %p93, %p94
      %s97 = sadd.s32 %s96, 1
      %p100 = scmp.eq.s32.totalorder %s36, 1
      %p101 = scmp.ne.s32.totalorder %s96, %s98
      %p102 = scmp.eq.s32.totalorder %s36, 0
      %p103 = por %p101, %p102
      %p104 = scmp.ne.s32.totalorder %s96, %s98
      %p105 = scmp.eq.s32.totalorder %s41, 1
      %p106 = por %p104, %p105
      %p107 = scmp.ne.s32.totalorder %s98, %s99
      %p108 = scmp.eq.s32.totalorder %s41, 0
      %p109 = por %p107, %p108
      %p110 = scmp.ne.s32.totalorder %s98, %s99
      %p111 = scmp.eq.s32.totalorder %s42, 1
      %p112 = por %p110, %p111
      %p114 = scmp.ne.s32.totalorder %s99, %s113
      %p115 = scmp.eq.s32.totalorder %s42, 0
      %p116 = por %p114, %p115
      %s118 = sadd.s32 %s117, 1
      %p121 = scmp.eq.s32.totalorder %s36, 1
      %p122 = scmp.ne.s32.totalorder %s117, %s119
      %p123 = scmp.eq.s32.totalorder %s36, 0
      %p124 = por %p122, %p123
      %p125 = scmp.ne.s32.totalorder %s117, %s119
      %p126 = scmp.eq.s32.totalorder %s41, 1
      %p127 = por %p125, %p126
      %p128 = scmp.ne.s32.totalorder %s119, %s120
      %p129 = scmp.eq.s32.totalorder %s41, 0
      %p130 = por %p128, %p129
      %p131 = scmp.ne.s32.totalorder %s119, %s120
      %p132 = scmp.eq.s32.totalorder %s42, 1
      %p133 = por %p131, %p132
      %p135 = scmp.ne.s32.totalorder %s120, %s134
      %p136 = scmp.eq.s32.totalorder %s42, 0
      %p137 = por %p135, %p136
      %s139 = sadd.s32 %s138, 1
      %p142 = scmp.eq.s32.totalorder %s36, 1
      %p143 = scmp.ne.s32.totalorder %s138, %s140
      %p144 = scmp.eq.s32.totalorder %s36, 0
      %p145 = por %p143, %p144
      %p146 = scmp.ne.s32.totalorder %s138, %s140
      %p147 = scmp.eq.s32.totalorder %s41, 1
      %p148 = por %p146, %p147
      %p149 = scmp.ne.s32.totalorder %s140, %s141
      %p150 = scmp.eq.s32.totalorder %s41, 0
      %p151 = por %p149, %p150
      %p152 = scmp.ne.s32.totalorder %s140, %s141
      %p153 = scmp.eq.s32.totalorder %s42, 1
      %p154 = por %p152, %p153
      %p156 = scmp.ne.s32.totalorder %s141, %s155
      %p157 = scmp.eq.s32.totalorder %s42, 0
      %p158 = por %p156, %p157
      %s160 = sadd.s32 %s159, 1
      %p163 = scmp.eq.s32.totalorder %s36, 1
      %p164 = scmp.ne.s32.totalorder %s159, %s161
      %p165 = scmp.eq.s32.totalorder %s36, 0
      %p166 = por %p164, %p165
      %p167 = scmp.ne.s32.totalorder %s159, %s161
      %p168 = scmp.eq.s32.totalorder %s41, 1
      %p169 = por %p167, %p168
      %p170 = scmp.ne.s32.totalorder %s161, %s162
      %p171 = scmp.eq.s32.totalorder %s41, 0
      %p172 = por %p170, %p171
      %p173 = scmp.ne.s32.totalorder %s161, %s162
      %p174 = scmp.eq.s32.totalorder %s42, 1
      %p175 = por %p173, %p174
      %p177 = scmp.ne.s32.totalorder %s162, %s176
      %p178 = scmp.eq.s32.totalorder %s42, 0
      %p179 = por %p177, %p178
      %s181 = sadd.s32 %s180, 1
      %p184 = scmp.eq.s32.totalorder %s36, 1
      %p185 = scmp.ne.s32.totalorder %s180, %s182
      %p186 = scmp.eq.s32.totalorder %s36, 0
      %p187 = por %p185, %p186
      %p188 = scmp.ne.s32.totalorder %s180, %s182
      %p189 = scmp.eq.s32.totalorder %s41, 1
      %p190 = por %p188, %p189
      %p191 = scmp.ne.s32.totalorder %s182, %s183
      %p192 = scmp.eq.s32.totalorder %s41, 0
      %p193 = por %p191, %p192
      %p194 = scmp.ne.s32.totalorder %s182, %s183
      %p195 = scmp.eq.s32.totalorder %s42, 1
      %p196 = por %p194, %p195
      %p198 = scmp.ne.s32.totalorder %s183, %s197
      %p199 = scmp.eq.s32.totalorder %s42, 0
      %p200 = por %p198, %p199
      %s202 = sadd.s32 %s201, 1
      %p205 = scmp.eq.s32.totalorder %s36, 1
      %p206 = scmp.ne.s32.totalorder %s201, %s203
      %p207 = scmp.eq.s32.totalorder %s36, 0
      %p208 = por %p206, %p207
      %p209 = scmp.ne.s32.totalorder %s201, %s203
      %p210 = scmp.eq.s32.totalorder %s41, 1
      %p211 = por %p209, %p210
      %p212 = scmp.ne.s32.totalorder %s203, %s204
      %p213 = scmp.eq.s32.totalorder %s41, 0
      %p214 = por %p212, %p213
      %p215 = scmp.ne.s32.totalorder %s203, %s204
      %p216 = scmp.eq.s32.totalorder %s42, 1
      %p217 = por %p215, %p216
      %p219 = scmp.ne.s32.totalorder %s204, %s218
      %p220 = scmp.eq.s32.totalorder %s42, 0
      %p221 = por %p219, %p220
      %s223 = sadd.s32 %s222, 1
      %p226 = scmp.eq.s32.totalorder %s36, 1
      %p227 = scmp.ne.s32.totalorder %s222, %s224
      %p228 = scmp.eq.s32.totalorder %s36, 0
      %p229 = por %p227, %p228
      %p230 = scmp.ne.s32.totalorder %s222, %s224
      %p231 = scmp.eq.s32.totalorder %s41, 1
      %p232 = por %p230, %p231
      %p233 = scmp.ne.s32.totalorder %s224, %s225
      %p234 = scmp.eq.s32.totalorder %s41, 0
      %p235 = por %p233, %p234
      %p236 = scmp.ne.s32.totalorder %s224, %s225
      %p237 = scmp.eq.s32.totalorder %s42, 1
      %p238 = por %p236, %p237
      %p240 = scmp.ne.s32.totalorder %s225, %s239
      %p241 = scmp.eq.s32.totalorder %s42, 0
      %p242 = por %p240, %p241
      %s244 = sadd.s32 %s243, 1
      %p247 = scmp.eq.s32.totalorder %s36, 1
      %p248 = scmp.ne.s32.totalorder %s243, %s245
      %p249 = scmp.eq.s32.totalorder %s36, 0
      %p250 = por %p248, %p249
      %p251 = scmp.ne.s32.totalorder %s243, %s245
      %p252 = scmp.eq.s32.totalorder %s41, 1
      %p253 = por %p251, %p252
      %p254 = scmp.ne.s32.totalorder %s245, %s246
      %p255 = scmp.eq.s32.totalorder %s41, 0
      %p256 = por %p254, %p255
      %p257 = scmp.ne.s32.totalorder %s245, %s246
      %p258 = scmp.eq.s32.totalorder %s42, 1
      %p259 = por %p257, %p258
      %p261 = scmp.ne.s32.totalorder %s246, %s260
      %p262 = scmp.eq.s32.totalorder %s42, 0
      %p263 = por %p261, %p262
      %s265 = sadd.s32 %s264, 1
      %p268 = scmp.eq.s32.totalorder %s36, 1
      %p269 = scmp.ne.s32.totalorder %s264, %s266
      %p270 = scmp.eq.s32.totalorder %s36, 0
      %p271 = por %p269, %p270
      %p272 = scmp.ne.s32.totalorder %s264, %s266
      %p273 = scmp.eq.s32.totalorder %s41, 1
      %p274 = por %p272, %p273
      %p275 = scmp.ne.s32.totalorder %s266, %s267
      %p276 = scmp.eq.s32.totalorder %s41, 0
      %p277 = por %p275, %p276
      %p278 = scmp.ne.s32.totalorder %s266, %s267
      %p279 = scmp.eq.s32.totalorder %s42, 1
      %p280 = por %p278, %p279
      %p282 = scmp.ne.s32.totalorder %s267, %s281
      %p283 = scmp.eq.s32.totalorder %s42, 0
      %p284 = por %p282, %p283
      %s286 = sadd.s32 %s285, 1
      %p289 = scmp.eq.s32.totalorder %s36, 1
      %p290 = scmp.ne.s32.totalorder %s285, %s287
      %p291 = scmp.eq.s32.totalorder %s36, 0
      %p292 = por %p290, %p291
      %p293 = scmp.ne.s32.totalorder %s285, %s287
      %p294 = scmp.eq.s32.totalorder %s41, 1
      %p295 = por %p293, %p294
      %p296 = scmp.ne.s32.totalorder %s287, %s288
      %p297 = scmp.eq.s32.totalorder %s41, 0
      %p298 = por %p296, %p297
      %p299 = scmp.ne.s32.totalorder %s287, %s288
      %p300 = scmp.eq.s32.totalorder %s42, 1
      %p301 = por %p299, %p300
      %p303 = scmp.ne.s32.totalorder %s288, %s302
      %p304 = scmp.eq.s32.totalorder %s42, 0
      %p305 = por %p303, %p304
      %s307 = sadd.s32 %s306, 1
      %p310 = scmp.eq.s32.totalorder %s36, 1
      %p311 = scmp.ne.s32.totalorder %s306, %s308
      %p312 = scmp.eq.s32.totalorder %s36, 0
      %p313 = por %p311, %p312
      %p314 = scmp.ne.s32.totalorder %s306, %s308
      %p315 = scmp.eq.s32.totalorder %s41, 1
      %p316 = por %p314, %p315
      %p317 = scmp.ne.s32.totalorder %s308, %s309
      %p318 = scmp.eq.s32.totalorder %s41, 0
      %p319 = por %p317, %p318
      %p320 = scmp.ne.s32.totalorder %s308, %s309
      %p321 = scmp.eq.s32.totalorder %s42, 1
      %p322 = por %p320, %p321
      %p324 = scmp.ne.s32.totalorder %s309, %s323
      %p325 = scmp.eq.s32.totalorder %s42, 0
      %p326 = por %p324, %p325
      %s328 = sadd.s32 %s327, 1
      %p331 = scmp.eq.s32.totalorder %s36, 1
      %p332 = scmp.ne.s32.totalorder %s327, %s329
      %p333 = scmp.eq.s32.totalorder %s36, 0
      %p334 = por %p332, %p333
      %p335 = scmp.ne.s32.totalorder %s327, %s329
      %p336 = scmp.eq.s32.totalorder %s41, 1
      %p337 = por %p335, %p336
      %p338 = scmp.ne.s32.totalorder %s329, %s330
      %p339 = scmp.eq.s32.totalorder %s41, 0
      %p340 = por %p338, %p339
      %p341 = scmp.ne.s32.totalorder %s329, %s330
      %p342 = scmp.eq.s32.totalorder %s42, 1
      %p343 = por %p341, %p342
      %p345 = scmp.ne.s32.totalorder %s330, %s344
      %p346 = scmp.eq.s32.totalorder %s42, 0
      %p347 = por %p345, %p346
      %s349 = sadd.s32 %s348, 1
      %p352 = scmp.eq.s32.totalorder %s36, 1
      %p353 = scmp.ne.s32.totalorder %s348, %s350
      %p354 = scmp.eq.s32.totalorder %s36, 0
      %p355 = por %p353, %p354
      %p356 = scmp.ne.s32.totalorder %s348, %s350
      %p357 = scmp.eq.s32.totalorder %s41, 1
      %p358 = por %p356, %p357
      %p359 = scmp.ne.s32.totalorder %s350, %s351
      %p360 = scmp.eq.s32.totalorder %s41, 0
      %p361 = por %p359, %p360
      %p362 = scmp.ne.s32.totalorder %s350, %s351
      %p363 = scmp.eq.s32.totalorder %s42, 1
      %p364 = por %p362, %p363
      %p366 = scmp.ne.s32.totalorder %s351, %s365
      %p367 = scmp.eq.s32.totalorder %s42, 0
      %p368 = por %p366, %p367
      %s370 = sadd.s32 %s369, 1
      %p373 = scmp.eq.s32.totalorder %s36, 1
      %p374 = scmp.ne.s32.totalorder %s369, %s371
      %p375 = scmp.eq.s32.totalorder %s36, 0
      %p376 = por %p374, %p375
      %p377 = scmp.ne.s32.totalorder %s369, %s371
      %p378 = scmp.eq.s32.totalorder %s41, 1
      %p379 = por %p377, %p378
      %p380 = scmp.ne.s32.totalorder %s371, %s372
      %p381 = scmp.eq.s32.totalorder %s41, 0
      %p382 = por %p380, %p381
      %p383 = scmp.ne.s32.totalorder %s371, %s372
      %p384 = scmp.eq.s32.totalorder %s42, 1
      %p385 = por %p383, %p384
      %p387 = scmp.ne.s32.totalorder %s372, %s386
      %p388 = scmp.eq.s32.totalorder %s42, 0
      %p389 = por %p387, %p388
      %s391 = sadd.s32 %s390, 1
      %p394 = scmp.eq.s32.totalorder %s36, 1
      %p395 = scmp.ne.s32.totalorder %s390, %s392
      %p396 = scmp.eq.s32.totalorder %s36, 0
      %p397 = por %p395, %p396
      %p398 = scmp.ne.s32.totalorder %s390, %s392
      %p399 = scmp.eq.s32.totalorder %s41, 1
      %p400 = por %p398, %p399
      %p401 = scmp.ne.s32.totalorder %s392, %s393
      %p402 = scmp.eq.s32.totalorder %s41, 0
      %p403 = por %p401, %p402
      %p404 = scmp.ne.s32.totalorder %s392, %s393
      %p405 = scmp.eq.s32.totalorder %s42, 1
      %p406 = por %p404, %p405
      %p408 = scmp.ne.s32.totalorder %s393, %s407
      %p409 = scmp.eq.s32.totalorder %s42, 0
      %p410 = por %p408, %p409
      %s412 = sadd.s32 %s411, 1
      %p415 = scmp.eq.s32.totalorder %s36, 1
      %p416 = scmp.ne.s32.totalorder %s411, %s413
      %p417 = scmp.eq.s32.totalorder %s36, 0
      %p418 = por %p416, %p417
      %p419 = scmp.ne.s32.totalorder %s411, %s413
      %p420 = scmp.eq.s32.totalorder %s41, 1
      %p421 = por %p419, %p420
      %p422 = scmp.ne.s32.totalorder %s413, %s414
      %p423 = scmp.eq.s32.totalorder %s41, 0
      %p424 = por %p422, %p423
      %p425 = scmp.ne.s32.totalorder %s413, %s414
      %p426 = scmp.eq.s32.totalorder %s42, 1
      %p427 = por %p425, %p426
      %p429 = scmp.ne.s32.totalorder %s414, %s428
      %p430 = scmp.eq.s32.totalorder %s42, 0
      %p431 = por %p429, %p430
      %s433 = sadd.s32 %s432, 1
      %p436 = scmp.eq.s32.totalorder %s36, 1
      %p437 = scmp.ne.s32.totalorder %s432, %s434
      %p438 = scmp.eq.s32.totalorder %s36, 0
      %p439 = por %p437, %p438
      %p440 = scmp.ne.s32.totalorder %s432, %s434
      %p441 = scmp.eq.s32.totalorder %s41, 1
      %p442 = por %p440, %p441
      %p443 = scmp.ne.s32.totalorder %s434, %s435
      %p444 = scmp.eq.s32.totalorder %s41, 0
      %p445 = por %p443, %p444
      %p446 = scmp.ne.s32.totalorder %s434, %s435
      %p447 = scmp.eq.s32.totalorder %s42, 1
      %p448 = por %p446, %p447
      %p450 = scmp.ne.s32.totalorder %s435, %s449
      %p451 = scmp.eq.s32.totalorder %s42, 0
      %p452 = por %p450, %p451
      %s454 = sadd.s32 %s453, 1
      %p457 = scmp.eq.s32.totalorder %s36, 1
      %p458 = scmp.ne.s32.totalorder %s453, %s455
      %p459 = scmp.eq.s32.totalorder %s36, 0
      %p460 = por %p458, %p459
      %p461 = scmp.ne.s32.totalorder %s453, %s455
      %p462 = scmp.eq.s32.totalorder %s41, 1
      %p463 = por %p461, %p462
      %p464 = scmp.ne.s32.totalorder %s455, %s456
      %p465 = scmp.eq.s32.totalorder %s41, 0
      %p466 = por %p464, %p465
      %p467 = scmp.ne.s32.totalorder %s455, %s456
      %p468 = scmp.eq.s32.totalorder %s42, 1
      %p469 = por %p467, %p468
      %p471 = scmp.ne.s32.totalorder %s456, %s470
      %p472 = scmp.eq.s32.totalorder %s42, 0
      %p473 = por %p471, %p472
      %s475 = sadd.s32 %s474, 1
      %p478 = scmp.eq.s32.totalorder %s36, 1
      %p479 = scmp.ne.s32.totalorder %s474, %s476
      %p480 = scmp.eq.s32.totalorder %s36, 0
      %p481 = por %p479, %p480
      %p482 = scmp.ne.s32.totalorder %s474, %s476
      %p483 = scmp.eq.s32.totalorder %s41, 1
      %p484 = por %p482, %p483
      %p485 = scmp.ne.s32.totalorder %s476, %s477
      %p486 = scmp.eq.s32.totalorder %s41, 0
      %p487 = por %p485, %p486
      %p488 = scmp.ne.s32.totalorder %s476, %s477
      %p489 = scmp.eq.s32.totalorder %s42, 1
      %p490 = por %p488, %p489
      %p492 = scmp.ne.s32.totalorder %s477, %s491
      %p493 = scmp.eq.s32.totalorder %s42, 0
      %p494 = por %p492, %p493
      %s496 = sadd.s32 %s495, 1
      %p499 = scmp.eq.s32.totalorder %s36, 1
      %p500 = scmp.ne.s32.totalorder %s495, %s497
      %p501 = scmp.eq.s32.totalorder %s36, 0
      %p502 = por %p500, %p501
      %p503 = scmp.ne.s32.totalorder %s495, %s497
      %p504 = scmp.eq.s32.totalorder %s41, 1
      %p505 = por %p503, %p504
      %p506 = scmp.ne.s32.totalorder %s497, %s498
      %p507 = scmp.eq.s32.totalorder %s41, 0
      %p508 = por %p506, %p507
      %p509 = scmp.ne.s32.totalorder %s497, %s498
      %p510 = scmp.eq.s32.totalorder %s42, 1
      %p511 = por %p509, %p510
      %p513 = scmp.ne.s32.totalorder %s498, %s512
      %p514 = scmp.eq.s32.totalorder %s42, 0
      %p515 = por %p513, %p514
      %s516 = ssub.s32 %s36, %s43
      %p517 = scmp.eq.s32.totalorder %s516, 0
      %s519 = sadd.s32 %s518, 1
      %s520 = scalar_select %p517, %s518, %s519
      %p523 = pneg %p517
      %p524 = scmp.eq.s32.totalorder %s36, 1
      %p525 = por %p523, %p524
      %p526 = scmp.ne.s32.totalorder %s518, %s521
      %p527 = scmp.eq.s32.totalorder %s36, 0
      %p528 = por %p526, %p527
      %p529 = scmp.ne.s32.totalorder %s518, %s521
      %p530 = scmp.eq.s32.totalorder %s41, 1
      %p531 = por %p529, %p530
      %p532 = scmp.ne.s32.totalorder %s521, %s522
      %p533 = scmp.eq.s32.totalorder %s41, 0
      %p534 = por %p532, %p533
      %p535 = scmp.ne.s32.totalorder %s521, %s522
      %p536 = scmp.eq.s32.totalorder %s42, 1
      %p537 = por %p535, %p536
      %p539 = scmp.ne.s32.totalorder %s522, %s538
      %p540 = scmp.eq.s32.totalorder %s42, 0
      %p541 = por %p539, %p540
      %s542 = ssub.s32 %s36, %s43
      %p543 = scmp.eq.s32.totalorder %s542, 0
      %s545 = sadd.s32 %s544, 1
      %s546 = scalar_select %p543, %s544, %s545
      %p549 = pneg %p543
      %p550 = scmp.eq.s32.totalorder %s36, 1
      %p551 = por %p549, %p550
      %p552 = scmp.ne.s32.totalorder %s544, %s547
      %p553 = scmp.eq.s32.totalorder %s36, 0
      %p554 = por %p552, %p553
      %p555 = scmp.ne.s32.totalorder %s544, %s547
      %p556 = scmp.eq.s32.totalorder %s41, 1
      %p557 = por %p555, %p556
      %p558 = scmp.ne.s32.totalorder %s547, %s548
      %p559 = scmp.eq.s32.totalorder %s41, 0
      %p560 = por %p558, %p559
      %p561 = scmp.ne.s32.totalorder %s547, %s548
      %p562 = scmp.eq.s32.totalorder %s42, 1
      %p563 = por %p561, %p562
      %p565 = scmp.ne.s32.totalorder %s548, %s564
      %p566 = scmp.eq.s32.totalorder %s42, 0
      %p567 = por %p565, %p566
      %s568 = ssub.s32 %s36, %s43
      %p569 = scmp.eq.s32.totalorder %s568, 0
      %s571 = sadd.s32 %s570, 1
      %s572 = scalar_select %p569, %s570, %s571
      %p575 = pneg %p569
      %p576 = scmp.eq.s32.totalorder %s36, 1
      %p577 = por %p575, %p576
      %p578 = scmp.ne.s32.totalorder %s570, %s573
      %p579 = scmp.eq.s32.totalorder %s36, 0
      %p580 = por %p578, %p579
      %p581 = scmp.ne.s32.totalorder %s570, %s573
      %p582 = scmp.eq.s32.totalorder %s41, 1
      %p583 = por %p581, %p582
      %p584 = scmp.ne.s32.totalorder %s573, %s574
      %p585 = scmp.eq.s32.totalorder %s41, 0
      %p586 = por %p584, %p585
      %p587 = scmp.ne.s32.totalorder %s573, %s574
      %p588 = scmp.eq.s32.totalorder %s42, 1
      %p589 = por %p587, %p588
      %p591 = scmp.ne.s32.totalorder %s574, %s590
      %p592 = scmp.eq.s32.totalorder %s42, 0
      %p593 = por %p591, %p592
      %p594 = scmp.le.s32.totalorder 1, %s36
      %p595 = scmp.lt.s32.totalorder %s36, 3
      %p596 = pnand %p594, %p595
      %p597 = pneg %p596
      // Predicated region
      $region9: #{tpu_custom_call.1} parent=5 // pred_check
        _
      $region10: #{tpu_custom_call.1} parent=5 // pred_check_branch
        %599 = sbr.rel (%p596) target = $region12
      $region11: #{tpu_custom_call.1} parent=5 // pred_region
        %s600 = ssub.s32 %s36, 1
        // Predicated region
        $region13: #{tpu_custom_call.1} parent=11 // pred_check
          %p601 = pneg %p109
        $region14: #{tpu_custom_call.1} parent=11 // pred_check_branch
          %603 = sbr.rel (%p601) target = $region16
        $region15: #{tpu_custom_call.1} parent=11 // pred_region
          _
        $region16: #{tpu_custom_call.1} parent=11 // pred_fallthru
          _
        // Predicated region
        $region17: #{tpu_custom_call.1} parent=11 // pred_check
          %p604 = pneg %p130
        $region18: #{tpu_custom_call.1} parent=11 // pred_check_branch
          %606 = sbr.rel (%p604) target = $region20
        $region19: #{tpu_custom_call.1} parent=11 // pred_region
          _
        $region20: #{tpu_custom_call.1} parent=11 // pred_fallthru
          _
        // Predicated region
        $region21: #{tpu_custom_call.1} parent=11 // pred_check
          %p607 = pneg %p151
        $region22: #{tpu_custom_call.1} parent=11 // pred_check_branch
          %609 = sbr.rel (%p607) target = $region24
        $region23: #{tpu_custom_call.1} parent=11 // pred_region
          _
        $region24: #{tpu_custom_call.1} parent=11 // pred_fallthru
          _
        // Predicated region
        $region25: #{tpu_custom_call.1} parent=11 // pred_check
          %p610 = pneg %p172
        $region26: #{tpu_custom_call.1} parent=11 // pred_check_branch
          %612 = sbr.rel (%p610) target = $region28
        $region27: #{tpu_custom_call.1} parent=11 // pred_region
          _
        $region28: #{tpu_custom_call.1} parent=11 // pred_fallthru
          _
        // Predicated region
        $region29: #{tpu_custom_call.1} parent=11 // pred_check
          %p613 = pneg %p193
        $region30: #{tpu_custom_call.1} parent=11 // pred_check_branch
          %615 = sbr.rel (%p613) target = $region32
        $region31: #{tpu_custom_call.1} parent=11 // pred_region
          _
        $region32: #{tpu_custom_call.1} parent=11 // pred_fallthru
          _
        // Predicated region
        $region33: #{tpu_custom_call.1} parent=11 // pred_check
          %p616 = pneg %p214
        $region34: #{tpu_custom_call.1} parent=11 // pred_check_branch
          %618 = sbr.rel (%p616) target = $region36
        $region35: #{tpu_custom_call.1} parent=11 // pred_region
          _
        $region36: #{tpu_custom_call.1} parent=11 // pred_fallthru
          _
        // Predicated region
        $region37: #{tpu_custom_call.1} parent=11 // pred_check
          %p619 = pneg %p235
        $region38: #{tpu_custom_call.1} parent=11 // pred_check_branch
          %621 = sbr.rel (%p619) target = $region40
        $region39: #{tpu_custom_call.1} parent=11 // pred_region
          _
        $region40: #{tpu_custom_call.1} parent=11 // pred_fallthru
          _
        // Predicated region
        $region41: #{tpu_custom_call.1} parent=11 // pred_check
          %p622 = pneg %p256
        $region42: #{tpu_custom_call.1} parent=11 // pred_check_branch
          %624 = sbr.rel (%p622) target = $region44
        $region43: #{tpu_custom_call.1} parent=11 // pred_region
          _
        $region44: #{tpu_custom_call.1} parent=11 // pred_fallthru
          _
        // Predicated region
        $region45: #{tpu_custom_call.1} parent=11 // pred_check
          %p625 = pneg %p277
        $region46: #{tpu_custom_call.1} parent=11 // pred_check_branch
          %627 = sbr.rel (%p625) target = $region48
        $region47: #{tpu_custom_call.1} parent=11 // pred_region
          _
        $region48: #{tpu_custom_call.1} parent=11 // pred_fallthru
          _
        // Predicated region
        $region49: #{tpu_custom_call.1} parent=11 // pred_check
          %p628 = pneg %p298
        $region50: #{tpu_custom_call.1} parent=11 // pred_check_branch
          %630 = sbr.rel (%p628) target = $region52
        $region51: #{tpu_custom_call.1} parent=11 // pred_region
          _
        $region52: #{tpu_custom_call.1} parent=11 // pred_fallthru
          _
        // Predicated region
        $region53: #{tpu_custom_call.1} parent=11 // pred_check
          %p631 = pneg %p319
        $region54: #{tpu_custom_call.1} parent=11 // pred_check_branch
          %633 = sbr.rel (%p631) target = $region56
        $region55: #{tpu_custom_call.1} parent=11 // pred_region
          _
        $region56: #{tpu_custom_call.1} parent=11 // pred_fallthru
          _
        // Predicated region
        $region57: #{tpu_custom_call.1} parent=11 // pred_check
          %p634 = pneg %p340
        $region58: #{tpu_custom_call.1} parent=11 // pred_check_branch
          %636 = sbr.rel (%p634) target = $region60
        $region59: #{tpu_custom_call.1} parent=11 // pred_region
          _
        $region60: #{tpu_custom_call.1} parent=11 // pred_fallthru
          _
        // Predicated region
        $region61: #{tpu_custom_call.1} parent=11 // pred_check
          %p637 = pneg %p361
        $region62: #{tpu_custom_call.1} parent=11 // pred_check_branch
          %639 = sbr.rel (%p637) target = $region64
        $region63: #{tpu_custom_call.1} parent=11 // pred_region
          %641 = vsyncadd [#allocation3], 0
          %s642 = sshll.u32 %s14, 4
          %s643 = int_to_ptr.hbm [resolvable:$true] %s642
          %s644 = sshll.u32 [#allocation2], 4
          %s645 = int_to_ptr.vmem [resolvable:$true] %s644
          %650 = dma.hbm_to_vmem [thread:$0]  %s643, 512, %s645, [#allocation3], 64, 64, 4
        $region64: #{tpu_custom_call.1} parent=11 // pred_fallthru
          _
        // Predicated region
        $region65: #{tpu_custom_call.1} parent=11 // pred_check
          %p651 = pneg %p382
        $region66: #{tpu_custom_call.1} parent=11 // pred_check_branch
          %653 = sbr.rel (%p651) target = $region68
        $region67: #{tpu_custom_call.1} parent=11 // pred_region
          %655 = vsyncadd [#allocation6], 0
          %s656 = sshll.u32 %s15, 4
          %s657 = int_to_ptr.hbm [resolvable:$true] %s656
          %s658 = sshll.u32 [#allocation5], 4
          %s659 = int_to_ptr.vmem [resolvable:$true] %s658
          %664 = dma.hbm_to_vmem [thread:$0]  %s657, 512, %s659, [#allocation6], 64, 64, 4
        $region68: #{tpu_custom_call.1} parent=11 // pred_fallthru
          _
        // Predicated region
        $region69: #{tpu_custom_call.1} parent=11 // pred_check
          %p665 = pneg %p403
        $region70: #{tpu_custom_call.1} parent=11 // pred_check_branch
          %667 = sbr.rel (%p665) target = $region72
        $region71: #{tpu_custom_call.1} parent=11 // pred_region
          _
        $region72: #{tpu_custom_call.1} parent=11 // pred_fallthru
          _
        // Predicated region
        $region73: #{tpu_custom_call.1} parent=11 // pred_check
          %p668 = pneg %p424
        $region74: #{tpu_custom_call.1} parent=11 // pred_check_branch
          %670 = sbr.rel (%p668) target = $region76
        $region75: #{tpu_custom_call.1} parent=11 // pred_region
          _
        $region76: #{tpu_custom_call.1} parent=11 // pred_fallthru
          _
        // Predicated region
        $region77: #{tpu_custom_call.1} parent=11 // pred_check
          %p671 = pneg %p445
        $region78: #{tpu_custom_call.1} parent=11 // pred_check_branch
          %673 = sbr.rel (%p671) target = $region80
        $region79: #{tpu_custom_call.1} parent=11 // pred_region
          _
        $region80: #{tpu_custom_call.1} parent=11 // pred_fallthru
          _
        // Predicated region
        $region81: #{tpu_custom_call.1} parent=11 // pred_check
          %p674 = pneg %p466
        $region82: #{tpu_custom_call.1} parent=11 // pred_check_branch
          %676 = sbr.rel (%p674) target = $region84
        $region83: #{tpu_custom_call.1} parent=11 // pred_region
          _
        $region84: #{tpu_custom_call.1} parent=11 // pred_fallthru
          _
        // Predicated region
        $region85: #{tpu_custom_call.1} parent=11 // pred_check
          %p677 = pneg %p487
        $region86: #{tpu_custom_call.1} parent=11 // pred_check_branch
          %679 = sbr.rel (%p677) target = $region88
        $region87: #{tpu_custom_call.1} parent=11 // pred_region
          _
        $region88: #{tpu_custom_call.1} parent=11 // pred_fallthru
          _
        // Predicated region
        $region89: #{tpu_custom_call.1} parent=11 // pred_check
          %p680 = pneg %p508
        $region90: #{tpu_custom_call.1} parent=11 // pred_check_branch
          %682 = sbr.rel (%p680) target = $region92
        $region91: #{tpu_custom_call.1} parent=11 // pred_region
          _
        $region92: #{tpu_custom_call.1} parent=11 // pred_fallthru
          _
      $region12: #{tpu_custom_call.1} parent=5 // pred_fallthru
        _
      %p683 = scmp.lt.s32.totalorder %s36, 2
      // Predicated region
      $region93: #{tpu_custom_call.1} parent=5 // pred_check
        %p684 = pneg %p683
      $region94: #{tpu_custom_call.1} parent=5 // pred_check_branch
        %686 = sbr.rel (%p684) target = $region96
      $region95: #{tpu_custom_call.1} parent=5 // pred_region
        // Predicated region
        $region97: #{tpu_custom_call.1} parent=95 // pred_check
          %p687 = pneg %p56
        $region98: #{tpu_custom_call.1} parent=95 // pred_check_branch
          %689 = sbr.rel (%p687) target = $region100
        $region99: #{tpu_custom_call.1} parent=95 // pred_region
          %p690 = scmp.lt.s32.totalorder %s36, 1
          %s691 = scalar_select %p690, %s36, 1
          %s692 = smul.addr %s691, 3
          %s693 = smul.addr %s692, 8
          %s694 = scalar_lea.vmem %s0, %s693
        $region100: #{tpu_custom_call.1} parent=95 // pred_fallthru
          _
        // Predicated region
        $region101: #{tpu_custom_call.1} parent=95 // pred_check
          %p695 = pneg %p82
        $region102: #{tpu_custom_call.1} parent=95 // pred_check_branch
          %697 = sbr.rel (%p695) target = $region104
        $region103: #{tpu_custom_call.1} parent=95 // pred_region
          %p698 = scmp.lt.s32.totalorder %s36, 1
          %s699 = scalar_select %p698, %s36, 1
          %s700 = smul.addr %s699, 3
          %s701 = smul.addr %s700, 8
          %s702 = scalar_lea.vmem %s1, %s701
        $region104: #{tpu_custom_call.1} parent=95 // pred_fallthru
          _
      $region96: #{tpu_custom_call.1} parent=5 // pred_fallthru
        _
      %p703 = scmp.le.s32.totalorder 1, %s36
      %p704 = scmp.lt.s32.totalorder %s36, 3
      %p705 = pnand %p703, %p704
      %p706 = pneg %p705
      // Predicated region
      $region105: #{tpu_custom_call.1} parent=5 // pred_check
        _
      $region106: #{tpu_custom_call.1} parent=5 // pred_check_branch
        %708 = sbr.rel (%p705) target = $region108
      $region107: #{tpu_custom_call.1} parent=5 // pred_region
        %s709 = ssub.s32 %s36, 1
        // Predicated region
        $region109: #{tpu_custom_call.1} parent=107 // pred_check
          %p710 = pneg %p361
        $region110: #{tpu_custom_call.1} parent=107 // pred_check_branch
          %712 = sbr.rel (%p710) target = $region112
        $region111: #{tpu_custom_call.1} parent=107 // pred_region
          %714 = dma.done [#allocation3], 512
        $region112: #{tpu_custom_call.1} parent=107 // pred_fallthru
          _
        // Predicated region
        $region113: #{tpu_custom_call.1} parent=107 // pred_check
          %p715 = pneg %p382
        $region114: #{tpu_custom_call.1} parent=107 // pred_check_branch
          %717 = sbr.rel (%p715) target = $region116
        $region115: #{tpu_custom_call.1} parent=107 // pred_region
          %719 = dma.done [#allocation6], 512
        $region116: #{tpu_custom_call.1} parent=107 // pred_fallthru
          _
        %p720 = scmp.lt.s32.totalorder %s41, 1
        %s721 = scalar_select %p720, %s41, 1
        %s722 = smul.addr %s721, 3
        %s723 = smul.addr %s722, 8
        %s724 = scalar_lea.vmem %s0, %s723
        %p725 = pneg %p62
        %p726 = pneg %p59
        %p727 = scmp.lt.s32.totalorder %s41, 1
        %s728 = scalar_select %p727, %s41, 1
        %s729 = smul.addr %s728, 3
        %s730 = smul.addr %s729, 8
        %s731 = scalar_lea.vmem %s1, %s730
        %p732 = pneg %p88
        %p733 = pneg %p85
        %p734 = pneg %p109
        %p735 = pneg %p106
        %p736 = pneg %p130
        %p737 = pneg %p127
        %p738 = pneg %p151
        %p739 = pneg %p148
        %p740 = pneg %p172
        %p741 = pneg %p169
        %p742 = pneg %p193
        %p743 = pneg %p190
        %p744 = pneg %p214
        %p745 = pneg %p211
        %p746 = pneg %p235
        %p747 = pneg %p232
        %p748 = pneg %p256
        %p749 = pneg %p253
        %p750 = pneg %p277
        %p751 = pneg %p274
        %p752 = pneg %p298
        %p753 = pneg %p295
        %p754 = pneg %p319
        %p755 = pneg %p316
        %p756 = pneg %p340
        %p757 = pneg %p337
        %p758 = pneg %p361
        %p759 = pneg %p358
        %p760 = pneg %p382
        %p761 = pneg %p379
        %p762 = pneg %p403
        %p763 = pneg %p400
        %p764 = pneg %p424
        %p765 = pneg %p421
        %p766 = pneg %p445
        %p767 = pneg %p442
        %p768 = pneg %p466
        %p769 = pneg %p463
        %p770 = pneg %p487
        %p771 = pneg %p484
        %p772 = pneg %p508
        %p773 = pneg %p505
        %p774 = pneg %p534
        %p775 = pneg %p531
        %p776 = scmp.lt.s32.totalorder %s41, 1
        %s777 = scalar_select %p776, %s41, 1
        %s778 = smul.addr %s777, 3
        %s779 = smul.addr %s778, 8
        %s780 = scalar_lea.vmem %s22, %s779
        %p781 = pneg %p560
        %p782 = pneg %p557
        %p783 = scmp.lt.s32.totalorder %s41, 1
        %s784 = scalar_select %p783, %s41, 1
        %s785 = smul.addr %s784, 3
        %s786 = smul.addr %s785, 8
        %s787 = scalar_lea.vmem %s23, %s786
        %p788 = pneg %p586
        %p789 = pneg %p583
        %s790 = sand.u32 %s573, 1
        %s791 = scalar_lea.sflag [#allocation4], %s790
        %s792 = sand.u32 %s573, 1
        %s793 = smul.addr %s792, 16
        %s794 = scalar_lea.vmem [#allocation7], %s793
        %p795 = scmp.lt.s32.totalorder %s41, 1
        %s796 = scalar_select %p795, %s41, 1
        %s797 = smul.addr %s796, 3
        %s798 = smul.addr %s797, 8
        %s799 = scalar_lea.vmem %s0, %s798
        %p800 = scmp.lt.s32.totalorder %s41, 1
        %s801 = scalar_select %p800, %s41, 1
        %s802 = smul.addr %s801, 3
        %s803 = smul.addr %s802, 8
        %s804 = scalar_lea.vmem %s1, %s803
        %p805 = scmp.lt.s32.totalorder %s41, 1
        %s806 = scalar_select %p805, %s41, 1
        %s807 = smul.addr %s806, 3
        %s808 = smul.addr %s807, 8
        %s809 = scalar_lea.vmem %s22, %s808
        %p810 = scmp.lt.s32.totalorder %s41, 1
        %s811 = scalar_select %p810, %s41, 1
        %s812 = smul.addr %s811, 3
        %s813 = smul.addr %s812, 8
        %s814 = scalar_lea.vmem %s23, %s813
        %v816 = vld [vmem:[%s799] sm:$0xff]
        %v817 = vld [vmem:[%s799 + $0x8] sm:$0xff]
        %v818 = vld [vmem:[%s799 + $0x10] sm:$0x1]
        %v819 = vld [vmem:[%s804] sm:$0xff]
        %v820 = vld [vmem:[%s804 + $0x8] sm:$0xff]
        %v821 = vld [vmem:[%s804 + $0x10] sm:$0x1]
        %v822 = vld [vmem:[%s2] sm:$0xff]
        %v823 = vld [vmem:[%s2 + $0x8] sm:$0xff]
        %v824 = vld [vmem:[%s2 + $0x10] sm:$0x1]
        %v825 = vadd.f32 %v816, %v822
        %v826 = vadd.f32 %v817, %v823
        %v827 = vadd.f32 %v818, %v824
        %v828 = vld [vmem:[%s3] sm:$0x1]
        %v829 = vld [vmem:[%s4] sm:$0x1]
        %vm830 = vcmask 523264
        %v831 = vsel %vm830, %v825, 0.0
        %832 = vadd.xlane.f32.xlu0 %v831
        %v833 = vpop.xlane.xlu0 %832
        %v834 = vsel %vm830, %v826, 0.0
        %835 = vadd.xlane.f32.xlu0 %v834
        %v836 = vpop.xlane.xlu0 %835
        %vm837 = vcmask 516096
        %v838 = vsel %vm837, %v827, 0.0
        %839 = vadd.xlane.f32.xlu0 %v838
        %v840 = vpop.xlane.xlu0 %839
        %v841 = vrcp.pop 64.0
        %v842 = vmul.f32 64.0, %v841
        %v843 = vsub.f32 1.0, %v842
        %v844 = vmul.f32 %v841, %v843
        %v845 = vadd.f32 %v841, %v844
        %vm846 = vweird.f32 %v841
        %v847 = vsel %vm846, %v841, %v845
        %v848 = vmul.f32 %v833, %v847
        %v849 = vmul.f32 %v836, %v847
        %v850 = vmul.f32 %v840, %v847
        %v851 = vsub.f32 %v825, %v848
        %v852 = vsub.f32 %v826, %v849
        %v853 = vsub.f32 %v827, %v850
        %v854 = vmul.f32 %v851, %v851
        %v855 = vmul.f32 %v852, %v852
        %v856 = vmul.f32 %v853, %v853
        %v857 = vsel %vm830, %v854, 0.0
        %858 = vadd.xlane.f32.xlu0 %v857
        %v859 = vpop.xlane.xlu0 %858
        %v860 = vsel %vm830, %v855, 0.0
        %861 = vadd.xlane.f32.xlu0 %v860
        %v862 = vpop.xlane.xlu0 %861
        %v863 = vsel %vm837, %v856, 0.0
        %864 = vadd.xlane.f32.xlu0 %v863
        %v865 = vpop.xlane.xlu0 %864
        %v866 = vmul.f32 %v859, %v847
        %v867 = vmul.f32 %v862, %v847
        %v868 = vmul.f32 %v865, %v847
        %v869 = vadd.f32 %v866, 1e-05
        %v870 = vadd.f32 %v867, 1e-05
        %v871 = vadd.f32 %v868, 1e-05
        %v872 = vrsqrt.pop %v869
        %v873 = vmul.f32 %v872, %v869
        %v874 = vmul.f32 %v873, %v872
        %v875 = vmul.f32 0.5, %v874
        %v876 = vsub.f32 1.5, %v875
        %v877 = vmul.f32 %v872, %v876
        %vm878 = vweird.f32 %v869
        %vm879 = vweird.f32 %v872
        %vm880 = vmor %vm878, %vm879
        %v881 = vsel %vm880, %v872, %v877
        %v882 = vrsqrt.pop %v870
        %v883 = vmul.f32 %v882, %v870
        %v884 = vmul.f32 %v883, %v882
        %v885 = vmul.f32 0.5, %v884
        %v886 = vsub.f32 1.5, %v885
        %v887 = vmul.f32 %v882, %v886
        %vm888 = vweird.f32 %v870
        %vm889 = vweird.f32 %v882
        %vm890 = vmor %vm888, %vm889
        %v891 = vsel %vm890, %v882, %v887
        %v892 = vrsqrt.pop %v871
        %v893 = vmul.f32 %v892, %v871
        %v894 = vmul.f32 %v893, %v892
        %v895 = vmul.f32 0.5, %v894
        %v896 = vsub.f32 1.5, %v895
        %v897 = vmul.f32 %v892, %v896
        %vm898 = vweird.f32 %v871
        %vm899 = vweird.f32 %v892
        %vm900 = vmor %vm898, %vm899
        %v901 = vsel %vm900, %v892, %v897
        %v902 = vmul.f32 %v851, %v881
        %v903 = vmul.f32 %v852, %v891
        %v904 = vmul.f32 %v853, %v901
        %v906 = vperm.slane %v828, 0
        %v908 = vmul.f32 %v902, %v906
        %v909 = vmul.f32 %v903, %v906
        %v910 = vmul.f32 %v904, %v906
        %v912 = vperm.slane %v829, 0
        %v914 = vadd.f32 %v908, %v912
        %v915 = vadd.f32 %v909, %v912
        %v916 = vadd.f32 %v910, %v912
        %v917 = vsel %vm830, %v819, 0.0
        %918 = vadd.xlane.f32.xlu0 %v917
        %v919 = vpop.xlane.xlu0 %918
        %v920 = vsel %vm830, %v820, 0.0
        %921 = vadd.xlane.f32.xlu0 %v920
        %v922 = vpop.xlane.xlu0 %921
        %v923 = vsel %vm837, %v821, 0.0
        %924 = vadd.xlane.f32.xlu0 %v923
        %v925 = vpop.xlane.xlu0 %924
        %v926 = vmul.f32 %v919, %v847
        %v927 = vmul.f32 %v922, %v847
        %v928 = vmul.f32 %v925, %v847
        %v929 = vsub.f32 %v819, %v926
        %v930 = vsub.f32 %v820, %v927
        %v931 = vsub.f32 %v821, %v928
        %v932 = vmul.f32 %v929, %v929
        %v933 = vmul.f32 %v930, %v930
        %v934 = vmul.f32 %v931, %v931
        %v935 = vsel %vm830, %v932, 0.0
        %936 = vadd.xlane.f32.xlu0 %v935
        %v937 = vpop.xlane.xlu0 %936
        %v938 = vsel %vm830, %v933, 0.0
        %939 = vadd.xlane.f32.xlu0 %v938
        %v940 = vpop.xlane.xlu0 %939
        %v941 = vsel %vm837, %v934, 0.0
        %942 = vadd.xlane.f32.xlu0 %v941
        %v943 = vpop.xlane.xlu0 %942
        %v944 = vmul.f32 %v937, %v847
        %v945 = vmul.f32 %v940, %v847
        %v946 = vmul.f32 %v943, %v847
        %v947 = vadd.f32 %v944, 1e-05
        %v948 = vadd.f32 %v945, 1e-05
        %v949 = vadd.f32 %v946, 1e-05
        %v950 = vrsqrt.pop %v947
        %v951 = vmul.f32 %v950, %v947
        %v952 = vmul.f32 %v951, %v950
        %v953 = vmul.f32 0.5, %v952
        %v954 = vsub.f32 1.5, %v953
        %v955 = vmul.f32 %v950, %v954
        %vm956 = vweird.f32 %v947
        %vm957 = vweird.f32 %v950
        %vm958 = vmor %vm956, %vm957
        %v959 = vsel %vm958, %v950, %v955
        %v960 = vrsqrt.pop %v948
        %v961 = vmul.f32 %v960, %v948
        %v962 = vmul.f32 %v961, %v960
        %v963 = vmul.f32 0.5, %v962
        %v964 = vsub.f32 1.5, %v963
        %v965 = vmul.f32 %v960, %v964
        %vm966 = vweird.f32 %v948
        %vm967 = vweird.f32 %v960
        %vm968 = vmor %vm966, %vm967
        %v969 = vsel %vm968, %v960, %v965
        %v970 = vrsqrt.pop %v949
        %v971 = vmul.f32 %v970, %v949
        %v972 = vmul.f32 %v971, %v970
        %v973 = vmul.f32 0.5, %v972
        %v974 = vsub.f32 1.5, %v973
        %v975 = vmul.f32 %v970, %v974
        %vm976 = vweird.f32 %v949
        %vm977 = vweird.f32 %v970
        %vm978 = vmor %vm976, %vm977
        %v979 = vsel %vm978, %v970, %v975
        %v980 = vmul.f32 %v929, %v959
        %v981 = vmul.f32 %v930, %v969
        %v982 = vmul.f32 %v931, %v979
        %v983 = vmul.f32 %v980, %v906
        %v984 = vmul.f32 %v981, %v906
        %v985 = vmul.f32 %v982, %v906
        %v986 = vadd.f32 %v983, %v912
        %v987 = vadd.f32 %v984, %v912
        %v988 = vadd.f32 %v985, %v912
        %vm992 = vcmask 1040384
        %v993 = vrot.slane %v986, 7
        %v994 = vrot.slane %v987, 7
        %v995 = vsel %vm992, %v993, %v994
        %v996 = vrot.slane %v988, 7
        %v997 = vsel %vm992, %v994, %v996
        %v1001 = vsel %vm992, %v916, %v993
        %v1002 = vpack.c.bf16 %v915, %v914
        %v1003 = vpack.c.bf16 %v995, %v1001
        %v1004 = vpack.c.bf16 %v997, %v997
        %v1005 = vld [vmem:[%s7] sm:$0xf]
        %v1006 = vld [vmem:[%s7 + $0x4] sm:$0xf]
        %v1007 = vld [vmem:[%s7 + $0x8] sm:$0xf]
        %v1008 = vld [vmem:[%s7 + $0xc] sm:$0xf]
        %v1009 = vld [vmem:[%s7 + $0x10] sm:$0xf]
        %v1010 = vld [vmem:[%s7 + $0x14] sm:$0xf]
        %v1011 = vld [vmem:[%s7 + $0x18] sm:$0xf]
        %v1012 = vld [vmem:[%s7 + $0x1c] sm:$0xf]
        %v1021 = vunpack.c.l.b16 %v1005
        %v1022 = vunpack.c.l.b16 %v1006
        %v1023 = vunpack.c.l.b16 %v1007
        %v1024 = vunpack.c.l.b16 %v1008
        %v1025 = vunpack.c.l.b16 %v1009
        %v1026 = vunpack.c.l.b16 %v1010
        %v1027 = vunpack.c.l.b16 %v1011
        %v1028 = vunpack.c.l.b16 %v1012
        %v1029 = vpack.c.b16 %v1022, %v1021
        %v1030 = vpack.c.b16 %v1024, %v1023
        %v1031 = vpack.c.b16 %v1026, %v1025
        %v1032 = vpack.c.b16 %v1028, %v1027
        %v1038 = vsel %vm830, %v1002, 0
        %v1041 = vsel %vm830, %v1003, 0
        %v1044 = vsel %vm830, %v1004, 0
        %1046 = vmatpush.bf16.msra.mxu0 0
        %1047 = vmatpush.bf16.msra.mxu0 0
        %1048 = vmatpush.bf16.msra.mxu0 0
        %1049 = vmatpush.bf16.msra.mxu0 0
        %1050 = vmatpush.bf16.msra.mxu0 %v1032
        %1051 = vmatpush.bf16.msra.mxu0 %v1031
        %1052 = vmatpush.bf16.msra.mxu0 %v1030
        %1053 = vmatpush.bf16.msra.mxu0 %v1029
        %1054 = vmatmul.bf16.gmra.mxu0 %v1038
        %v1055 = vpop.f32.mrf.mxu0
        %v1056 = vadd.f32 0.0, %v1055
        %v1057 = vpop.f32.mrf.mxu0
        %v1058 = vadd.f32 0.0, %v1057
        %1059 = vmatmul.bf16.gmra.mxu0 %v1041
        %v1060 = vpop.f32.mrf.mxu0
        %v1061 = vadd.f32 0.0, %v1060
        %v1062 = vpop.f32.mrf.mxu0
        %v1063 = vadd.f32 0.0, %v1062
        %1064 = vmatmul.bf16.gmra.mxu0 %v1044
        %v1065 = vpop.f32.mrf.mxu0
        %v1066 = vadd.f32 0.0, %v1065
        %v1067 = vpop.f32.mrf.mxu0
        %1068 = vdwg.mxu0
        %v1069 = vmul.f32 %v1056, 0.25
        %v1070 = vmul.f32 %v1058, 0.25
        %v1071 = vmul.f32 %v1061, 0.25
        %v1072 = vmul.f32 %v1063, 0.25
        %v1073 = vmul.f32 %v1066, 0.25
        %v1074 = vld [vmem:[%s8] sm:$0xf]
        %v1075 = vld [vmem:[%s8 + $0x4] sm:$0xf]
        %v1076 = vld [vmem:[%s8 + $0x8] sm:$0xf]
        %v1077 = vld [vmem:[%s8 + $0xc] sm:$0xf]
        %v1078 = vld [vmem:[%s8 + $0x10] sm:$0xf]
        %v1079 = vld [vmem:[%s8 + $0x14] sm:$0xf]
        %v1080 = vld [vmem:[%s8 + $0x18] sm:$0xf]
        %v1081 = vld [vmem:[%s8 + $0x1c] sm:$0xf]
        %v1090 = vunpack.c.l.b16 %v1074
        %v1091 = vunpack.c.l.b16 %v1075
        %v1092 = vunpack.c.l.b16 %v1076
        %v1093 = vunpack.c.l.b16 %v1077
        %v1094 = vunpack.c.l.b16 %v1078
        %v1095 = vunpack.c.l.b16 %v1079
        %v1096 = vunpack.c.l.b16 %v1080
        %v1097 = vunpack.c.l.b16 %v1081
        %v1098 = vpack.c.b16 %v1091, %v1090
        %v1099 = vpack.c.b16 %v1093, %v1092
        %v1100 = vpack.c.b16 %v1095, %v1094
        %v1101 = vpack.c.b16 %v1097, %v1096
        %1106 = vmatpush.bf16.msra.mxu0 0
        %1107 = vmatpush.bf16.msra.mxu0 0
        %1108 = vmatpush.bf16.msra.mxu0 0
        %1109 = vmatpush.bf16.msra.mxu0 0
        %1110 = vmatpush.bf16.msra.mxu0 %v1101
        %1111 = vmatpush.bf16.msra.mxu0 %v1100
        %1112 = vmatpush.bf16.msra.mxu0 %v1099
        %1113 = vmatpush.bf16.msra.mxu0 %v1098
        %1114 = vmatmul.bf16.gmra.mxu0 %v1038
        %v1115 = vpop.f32.mrf.mxu0
        %v1116 = vadd.f32 0.0, %v1115
        %v1117 = vpop.f32.mrf.mxu0
        %v1118 = vadd.f32 0.0, %v1117
        %1119 = vmatmul.bf16.gmra.mxu0 %v1041
        %v1120 = vpop.f32.mrf.mxu0
        %v1121 = vadd.f32 0.0, %v1120
        %v1122 = vpop.f32.mrf.mxu0
        %v1123 = vadd.f32 0.0, %v1122
        %1124 = vmatmul.bf16.gmra.mxu0 %v1044
        %v1125 = vpop.f32.mrf.mxu0
        %v1126 = vadd.f32 0.0, %v1125
        %v1127 = vpop.f32.mrf.mxu0
        %1128 = vdwg.mxu0
        %v1129 = vld [vmem:[%s9] sm:$0xf]
        %v1130 = vld [vmem:[%s9 + $0x4] sm:$0xf]
        %v1131 = vld [vmem:[%s9 + $0x8] sm:$0xf]
        %v1132 = vld [vmem:[%s9 + $0xc] sm:$0xf]
        %v1133 = vld [vmem:[%s9 + $0x10] sm:$0xf]
        %v1134 = vld [vmem:[%s9 + $0x14] sm:$0xf]
        %v1135 = vld [vmem:[%s9 + $0x18] sm:$0xf]
        %v1136 = vld [vmem:[%s9 + $0x1c] sm:$0xf]
        %v1145 = vunpack.c.l.b16 %v1129
        %v1146 = vunpack.c.l.b16 %v1130
        %v1147 = vunpack.c.l.b16 %v1131
        %v1148 = vunpack.c.l.b16 %v1132
        %v1149 = vunpack.c.l.b16 %v1133
        %v1150 = vunpack.c.l.b16 %v1134
        %v1151 = vunpack.c.l.b16 %v1135
        %v1152 = vunpack.c.l.b16 %v1136
        %v1153 = vpack.c.b16 %v1146, %v1145
        %v1154 = vpack.c.b16 %v1148, %v1147
        %v1155 = vpack.c.b16 %v1150, %v1149
        %v1156 = vpack.c.b16 %v1152, %v1151
        %1161 = vmatpush.bf16.msra.mxu0 0
        %1162 = vmatpush.bf16.msra.mxu0 0
        %1163 = vmatpush.bf16.msra.mxu0 0
        %1164 = vmatpush.bf16.msra.mxu0 0
        %1165 = vmatpush.bf16.msra.mxu0 %v1156
        %1166 = vmatpush.bf16.msra.mxu0 %v1155
        %1167 = vmatpush.bf16.msra.mxu0 %v1154
        %1168 = vmatpush.bf16.msra.mxu0 %v1153
        %1169 = vmatmul.bf16.gmra.mxu0 %v1038
        %v1170 = vpop.f32.mrf.mxu0
        %v1171 = vadd.f32 0.0, %v1170
        %v1172 = vpop.f32.mrf.mxu0
        %v1173 = vadd.f32 0.0, %v1172
        %1174 = vmatmul.bf16.gmra.mxu0 %v1041
        %v1175 = vpop.f32.mrf.mxu0
        %v1176 = vadd.f32 0.0, %v1175
        %v1177 = vpop.f32.mrf.mxu0
        %v1178 = vadd.f32 0.0, %v1177
        %1179 = vmatmul.bf16.gmra.mxu0 %v1044
        %v1180 = vpop.f32.mrf.mxu0
        %v1181 = vadd.f32 0.0, %v1180
        %v1182 = vpop.f32.mrf.mxu0
        %1183 = vdwg.mxu0
        %v1184 = vpack.c.bf16 %v1070, %v1069
        %v1185 = vpack.c.bf16 %v1071, %v1071
        %v1186 = vpack.c.bf16 %v1118, %v1116
        %v1187 = vpack.c.bf16 %v1121, %v1121
        %v1188 = vpack.c.bf16 %v1173, %v1171
        %v1189 = vpack.c.bf16 %v1176, %v1176
        %vm1190 = vcmask 130048
        %v1192 = vsel %vm1190, %v1184, 0
        %v1195 = vsel %vm1190, %v1185, 0
        %v1198 = vsel %vm1190, %v1186, 0
        %v1201 = vsel %vm1190, %v1187, 0
        %1203 = vmatpush.bf16.xpose.msra.mxu0 0
        %1204 = vmatpush.bf16.xpose.msra.mxu0 0
        %1205 = vmatpush.bf16.xpose.msra.mxu0 0
        %1206 = vmatpush.bf16.xpose.msra.mxu0 0
        %1207 = vmatpush.bf16.xpose.msra.mxu0 0
        %1208 = vmatpush.bf16.xpose.msra.mxu0 0
        %1209 = vmatpush.bf16.xpose.msra.mxu0 %v1201
        %1210 = vmatpush.bf16.xpose.msra.mxu0 %v1198
        %1211 = vmatmul.bf16.gmra.mxu0 %v1192
        %v1212 = vpop.f32.mrf.mxu0
        %v1213 = vadd.f32 0.0, %v1212
        %v1214 = vpop.f32.mrf.mxu0
        %v1215 = vadd.f32 0.0, %v1214
        %1216 = vmatmul.bf16.gmra.mxu0 %v1195
        %v1217 = vpop.f32.mrf.mxu0
        %v1218 = vadd.f32 0.0, %v1217
        %v1219 = vpop.f32.mrf.mxu0
        %1220 = vdwg.mxu0
        %vm1221 = vcmask 138240
        %v1222 = vsel %vm1221, %v1213, -inf
        %1223 = vmax.xlane.f32.xlu0 %v1222
        %v1224 = vpop.xlane.xlu0 %1223
        %v1225 = vsel %vm1221, %v1215, -inf
        %1226 = vmax.xlane.f32.xlu0 %v1225
        %v1227 = vpop.xlane.xlu0 %1226
        %vm1228 = vcmask 131072
        %v1229 = vsel %vm1228, %v1218, -inf
        %1230 = vmax.xlane.f32.xlu0 %v1229
        %v1231 = vpop.xlane.xlu0 %1230
        %v1232 = vsub.f32 %v1213, %v1224
        %v1233 = vsub.f32 %v1215, %v1227
        %v1234 = vsub.f32 %v1218, %v1231
        %v1235 = vmul.f32 %v1232, 1.442695
        %v1236 = vpow.pop %v1235
        %v1237 = vmul.f32 %v1233, 1.442695
        %v1238 = vpow.pop %v1237
        %v1239 = vmul.f32 %v1234, 1.442695
        %v1240 = vpow.pop %v1239
        %v1241 = vsel %vm1221, %v1236, 0.0
        %1242 = vadd.xlane.f32.xlu0 %v1241
        %v1243 = vpop.xlane.xlu0 %1242
        %v1244 = vsel %vm1221, %v1238, 0.0
        %1245 = vadd.xlane.f32.xlu0 %v1244
        %v1246 = vpop.xlane.xlu0 %1245
        %v1247 = vsel %vm1228, %v1240, 0.0
        %1248 = vadd.xlane.f32.xlu0 %v1247
        %v1249 = vpop.xlane.xlu0 %1248
        %v1250 = vrcp.pop %v1243
        %v1251 = vmul.f32 %v1243, %v1250
        %v1252 = vsub.f32 1.0, %v1251
        %v1253 = vmul.f32 %v1250, %v1252
        %v1254 = vadd.f32 %v1250, %v1253
        %vm1255 = vweird.f32 %v1243
        %vm1256 = vweird.f32 %v1250
        %vm1257 = vmor %vm1255, %vm1256
        %v1258 = vsel %vm1257, %v1250, %v1254
        %v1259 = vand.u32 2147483647, %v1243
        %vm1260 = vcmp.eq.f32.partialorder %v1259, 8.507059e+37
        %v1261 = vand.u32 %v1243, 2147483648
        %v1262 = vor.u32 1.1754944e-38, %v1261
        %v1263 = vsel %vm1260, %v1262, %v1258
        %v1264 = vmul.f32 %v1236, %v1263
        %v1265 = vrcp.pop %v1246
        %v1266 = vmul.f32 %v1246, %v1265
        %v1267 = vsub.f32 1.0, %v1266
        %v1268 = vmul.f32 %v1265, %v1267
        %v1269 = vadd.f32 %v1265, %v1268
        %vm1270 = vweird.f32 %v1246
        %vm1271 = vweird.f32 %v1265
        %vm1272 = vmor %vm1270, %vm1271
        %v1273 = vsel %vm1272, %v1265, %v1269
        %v1274 = vand.u32 2147483647, %v1246
        %vm1275 = vcmp.eq.f32.partialorder %v1274, 8.507059e+37
        %v1276 = vand.u32 %v1246, 2147483648
        %v1277 = vor.u32 1.1754944e-38, %v1276
        %v1278 = vsel %vm1275, %v1277, %v1273
        %v1279 = vmul.f32 %v1238, %v1278
        %v1280 = vrcp.pop %v1249
        %v1281 = vmul.f32 %v1249, %v1280
        %v1282 = vsub.f32 1.0, %v1281
        %v1283 = vmul.f32 %v1280, %v1282
        %v1284 = vadd.f32 %v1280, %v1283
        %vm1285 = vweird.f32 %v1249
        %vm1286 = vweird.f32 %v1280
        %vm1287 = vmor %vm1285, %vm1286
        %v1288 = vsel %vm1287, %v1280, %v1284
        %v1289 = vand.u32 2147483647, %v1249
        %vm1290 = vcmp.eq.f32.partialorder %v1289, 8.507059e+37
        %v1291 = vand.u32 %v1249, 2147483648
        %v1292 = vor.u32 1.1754944e-38, %v1291
        %v1293 = vsel %vm1290, %v1292, %v1288
        %v1294 = vmul.f32 %v1240, %v1293
        %v1295 = vpack.c.bf16 %v1279, %v1264
        %v1296 = vpack.c.bf16 %v1294, %v1294
        %v1298 = vsel %vm1221, %v1295, 0
        %v1301 = vsel %vm1221, %v1296, 0
        %v1303 = vsel 0, 4294967295, 65535
        %v1304 = vsel %vm992, %v1303, 0
        %v1306 = vand.u32 %v1189, %v1304
        %1308 = vmatpush.bf16.msra.mxu0 0
        %1309 = vmatpush.bf16.msra.mxu0 0
        %1310 = vmatpush.bf16.msra.mxu0 0
        %1311 = vmatpush.bf16.msra.mxu0 0
        %1312 = vmatpush.bf16.msra.mxu0 0
        %1313 = vmatpush.bf16.msra.mxu0 0
        %1314 = vmatpush.bf16.msra.mxu0 %v1306
        %1315 = vmatpush.bf16.msra.mxu0 %v1188
        %1316 = vmatmul.bf16.gmra.mxu0 %v1298
        %v1317 = vpop.f32.mrf.mxu0
        %v1318 = vadd.f32 0.0, %v1317
        %v1319 = vpop.f32.mrf.mxu0
        %v1320 = vadd.f32 0.0, %v1319
        %1321 = vmatmul.bf16.gmra.mxu0 %v1301
        %v1322 = vpop.f32.mrf.mxu0
        %v1323 = vadd.f32 0.0, %v1322
        %v1324 = vpop.f32.mrf.mxu0
        %1325 = vdwg.mxu0
        %1328 = vrot.lane.b32.xlu0 %v1184, 112
        %v1329 = vpop.permute.xlu0 %1328
        %1330 = vrot.lane.b32.xlu0 %v1185, 112
        %v1331 = vpop.permute.xlu0 %1330
        %1334 = vrot.lane.b32.xlu0 %v1186, 112
        %v1335 = vpop.permute.xlu0 %1334
        %1336 = vrot.lane.b32.xlu0 %v1187, 112
        %v1337 = vpop.permute.xlu0 %1336
        %v1339 = vsel %vm1190, %v1329, 0
        %v1342 = vsel %vm1190, %v1331, 0
        %v1345 = vsel %vm1190, %v1335, 0
        %v1348 = vsel %vm1190, %v1337, 0
        %1350 = vmatpush.bf16.xpose.msra.mxu0 0
        %1351 = vmatpush.bf16.xpose.msra.mxu0 0
        %1352 = vmatpush.bf16.xpose.msra.mxu0 0
        %1353 = vmatpush.bf16.xpose.msra.mxu0 0
        %1354 = vmatpush.bf16.xpose.msra.mxu0 0
        %1355 = vmatpush.bf16.xpose.msra.mxu0 0
        %1356 = vmatpush.bf16.xpose.msra.mxu0 %v1348
        %1357 = vmatpush.bf16.xpose.msra.mxu0 %v1345
        %1358 = vmatmul.bf16.gmra.mxu0 %v1339
        %v1359 = vpop.f32.mrf.mxu0
        %v1360 = vadd.f32 0.0, %v1359
        %v1361 = vpop.f32.mrf.mxu0
        %v1362 = vadd.f32 0.0, %v1361
        %1363 = vmatmul.bf16.gmra.mxu0 %v1342
        %v1364 = vpop.f32.mrf.mxu0
        %v1365 = vadd.f32 0.0, %v1364
        %v1366 = vpop.f32.mrf.mxu0
        %1367 = vdwg.mxu0
        %v1368 = vsel %vm1221, %v1360, -inf
        %1369 = vmax.xlane.f32.xlu0 %v1368
        %v1370 = vpop.xlane.xlu0 %1369
        %v1371 = vsel %vm1221, %v1362, -inf
        %1372 = vmax.xlane.f32.xlu0 %v1371
        %v1373 = vpop.xlane.xlu0 %1372
        %v1374 = vsel %vm1228, %v1365, -inf
        %1375 = vmax.xlane.f32.xlu0 %v1374
        %v1376 = vpop.xlane.xlu0 %1375
        %v1377 = vsub.f32 %v1360, %v1370
        %v1378 = vsub.f32 %v1362, %v1373
        %v1379 = vsub.f32 %v1365, %v1376
        %v1380 = vmul.f32 %v1377, 1.442695
        %v1381 = vpow.pop %v1380
        %v1382 = vmul.f32 %v1378, 1.442695
        %v1383 = vpow.pop %v1382
        %v1384 = vmul.f32 %v1379, 1.442695
        %v1385 = vpow.pop %v1384
        %v1386 = vsel %vm1221, %v1381, 0.0
        %1387 = vadd.xlane.f32.xlu0 %v1386
        %v1388 = vpop.xlane.xlu0 %1387
        %v1389 = vsel %vm1221, %v1383, 0.0
        %1390 = vadd.xlane.f32.xlu0 %v1389
        %v1391 = vpop.xlane.xlu0 %1390
        %v1392 = vsel %vm1228, %v1385, 0.0
        %1393 = vadd.xlane.f32.xlu0 %v1392
        %v1394 = vpop.xlane.xlu0 %1393
        %v1395 = vrcp.pop %v1388
        %v1396 = vmul.f32 %v1388, %v1395
        %v1397 = vsub.f32 1.0, %v1396
        %v1398 = vmul.f32 %v1395, %v1397
        %v1399 = vadd.f32 %v1395, %v1398
        %vm1400 = vweird.f32 %v1388
        %vm1401 = vweird.f32 %v1395
        %vm1402 = vmor %vm1400, %vm1401
        %v1403 = vsel %vm1402, %v1395, %v1399
        %v1404 = vand.u32 2147483647, %v1388
        %vm1405 = vcmp.eq.f32.partialorder %v1404, 8.507059e+37
        %v1406 = vand.u32 %v1388, 2147483648
        %v1407 = vor.u32 1.1754944e-38, %v1406
        %v1408 = vsel %vm1405, %v1407, %v1403
        %v1409 = vmul.f32 %v1381, %v1408
        %v1410 = vrcp.pop %v1391
        %v1411 = vmul.f32 %v1391, %v1410
        %v1412 = vsub.f32 1.0, %v1411
        %v1413 = vmul.f32 %v1410, %v1412
        %v1414 = vadd.f32 %v1410, %v1413
        %vm1415 = vweird.f32 %v1391
        %vm1416 = vweird.f32 %v1410
        %vm1417 = vmor %vm1415, %vm1416
        %v1418 = vsel %vm1417, %v1410, %v1414
        %v1419 = vand.u32 2147483647, %v1391
        %vm1420 = vcmp.eq.f32.partialorder %v1419, 8.507059e+37
        %v1421 = vand.u32 %v1391, 2147483648
        %v1422 = vor.u32 1.1754944e-38, %v1421
        %v1423 = vsel %vm1420, %v1422, %v1418
        %v1424 = vmul.f32 %v1383, %v1423
        %v1425 = vrcp.pop %v1394
        %v1426 = vmul.f32 %v1394, %v1425
        %v1427 = vsub.f32 1.0, %v1426
        %v1428 = vmul.f32 %v1425, %v1427
        %v1429 = vadd.f32 %v1425, %v1428
        %vm1430 = vweird.f32 %v1394
        %vm1431 = vweird.f32 %v1425
        %vm1432 = vmor %vm1430, %vm1431
        %v1433 = vsel %vm1432, %v1425, %v1429
        %v1434 = vand.u32 2147483647, %v1394
        %vm1435 = vcmp.eq.f32.partialorder %v1434, 8.507059e+37
        %v1436 = vand.u32 %v1394, 2147483648
        %v1437 = vor.u32 1.1754944e-38, %v1436
        %v1438 = vsel %vm1435, %v1437, %v1433
        %v1439 = vmul.f32 %v1385, %v1438
        %v1440 = vpack.c.bf16 %v1424, %v1409
        %v1441 = vpack.c.bf16 %v1439, %v1439
        %1444 = vrot.lane.b32.xlu0 %v1188, 112
        %v1445 = vpop.permute.xlu0 %1444
        %1446 = vrot.lane.b32.xlu0 %v1189, 112
        %v1447 = vpop.permute.xlu0 %1446
        %v1450 = vsel %vm1221, %v1440, 0
        %v1453 = vsel %vm1221, %v1441, 0
        %v1456 = vand.u32 %v1447, %v1304
        %1458 = vmatpush.bf16.msra.mxu0 0
        %1459 = vmatpush.bf16.msra.mxu0 0
        %1460 = vmatpush.bf16.msra.mxu0 0
        %1461 = vmatpush.bf16.msra.mxu0 0
        %1462 = vmatpush.bf16.msra.mxu0 0
        %1463 = vmatpush.bf16.msra.mxu0 0
        %1464 = vmatpush.bf16.msra.mxu0 %v1456
        %1465 = vmatpush.bf16.msra.mxu0 %v1445
        %1466 = vmatmul.bf16.gmra.mxu0 %v1450
        %v1467 = vpop.f32.mrf.mxu0
        %v1468 = vadd.f32 0.0, %v1467
        %v1469 = vpop.f32.mrf.mxu0
        %v1470 = vadd.f32 0.0, %v1469
        %1471 = vmatmul.bf16.gmra.mxu0 %v1453
        %v1472 = vpop.f32.mrf.mxu0
        %v1473 = vadd.f32 0.0, %v1472
        %v1474 = vpop.f32.mrf.mxu0
        %1475 = vdwg.mxu0
        %1476 = vrot.lane.b32.xlu0 %v1184, 96
        %v1477 = vpop.permute.xlu0 %1476
        %1478 = vrot.lane.b32.xlu0 %v1185, 96
        %v1479 = vpop.permute.xlu0 %1478
        %1480 = vrot.lane.b32.xlu0 %v1186, 96
        %v1481 = vpop.permute.xlu0 %1480
        %1482 = vrot.lane.b32.xlu0 %v1187, 96
        %v1483 = vpop.permute.xlu0 %1482
        %v1485 = vsel %vm1190, %v1477, 0
        %v1488 = vsel %vm1190, %v1479, 0
        %v1491 = vsel %vm1190, %v1481, 0
        %v1494 = vsel %vm1190, %v1483, 0
        %1496 = vmatpush.bf16.xpose.msra.mxu0 0
        %1497 = vmatpush.bf16.xpose.msra.mxu0 0
        %1498 = vmatpush.bf16.xpose.msra.mxu0 0
        %1499 = vmatpush.bf16.xpose.msra.mxu0 0
        %1500 = vmatpush.bf16.xpose.msra.mxu0 0
        %1501 = vmatpush.bf16.xpose.msra.mxu0 0
        %1502 = vmatpush.bf16.xpose.msra.mxu0 %v1494
        %1503 = vmatpush.bf16.xpose.msra.mxu0 %v1491
        %1504 = vmatmul.bf16.gmra.mxu0 %v1485
        %v1505 = vpop.f32.mrf.mxu0
        %v1506 = vadd.f32 0.0, %v1505
        %v1507 = vpop.f32.mrf.mxu0
        %v1508 = vadd.f32 0.0, %v1507
        %1509 = vmatmul.bf16.gmra.mxu0 %v1488
        %v1510 = vpop.f32.mrf.mxu0
        %v1511 = vadd.f32 0.0, %v1510
        %v1512 = vpop.f32.mrf.mxu0
        %1513 = vdwg.mxu0
        %v1514 = vsel %vm1221, %v1506, -inf
        %1515 = vmax.xlane.f32.xlu0 %v1514
        %v1516 = vpop.xlane.xlu0 %1515
        %v1517 = vsel %vm1221, %v1508, -inf
        %1518 = vmax.xlane.f32.xlu0 %v1517
        %v1519 = vpop.xlane.xlu0 %1518
        %v1520 = vsel %vm1228, %v1511, -inf
        %1521 = vmax.xlane.f32.xlu0 %v1520
        %v1522 = vpop.xlane.xlu0 %1521
        %v1523 = vsub.f32 %v1506, %v1516
        %v1524 = vsub.f32 %v1508, %v1519
        %v1525 = vsub.f32 %v1511, %v1522
        %v1526 = vmul.f32 %v1523, 1.442695
        %v1527 = vpow.pop %v1526
        %v1528 = vmul.f32 %v1524, 1.442695
        %v1529 = vpow.pop %v1528
        %v1530 = vmul.f32 %v1525, 1.442695
        %v1531 = vpow.pop %v1530
        %v1532 = vsel %vm1221, %v1527, 0.0
        %1533 = vadd.xlane.f32.xlu0 %v1532
        %v1534 = vpop.xlane.xlu0 %1533
        %v1535 = vsel %vm1221, %v1529, 0.0
        %1536 = vadd.xlane.f32.xlu0 %v1535
        %v1537 = vpop.xlane.xlu0 %1536
        %v1538 = vsel %vm1228, %v1531, 0.0
        %1539 = vadd.xlane.f32.xlu0 %v1538
        %v1540 = vpop.xlane.xlu0 %1539
        %v1541 = vrcp.pop %v1534
        %v1542 = vmul.f32 %v1534, %v1541
        %v1543 = vsub.f32 1.0, %v1542
        %v1544 = vmul.f32 %v1541, %v1543
        %v1545 = vadd.f32 %v1541, %v1544
        %vm1546 = vweird.f32 %v1534
        %vm1547 = vweird.f32 %v1541
        %vm1548 = vmor %vm1546, %vm1547
        %v1549 = vsel %vm1548, %v1541, %v1545
        %v1550 = vand.u32 2147483647, %v1534
        %vm1551 = vcmp.eq.f32.partialorder %v1550, 8.507059e+37
        %v1552 = vand.u32 %v1534, 2147483648
        %v1553 = vor.u32 1.1754944e-38, %v1552
        %v1554 = vsel %vm1551, %v1553, %v1549
        %v1555 = vmul.f32 %v1527, %v1554
        %v1556 = vrcp.pop %v1537
        %v1557 = vmul.f32 %v1537, %v1556
        %v1558 = vsub.f32 1.0, %v1557
        %v1559 = vmul.f32 %v1556, %v1558
        %v1560 = vadd.f32 %v1556, %v1559
        %vm1561 = vweird.f32 %v1537
        %vm1562 = vweird.f32 %v1556
        %vm1563 = vmor %vm1561, %vm1562
        %v1564 = vsel %vm1563, %v1556, %v1560
        %v1565 = vand.u32 2147483647, %v1537
        %vm1566 = vcmp.eq.f32.partialorder %v1565, 8.507059e+37
        %v1567 = vand.u32 %v1537, 2147483648
        %v1568 = vor.u32 1.1754944e-38, %v1567
        %v1569 = vsel %vm1566, %v1568, %v1564
        %v1570 = vmul.f32 %v1529, %v1569
        %v1571 = vrcp.pop %v1540
        %v1572 = vmul.f32 %v1540, %v1571
        %v1573 = vsub.f32 1.0, %v1572
        %v1574 = vmul.f32 %v1571, %v1573
        %v1575 = vadd.f32 %v1571, %v1574
        %vm1576 = vweird.f32 %v1540
        %vm1577 = vweird.f32 %v1571
        %vm1578 = vmor %vm1576, %vm1577
        %v1579 = vsel %vm1578, %v1571, %v1575
        %v1580 = vand.u32 2147483647, %v1540
        %vm1581 = vcmp.eq.f32.partialorder %v1580, 8.507059e+37
        %v1582 = vand.u32 %v1540, 2147483648
        %v1583 = vor.u32 1.1754944e-38, %v1582
        %v1584 = vsel %vm1581, %v1583, %v1579
        %v1585 = vmul.f32 %v1531, %v1584
        %v1586 = vpack.c.bf16 %v1570, %v1555
        %v1587 = vpack.c.bf16 %v1585, %v1585
        %1588 = vrot.lane.b32.xlu0 %v1188, 96
        %v1589 = vpop.permute.xlu0 %1588
        %1590 = vrot.lane.b32.xlu0 %v1189, 96
        %v1591 = vpop.permute.xlu0 %1590
        %v1594 = vsel %vm1221, %v1586, 0
        %v1597 = vsel %vm1221, %v1587, 0
        %v1600 = vand.u32 %v1591, %v1304
        %1602 = vmatpush.bf16.msra.mxu0 0
        %1603 = vmatpush.bf16.msra.mxu0 0
        %1604 = vmatpush.bf16.msra.mxu0 0
        %1605 = vmatpush.bf16.msra.mxu0 0
        %1606 = vmatpush.bf16.msra.mxu0 0
        %1607 = vmatpush.bf16.msra.mxu0 0
        %1608 = vmatpush.bf16.msra.mxu0 %v1600
        %1609 = vmatpush.bf16.msra.mxu0 %v1589
        %1610 = vmatmul.bf16.gmra.mxu0 %v1594
        %v1611 = vpop.f32.mrf.mxu0
        %v1612 = vadd.f32 0.0, %v1611
        %v1613 = vpop.f32.mrf.mxu0
        %v1614 = vadd.f32 0.0, %v1613
        %1615 = vmatmul.bf16.gmra.mxu0 %v1597
        %v1616 = vpop.f32.mrf.mxu0
        %v1617 = vadd.f32 0.0, %v1616
        %v1618 = vpop.f32.mrf.mxu0
        %1619 = vdwg.mxu0
        %1620 = vrot.lane.b32.xlu0 %v1184, 80
        %v1621 = vpop.permute.xlu0 %1620
        %1622 = vrot.lane.b32.xlu0 %v1185, 80
        %v1623 = vpop.permute.xlu0 %1622
        %1624 = vrot.lane.b32.xlu0 %v1186, 80
        %v1625 = vpop.permute.xlu0 %1624
        %1626 = vrot.lane.b32.xlu0 %v1187, 80
        %v1627 = vpop.permute.xlu0 %1626
        %v1629 = vsel %vm1190, %v1621, 0
        %v1632 = vsel %vm1190, %v1623, 0
        %v1635 = vsel %vm1190, %v1625, 0
        %v1638 = vsel %vm1190, %v1627, 0
        %1640 = vmatpush.bf16.xpose.msra.mxu0 0
        %1641 = vmatpush.bf16.xpose.msra.mxu0 0
        %1642 = vmatpush.bf16.xpose.msra.mxu0 0
        %1643 = vmatpush.bf16.xpose.msra.mxu0 0
        %1644 = vmatpush.bf16.xpose.msra.mxu0 0
        %1645 = vmatpush.bf16.xpose.msra.mxu0 0
        %1646 = vmatpush.bf16.xpose.msra.mxu0 %v1638
        %1647 = vmatpush.bf16.xpose.msra.mxu0 %v1635
        %1648 = vmatmul.bf16.gmra.mxu0 %v1629
        %v1649 = vpop.f32.mrf.mxu0
        %v1650 = vadd.f32 0.0, %v1649
        %v1651 = vpop.f32.mrf.mxu0
        %v1652 = vadd.f32 0.0, %v1651
        %1653 = vmatmul.bf16.gmra.mxu0 %v1632
        %v1654 = vpop.f32.mrf.mxu0
        %v1655 = vadd.f32 0.0, %v1654
        %v1656 = vpop.f32.mrf.mxu0
        %1657 = vdwg.mxu0
        %v1658 = vsel %vm1221, %v1650, -inf
        %1659 = vmax.xlane.f32.xlu0 %v1658
        %v1660 = vpop.xlane.xlu0 %1659
        %v1661 = vsel %vm1221, %v1652, -inf
        %1662 = vmax.xlane.f32.xlu0 %v1661
        %v1663 = vpop.xlane.xlu0 %1662
        %v1664 = vsel %vm1228, %v1655, -inf
        %1665 = vmax.xlane.f32.xlu0 %v1664
        %v1666 = vpop.xlane.xlu0 %1665
        %v1667 = vsub.f32 %v1650, %v1660
        %v1668 = vsub.f32 %v1652, %v1663
        %v1669 = vsub.f32 %v1655, %v1666
        %v1670 = vmul.f32 %v1667, 1.442695
        %v1671 = vpow.pop %v1670
        %v1672 = vmul.f32 %v1668, 1.442695
        %v1673 = vpow.pop %v1672
        %v1674 = vmul.f32 %v1669, 1.442695
        %v1675 = vpow.pop %v1674
        %v1676 = vsel %vm1221, %v1671, 0.0
        %1677 = vadd.xlane.f32.xlu0 %v1676
        %v1678 = vpop.xlane.xlu0 %1677
        %v1679 = vsel %vm1221, %v1673, 0.0
        %1680 = vadd.xlane.f32.xlu0 %v1679
        %v1681 = vpop.xlane.xlu0 %1680
        %v1682 = vsel %vm1228, %v1675, 0.0
        %1683 = vadd.xlane.f32.xlu0 %v1682
        %v1684 = vpop.xlane.xlu0 %1683
        %v1685 = vrcp.pop %v1678
        %v1686 = vmul.f32 %v1678, %v1685
        %v1687 = vsub.f32 1.0, %v1686
        %v1688 = vmul.f32 %v1685, %v1687
        %v1689 = vadd.f32 %v1685, %v1688
        %vm1690 = vweird.f32 %v1678
        %vm1691 = vweird.f32 %v1685
        %vm1692 = vmor %vm1690, %vm1691
        %v1693 = vsel %vm1692, %v1685, %v1689
        %v1694 = vand.u32 2147483647, %v1678
        %vm1695 = vcmp.eq.f32.partialorder %v1694, 8.507059e+37
        %v1696 = vand.u32 %v1678, 2147483648
        %v1697 = vor.u32 1.1754944e-38, %v1696
        %v1698 = vsel %vm1695, %v1697, %v1693
        %v1699 = vmul.f32 %v1671, %v1698
        %v1700 = vrcp.pop %v1681
        %v1701 = vmul.f32 %v1681, %v1700
        %v1702 = vsub.f32 1.0, %v1701
        %v1703 = vmul.f32 %v1700, %v1702
        %v1704 = vadd.f32 %v1700, %v1703
        %vm1705 = vweird.f32 %v1681
        %vm1706 = vweird.f32 %v1700
        %vm1707 = vmor %vm1705, %vm1706
        %v1708 = vsel %vm1707, %v1700, %v1704
        %v1709 = vand.u32 2147483647, %v1681
        %vm1710 = vcmp.eq.f32.partialorder %v1709, 8.507059e+37
        %v1711 = vand.u32 %v1681, 2147483648
        %v1712 = vor.u32 1.1754944e-38, %v1711
        %v1713 = vsel %vm1710, %v1712, %v1708
        %v1714 = vmul.f32 %v1673, %v1713
        %v1715 = vrcp.pop %v1684
        %v1716 = vmul.f32 %v1684, %v1715
        %v1717 = vsub.f32 1.0, %v1716
        %v1718 = vmul.f32 %v1715, %v1717
        %v1719 = vadd.f32 %v1715, %v1718
        %vm1720 = vweird.f32 %v1684
        %vm1721 = vweird.f32 %v1715
        %vm1722 = vmor %vm1720, %vm1721
        %v1723 = vsel %vm1722, %v1715, %v1719
        %v1724 = vand.u32 2147483647, %v1684
        %vm1725 = vcmp.eq.f32.partialorder %v1724, 8.507059e+37
        %v1726 = vand.u32 %v1684, 2147483648
        %v1727 = vor.u32 1.1754944e-38, %v1726
        %v1728 = vsel %vm1725, %v1727, %v1723
        %v1729 = vmul.f32 %v1675, %v1728
        %v1730 = vpack.c.bf16 %v1714, %v1699
        %v1731 = vpack.c.bf16 %v1729, %v1729
        %1732 = vrot.lane.b32.xlu0 %v1188, 80
        %v1733 = vpop.permute.xlu0 %1732
        %1734 = vrot.lane.b32.xlu0 %v1189, 80
        %v1735 = vpop.permute.xlu0 %1734
        %v1738 = vsel %vm1221, %v1730, 0
        %v1741 = vsel %vm1221, %v1731, 0
        %v1744 = vand.u32 %v1735, %v1304
        %1746 = vmatpush.bf16.msra.mxu0 0
        %1747 = vmatpush.bf16.msra.mxu0 0
        %1748 = vmatpush.bf16.msra.mxu0 0
        %1749 = vmatpush.bf16.msra.mxu0 0
        %1750 = vmatpush.bf16.msra.mxu0 0
        %1751 = vmatpush.bf16.msra.mxu0 0
        %1752 = vmatpush.bf16.msra.mxu0 %v1744
        %1753 = vmatpush.bf16.msra.mxu0 %v1733
        %1754 = vmatmul.bf16.gmra.mxu0 %v1738
        %v1755 = vpop.f32.mrf.mxu0
        %v1756 = vadd.f32 0.0, %v1755
        %v1757 = vpop.f32.mrf.mxu0
        %v1758 = vadd.f32 0.0, %v1757
        %1759 = vmatmul.bf16.gmra.mxu0 %v1741
        %v1760 = vpop.f32.mrf.mxu0
        %v1761 = vadd.f32 0.0, %v1760
        %v1762 = vpop.f32.mrf.mxu0
        %1763 = vdwg.mxu0
        %1767 = vrot.lane.b32.xlu0 %v1468, 16
        %v1768 = vpop.permute.xlu0 %1767
        %1769 = vrot.lane.b32.xlu0 %v1470, 16
        %v1770 = vpop.permute.xlu0 %1769
        %1771 = vrot.lane.b32.xlu0 %v1473, 16
        %v1772 = vpop.permute.xlu0 %1771
        %1779 = vrot.lane.b32.xlu0 %v1612, 32
        %v1780 = vpop.permute.xlu0 %1779
        %1781 = vrot.lane.b32.xlu0 %v1614, 32
        %v1782 = vpop.permute.xlu0 %1781
        %1783 = vrot.lane.b32.xlu0 %v1617, 32
        %v1784 = vpop.permute.xlu0 %1783
        %1791 = vrot.lane.b32.xlu0 %v1756, 48
        %v1792 = vpop.permute.xlu0 %1791
        %1793 = vrot.lane.b32.xlu0 %v1758, 48
        %v1794 = vpop.permute.xlu0 %1793
        %1795 = vrot.lane.b32.xlu0 %v1761, 48
        %v1796 = vpop.permute.xlu0 %1795
        %v1800 = vsel %vm1190, %v1318, %v1768
        %v1801 = vsel %vm1190, %v1320, %v1770
        %v1802 = vsel %vm1190, %v1323, %v1772
        %vm1803 = vcmask 261120
        %v1804 = vsel %vm1803, %v1800, %v1780
        %v1805 = vsel %vm1803, %v1801, %v1782
        %v1806 = vsel %vm1803, %v1802, %v1784
        %vm1807 = vcmask 392192
        %v1808 = vsel %vm1807, %v1804, %v1792
        %v1809 = vsel %vm1807, %v1805, %v1794
        %v1810 = vsel %vm1807, %v1806, %v1796
        %v1811 = vpack.c.bf16 %v1072, %v1071
        %v1812 = vpack.c.bf16 %v1073, %v1073
        %v1813 = vpack.c.bf16 %v1123, %v1121
        %v1814 = vpack.c.bf16 %v1126, %v1126
        %v1815 = vpack.c.bf16 %v1178, %v1176
        %v1816 = vpack.c.bf16 %v1181, %v1181
        %vm1817 = vsmask.f32 7424
        %v1819 = vshrl.u32 %v1811, 16
        %v1821 = vshll.u32 %v1811, 16
        %v1823 = vrot.slane %v1821, 1
        %v1824 = vor.u32 %v1819, %v1823
        %v1826 = vshll.u32 %v1812, 16
        %v1828 = vrot.slane %v1826, 1
        %v1829 = vsel %vm1817, %v1824, %v1828
        %v1830 = vshrl.u32 %v1812, 16
        %v1833 = vshrl.u32 %v1813, 16
        %v1835 = vshll.u32 %v1813, 16
        %v1837 = vrot.slane %v1835, 1
        %v1838 = vor.u32 %v1833, %v1837
        %v1840 = vshll.u32 %v1814, 16
        %v1842 = vrot.slane %v1840, 1
        %v1843 = vsel %vm1817, %v1838, %v1842
        %v1844 = vshrl.u32 %v1814, 16
        %v1847 = vsel %vm1190, %v1829, 0
        %v1850 = vsel %vm1190, %v1830, 0
        %v1853 = vsel %vm1190, %v1843, 0
        %v1856 = vsel %vm1190, %v1844, 0
        %1858 = vmatpush.bf16.xpose.msra.mxu0 0
        %1859 = vmatpush.bf16.xpose.msra.mxu0 0
        %1860 = vmatpush.bf16.xpose.msra.mxu0 0
        %1861 = vmatpush.bf16.xpose.msra.mxu0 0
        %1862 = vmatpush.bf16.xpose.msra.mxu0 0
        %1863 = vmatpush.bf16.xpose.msra.mxu0 0
        %1864 = vmatpush.bf16.xpose.msra.mxu0 %v1856
        %1865 = vmatpush.bf16.xpose.msra.mxu0 %v1853
        %1866 = vmatmul.bf16.gmra.mxu0 %v1847
        %v1867 = vpop.f32.mrf.mxu0
        %v1868 = vadd.f32 0.0, %v1867
        %v1869 = vpop.f32.mrf.mxu0
        %v1870 = vadd.f32 0.0, %v1869
        %1871 = vmatmul.bf16.gmra.mxu0 %v1850
        %v1872 = vpop.f32.mrf.mxu0
        %v1873 = vadd.f32 0.0, %v1872
        %v1874 = vpop.f32.mrf.mxu0
        %1875 = vdwg.mxu0
        %v1876 = vsel %vm1221, %v1868, -inf
        %1877 = vmax.xlane.f32.xlu0 %v1876
        %v1878 = vpop.xlane.xlu0 %1877
        %v1879 = vsel %vm1221, %v1870, -inf
        %1880 = vmax.xlane.f32.xlu0 %v1879
        %v1881 = vpop.xlane.xlu0 %1880
        %v1882 = vsel %vm1228, %v1873, -inf
        %1883 = vmax.xlane.f32.xlu0 %v1882
        %v1884 = vpop.xlane.xlu0 %1883
        %v1885 = vsub.f32 %v1868, %v1878
        %v1886 = vsub.f32 %v1870, %v1881
        %v1887 = vsub.f32 %v1873, %v1884
        %v1888 = vmul.f32 %v1885, 1.442695
        %v1889 = vpow.pop %v1888
        %v1890 = vmul.f32 %v1886, 1.442695
        %v1891 = vpow.pop %v1890
        %v1892 = vmul.f32 %v1887, 1.442695
        %v1893 = vpow.pop %v1892
        %v1894 = vsel %vm1221, %v1889, 0.0
        %1895 = vadd.xlane.f32.xlu0 %v1894
        %v1896 = vpop.xlane.xlu0 %1895
        %v1897 = vsel %vm1221, %v1891, 0.0
        %1898 = vadd.xlane.f32.xlu0 %v1897
        %v1899 = vpop.xlane.xlu0 %1898
        %v1900 = vsel %vm1228, %v1893, 0.0
        %1901 = vadd.xlane.f32.xlu0 %v1900
        %v1902 = vpop.xlane.xlu0 %1901
        %v1903 = vrcp.pop %v1896
        %v1904 = vmul.f32 %v1896, %v1903
        %v1905 = vsub.f32 1.0, %v1904
        %v1906 = vmul.f32 %v1903, %v1905
        %v1907 = vadd.f32 %v1903, %v1906
        %vm1908 = vweird.f32 %v1896
        %vm1909 = vweird.f32 %v1903
        %vm1910 = vmor %vm1908, %vm1909
        %v1911 = vsel %vm1910, %v1903, %v1907
        %v1912 = vand.u32 2147483647, %v1896
        %vm1913 = vcmp.eq.f32.partialorder %v1912, 8.507059e+37
        %v1914 = vand.u32 %v1896, 2147483648
        %v1915 = vor.u32 1.1754944e-38, %v1914
        %v1916 = vsel %vm1913, %v1915, %v1911
        %v1917 = vmul.f32 %v1889, %v1916
        %v1918 = vrcp.pop %v1899
        %v1919 = vmul.f32 %v1899, %v1918
        %v1920 = vsub.f32 1.0, %v1919
        %v1921 = vmul.f32 %v1918, %v1920
        %v1922 = vadd.f32 %v1918, %v1921
        %vm1923 = vweird.f32 %v1899
        %vm1924 = vweird.f32 %v1918
        %vm1925 = vmor %vm1923, %vm1924
        %v1926 = vsel %vm1925, %v1918, %v1922
        %v1927 = vand.u32 2147483647, %v1899
        %vm1928 = vcmp.eq.f32.partialorder %v1927, 8.507059e+37
        %v1929 = vand.u32 %v1899, 2147483648
        %v1930 = vor.u32 1.1754944e-38, %v1929
        %v1931 = vsel %vm1928, %v1930, %v1926
        %v1932 = vmul.f32 %v1891, %v1931
        %v1933 = vrcp.pop %v1902
        %v1934 = vmul.f32 %v1902, %v1933
        %v1935 = vsub.f32 1.0, %v1934
        %v1936 = vmul.f32 %v1933, %v1935
        %v1937 = vadd.f32 %v1933, %v1936
        %vm1938 = vweird.f32 %v1902
        %vm1939 = vweird.f32 %v1933
        %vm1940 = vmor %vm1938, %vm1939
        %v1941 = vsel %vm1940, %v1933, %v1937
        %v1942 = vand.u32 2147483647, %v1902
        %vm1943 = vcmp.eq.f32.partialorder %v1942, 8.507059e+37
        %v1944 = vand.u32 %v1902, 2147483648
        %v1945 = vor.u32 1.1754944e-38, %v1944
        %v1946 = vsel %vm1943, %v1945, %v1941
        %v1947 = vmul.f32 %v1893, %v1946
        %v1948 = vpack.c.bf16 %v1932, %v1917
        %v1949 = vpack.c.bf16 %v1947, %v1947
        %v1951 = vshrl.u32 %v1815, 16
        %v1953 = vshll.u32 %v1815, 16
        %v1955 = vrot.slane %v1953, 1
        %v1956 = vor.u32 %v1951, %v1955
        %v1958 = vshll.u32 %v1816, 16
        %v1960 = vrot.slane %v1958, 1
        %v1961 = vsel %vm1817, %v1956, %v1960
        %v1962 = vshrl.u32 %v1816, 16
        %v1966 = vsel %vm1221, %v1948, 0
        %v1969 = vsel %vm1221, %v1949, 0
        %v1972 = vand.u32 %v1962, %v1304
        %1974 = vmatpush.bf16.msra.mxu0 0
        %1975 = vmatpush.bf16.msra.mxu0 0
        %1976 = vmatpush.bf16.msra.mxu0 0
        %1977 = vmatpush.bf16.msra.mxu0 0
        %1978 = vmatpush.bf16.msra.mxu0 0
        %1979 = vmatpush.bf16.msra.mxu0 0
        %1980 = vmatpush.bf16.msra.mxu0 %v1972
        %1981 = vmatpush.bf16.msra.mxu0 %v1961
        %1982 = vmatmul.bf16.gmra.mxu0 %v1966
        %v1983 = vpop.f32.mrf.mxu0
        %v1984 = vadd.f32 0.0, %v1983
        %v1985 = vpop.f32.mrf.mxu0
        %v1986 = vadd.f32 0.0, %v1985
        %1987 = vmatmul.bf16.gmra.mxu0 %v1969
        %v1988 = vpop.f32.mrf.mxu0
        %v1989 = vadd.f32 0.0, %v1988
        %v1990 = vpop.f32.mrf.mxu0
        %1991 = vdwg.mxu0
        %1992 = vrot.lane.b32.xlu0 %v1829, 112
        %v1993 = vpop.permute.xlu0 %1992
        %1994 = vrot.lane.b32.xlu0 %v1830, 112
        %v1995 = vpop.permute.xlu0 %1994
        %1996 = vrot.lane.b32.xlu0 %v1843, 112
        %v1997 = vpop.permute.xlu0 %1996
        %1998 = vrot.lane.b32.xlu0 %v1844, 112
        %v1999 = vpop.permute.xlu0 %1998
        %v2001 = vsel %vm1190, %v1993, 0
        %v2004 = vsel %vm1190, %v1995, 0
        %v2007 = vsel %vm1190, %v1997, 0
        %v2010 = vsel %vm1190, %v1999, 0
        %2012 = vmatpush.bf16.xpose.msra.mxu0 0
        %2013 = vmatpush.bf16.xpose.msra.mxu0 0
        %2014 = vmatpush.bf16.xpose.msra.mxu0 0
        %2015 = vmatpush.bf16.xpose.msra.mxu0 0
        %2016 = vmatpush.bf16.xpose.msra.mxu0 0
        %2017 = vmatpush.bf16.xpose.msra.mxu0 0
        %2018 = vmatpush.bf16.xpose.msra.mxu0 %v2010
        %2019 = vmatpush.bf16.xpose.msra.mxu0 %v2007
        %2020 = vmatmul.bf16.gmra.mxu0 %v2001
        %v2021 = vpop.f32.mrf.mxu0
        %v2022 = vadd.f32 0.0, %v2021
        %v2023 = vpop.f32.mrf.mxu0
        %v2024 = vadd.f32 0.0, %v2023
        %2025 = vmatmul.bf16.gmra.mxu0 %v2004
        %v2026 = vpop.f32.mrf.mxu0
        %v2027 = vadd.f32 0.0, %v2026
        %v2028 = vpop.f32.mrf.mxu0
        %2029 = vdwg.mxu0
        %v2030 = vsel %vm1221, %v2022, -inf
        %2031 = vmax.xlane.f32.xlu0 %v2030
        %v2032 = vpop.xlane.xlu0 %2031
        %v2033 = vsel %vm1221, %v2024, -inf
        %2034 = vmax.xlane.f32.xlu0 %v2033
        %v2035 = vpop.xlane.xlu0 %2034
        %v2036 = vsel %vm1228, %v2027, -inf
        %2037 = vmax.xlane.f32.xlu0 %v2036
        %v2038 = vpop.xlane.xlu0 %2037
        %v2039 = vsub.f32 %v2022, %v2032
        %v2040 = vsub.f32 %v2024, %v2035
        %v2041 = vsub.f32 %v2027, %v2038
        %v2042 = vmul.f32 %v2039, 1.442695
        %v2043 = vpow.pop %v2042
        %v2044 = vmul.f32 %v2040, 1.442695
        %v2045 = vpow.pop %v2044
        %v2046 = vmul.f32 %v2041, 1.442695
        %v2047 = vpow.pop %v2046
        %v2048 = vsel %vm1221, %v2043, 0.0
        %2049 = vadd.xlane.f32.xlu0 %v2048
        %v2050 = vpop.xlane.xlu0 %2049
        %v2051 = vsel %vm1221, %v2045, 0.0
        %2052 = vadd.xlane.f32.xlu0 %v2051
        %v2053 = vpop.xlane.xlu0 %2052
        %v2054 = vsel %vm1228, %v2047, 0.0
        %2055 = vadd.xlane.f32.xlu0 %v2054
        %v2056 = vpop.xlane.xlu0 %2055
        %v2057 = vrcp.pop %v2050
        %v2058 = vmul.f32 %v2050, %v2057
        %v2059 = vsub.f32 1.0, %v2058
        %v2060 = vmul.f32 %v2057, %v2059
        %v2061 = vadd.f32 %v2057, %v2060
        %vm2062 = vweird.f32 %v2050
        %vm2063 = vweird.f32 %v2057
        %vm2064 = vmor %vm2062, %vm2063
        %v2065 = vsel %vm2064, %v2057, %v2061
        %v2066 = vand.u32 2147483647, %v2050
        %vm2067 = vcmp.eq.f32.partialorder %v2066, 8.507059e+37
        %v2068 = vand.u32 %v2050, 2147483648
        %v2069 = vor.u32 1.1754944e-38, %v2068
        %v2070 = vsel %vm2067, %v2069, %v2065
        %v2071 = vmul.f32 %v2043, %v2070
        %v2072 = vrcp.pop %v2053
        %v2073 = vmul.f32 %v2053, %v2072
        %v2074 = vsub.f32 1.0, %v2073
        %v2075 = vmul.f32 %v2072, %v2074
        %v2076 = vadd.f32 %v2072, %v2075
        %vm2077 = vweird.f32 %v2053
        %vm2078 = vweird.f32 %v2072
        %vm2079 = vmor %vm2077, %vm2078
        %v2080 = vsel %vm2079, %v2072, %v2076
        %v2081 = vand.u32 2147483647, %v2053
        %vm2082 = vcmp.eq.f32.partialorder %v2081, 8.507059e+37
        %v2083 = vand.u32 %v2053, 2147483648
        %v2084 = vor.u32 1.1754944e-38, %v2083
        %v2085 = vsel %vm2082, %v2084, %v2080
        %v2086 = vmul.f32 %v2045, %v2085
        %v2087 = vrcp.pop %v2056
        %v2088 = vmul.f32 %v2056, %v2087
        %v2089 = vsub.f32 1.0, %v2088
        %v2090 = vmul.f32 %v2087, %v2089
        %v2091 = vadd.f32 %v2087, %v2090
        %vm2092 = vweird.f32 %v2056
        %vm2093 = vweird.f32 %v2087
        %vm2094 = vmor %vm2092, %vm2093
        %v2095 = vsel %vm2094, %v2087, %v2091
        %v2096 = vand.u32 2147483647, %v2056
        %vm2097 = vcmp.eq.f32.partialorder %v2096, 8.507059e+37
        %v2098 = vand.u32 %v2056, 2147483648
        %v2099 = vor.u32 1.1754944e-38, %v2098
        %v2100 = vsel %vm2097, %v2099, %v2095
        %v2101 = vmul.f32 %v2047, %v2100
        %v2102 = vpack.c.bf16 %v2086, %v2071
        %v2103 = vpack.c.bf16 %v2101, %v2101
        %2104 = vrot.lane.b32.xlu0 %v1961, 112
        %v2105 = vpop.permute.xlu0 %2104
        %2106 = vrot.lane.b32.xlu0 %v1962, 112
        %v2107 = vpop.permute.xlu0 %2106
        %v2110 = vsel %vm1221, %v2102, 0
        %v2113 = vsel %vm1221, %v2103, 0
        %v2116 = vand.u32 %v2107, %v1304
        %2118 = vmatpush.bf16.msra.mxu0 0
        %2119 = vmatpush.bf16.msra.mxu0 0
        %2120 = vmatpush.bf16.msra.mxu0 0
        %2121 = vmatpush.bf16.msra.mxu0 0
        %2122 = vmatpush.bf16.msra.mxu0 0
        %2123 = vmatpush.bf16.msra.mxu0 0
        %2124 = vmatpush.bf16.msra.mxu0 %v2116
        %2125 = vmatpush.bf16.msra.mxu0 %v2105
        %2126 = vmatmul.bf16.gmra.mxu0 %v2110
        %v2127 = vpop.f32.mrf.mxu0
        %v2128 = vadd.f32 0.0, %v2127
        %v2129 = vpop.f32.mrf.mxu0
        %v2130 = vadd.f32 0.0, %v2129
        %2131 = vmatmul.bf16.gmra.mxu0 %v2113
        %v2132 = vpop.f32.mrf.mxu0
        %v2133 = vadd.f32 0.0, %v2132
        %v2134 = vpop.f32.mrf.mxu0
        %2135 = vdwg.mxu0
        %2136 = vrot.lane.b32.xlu0 %v1829, 96
        %v2137 = vpop.permute.xlu0 %2136
        %2138 = vrot.lane.b32.xlu0 %v1830, 96
        %v2139 = vpop.permute.xlu0 %2138
        %2140 = vrot.lane.b32.xlu0 %v1843, 96
        %v2141 = vpop.permute.xlu0 %2140
        %2142 = vrot.lane.b32.xlu0 %v1844, 96
        %v2143 = vpop.permute.xlu0 %2142
        %v2145 = vsel %vm1190, %v2137, 0
        %v2148 = vsel %vm1190, %v2139, 0
        %v2151 = vsel %vm1190, %v2141, 0
        %v2154 = vsel %vm1190, %v2143, 0
        %2156 = vmatpush.bf16.xpose.msra.mxu0 0
        %2157 = vmatpush.bf16.xpose.msra.mxu0 0
        %2158 = vmatpush.bf16.xpose.msra.mxu0 0
        %2159 = vmatpush.bf16.xpose.msra.mxu0 0
        %2160 = vmatpush.bf16.xpose.msra.mxu0 0
        %2161 = vmatpush.bf16.xpose.msra.mxu0 0
        %2162 = vmatpush.bf16.xpose.msra.mxu0 %v2154
        %2163 = vmatpush.bf16.xpose.msra.mxu0 %v2151
        %2164 = vmatmul.bf16.gmra.mxu0 %v2145
        %v2165 = vpop.f32.mrf.mxu0
        %v2166 = vadd.f32 0.0, %v2165
        %v2167 = vpop.f32.mrf.mxu0
        %v2168 = vadd.f32 0.0, %v2167
        %2169 = vmatmul.bf16.gmra.mxu0 %v2148
        %v2170 = vpop.f32.mrf.mxu0
        %v2171 = vadd.f32 0.0, %v2170
        %v2172 = vpop.f32.mrf.mxu0
        %2173 = vdwg.mxu0
        %v2174 = vsel %vm1221, %v2166, -inf
        %2175 = vmax.xlane.f32.xlu0 %v2174
        %v2176 = vpop.xlane.xlu0 %2175
        %v2177 = vsel %vm1221, %v2168, -inf
        %2178 = vmax.xlane.f32.xlu0 %v2177
        %v2179 = vpop.xlane.xlu0 %2178
        %v2180 = vsel %vm1228, %v2171, -inf
        %2181 = vmax.xlane.f32.xlu0 %v2180
        %v2182 = vpop.xlane.xlu0 %2181
        %v2183 = vsub.f32 %v2166, %v2176
        %v2184 = vsub.f32 %v2168, %v2179
        %v2185 = vsub.f32 %v2171, %v2182
        %v2186 = vmul.f32 %v2183, 1.442695
        %v2187 = vpow.pop %v2186
        %v2188 = vmul.f32 %v2184, 1.442695
        %v2189 = vpow.pop %v2188
        %v2190 = vmul.f32 %v2185, 1.442695
        %v2191 = vpow.pop %v2190
        %v2192 = vsel %vm1221, %v2187, 0.0
        %2193 = vadd.xlane.f32.xlu0 %v2192
        %v2194 = vpop.xlane.xlu0 %2193
        %v2195 = vsel %vm1221, %v2189, 0.0
        %2196 = vadd.xlane.f32.xlu0 %v2195
        %v2197 = vpop.xlane.xlu0 %2196
        %v2198 = vsel %vm1228, %v2191, 0.0
        %2199 = vadd.xlane.f32.xlu0 %v2198
        %v2200 = vpop.xlane.xlu0 %2199
        %v2201 = vrcp.pop %v2194
        %v2202 = vmul.f32 %v2194, %v2201
        %v2203 = vsub.f32 1.0, %v2202
        %v2204 = vmul.f32 %v2201, %v2203
        %v2205 = vadd.f32 %v2201, %v2204
        %vm2206 = vweird.f32 %v2194
        %vm2207 = vweird.f32 %v2201
        %vm2208 = vmor %vm2206, %vm2207
        %v2209 = vsel %vm2208, %v2201, %v2205
        %v2210 = vand.u32 2147483647, %v2194
        %vm2211 = vcmp.eq.f32.partialorder %v2210, 8.507059e+37
        %v2212 = vand.u32 %v2194, 2147483648
        %v2213 = vor.u32 1.1754944e-38, %v2212
        %v2214 = vsel %vm2211, %v2213, %v2209
        %v2215 = vmul.f32 %v2187, %v2214
        %v2216 = vrcp.pop %v2197
        %v2217 = vmul.f32 %v2197, %v2216
        %v2218 = vsub.f32 1.0, %v2217
        %v2219 = vmul.f32 %v2216, %v2218
        %v2220 = vadd.f32 %v2216, %v2219
        %vm2221 = vweird.f32 %v2197
        %vm2222 = vweird.f32 %v2216
        %vm2223 = vmor %vm2221, %vm2222
        %v2224 = vsel %vm2223, %v2216, %v2220
        %v2225 = vand.u32 2147483647, %v2197
        %vm2226 = vcmp.eq.f32.partialorder %v2225, 8.507059e+37
        %v2227 = vand.u32 %v2197, 2147483648
        %v2228 = vor.u32 1.1754944e-38, %v2227
        %v2229 = vsel %vm2226, %v2228, %v2224
        %v2230 = vmul.f32 %v2189, %v2229
        %v2231 = vrcp.pop %v2200
        %v2232 = vmul.f32 %v2200, %v2231
        %v2233 = vsub.f32 1.0, %v2232
        %v2234 = vmul.f32 %v2231, %v2233
        %v2235 = vadd.f32 %v2231, %v2234
        %vm2236 = vweird.f32 %v2200
        %vm2237 = vweird.f32 %v2231
        %vm2238 = vmor %vm2236, %vm2237
        %v2239 = vsel %vm2238, %v2231, %v2235
        %v2240 = vand.u32 2147483647, %v2200
        %vm2241 = vcmp.eq.f32.partialorder %v2240, 8.507059e+37
        %v2242 = vand.u32 %v2200, 2147483648
        %v2243 = vor.u32 1.1754944e-38, %v2242
        %v2244 = vsel %vm2241, %v2243, %v2239
        %v2245 = vmul.f32 %v2191, %v2244
        %v2246 = vpack.c.bf16 %v2230, %v2215
        %v2247 = vpack.c.bf16 %v2245, %v2245
        %2248 = vrot.lane.b32.xlu0 %v1961, 96
        %v2249 = vpop.permute.xlu0 %2248
        %2250 = vrot.lane.b32.xlu0 %v1962, 96
        %v2251 = vpop.permute.xlu0 %2250
        %v2254 = vsel %vm1221, %v2246, 0
        %v2257 = vsel %vm1221, %v2247, 0
        %v2260 = vand.u32 %v2251, %v1304
        %2262 = vmatpush.bf16.msra.mxu0 0
        %2263 = vmatpush.bf16.msra.mxu0 0
        %2264 = vmatpush.bf16.msra.mxu0 0
        %2265 = vmatpush.bf16.msra.mxu0 0
        %2266 = vmatpush.bf16.msra.mxu0 0
        %2267 = vmatpush.bf16.msra.mxu0 0
        %2268 = vmatpush.bf16.msra.mxu0 %v2260
        %2269 = vmatpush.bf16.msra.mxu0 %v2249
        %2270 = vmatmul.bf16.gmra.mxu0 %v2254
        %v2271 = vpop.f32.mrf.mxu0
        %v2272 = vadd.f32 0.0, %v2271
        %v2273 = vpop.f32.mrf.mxu0
        %v2274 = vadd.f32 0.0, %v2273
        %2275 = vmatmul.bf16.gmra.mxu0 %v2257
        %v2276 = vpop.f32.mrf.mxu0
        %v2277 = vadd.f32 0.0, %v2276
        %v2278 = vpop.f32.mrf.mxu0
        %2279 = vdwg.mxu0
        %2280 = vrot.lane.b32.xlu0 %v1829, 80
        %v2281 = vpop.permute.xlu0 %2280
        %2282 = vrot.lane.b32.xlu0 %v1830, 80
        %v2283 = vpop.permute.xlu0 %2282
        %2284 = vrot.lane.b32.xlu0 %v1843, 80
        %v2285 = vpop.permute.xlu0 %2284
        %2286 = vrot.lane.b32.xlu0 %v1844, 80
        %v2287 = vpop.permute.xlu0 %2286
        %v2289 = vsel %vm1190, %v2281, 0
        %v2292 = vsel %vm1190, %v2283, 0
        %v2295 = vsel %vm1190, %v2285, 0
        %v2298 = vsel %vm1190, %v2287, 0
        %2300 = vmatpush.bf16.xpose.msra.mxu0 0
        %2301 = vmatpush.bf16.xpose.msra.mxu0 0
        %2302 = vmatpush.bf16.xpose.msra.mxu0 0
        %2303 = vmatpush.bf16.xpose.msra.mxu0 0
        %2304 = vmatpush.bf16.xpose.msra.mxu0 0
        %2305 = vmatpush.bf16.xpose.msra.mxu0 0
        %2306 = vmatpush.bf16.xpose.msra.mxu0 %v2298
        %2307 = vmatpush.bf16.xpose.msra.mxu0 %v2295
        %2308 = vmatmul.bf16.gmra.mxu0 %v2289
        %v2309 = vpop.f32.mrf.mxu0
        %v2310 = vadd.f32 0.0, %v2309
        %v2311 = vpop.f32.mrf.mxu0
        %v2312 = vadd.f32 0.0, %v2311
        %2313 = vmatmul.bf16.gmra.mxu0 %v2292
        %v2314 = vpop.f32.mrf.mxu0
        %v2315 = vadd.f32 0.0, %v2314
        %v2316 = vpop.f32.mrf.mxu0
        %2317 = vdwg.mxu0
        %v2318 = vsel %vm1221, %v2310, -inf
        %2319 = vmax.xlane.f32.xlu0 %v2318
        %v2320 = vpop.xlane.xlu0 %2319
        %v2321 = vsel %vm1221, %v2312, -inf
        %2322 = vmax.xlane.f32.xlu0 %v2321
        %v2323 = vpop.xlane.xlu0 %2322
        %v2324 = vsel %vm1228, %v2315, -inf
        %2325 = vmax.xlane.f32.xlu0 %v2324
        %v2326 = vpop.xlane.xlu0 %2325
        %v2327 = vsub.f32 %v2310, %v2320
        %v2328 = vsub.f32 %v2312, %v2323
        %v2329 = vsub.f32 %v2315, %v2326
        %v2330 = vmul.f32 %v2327, 1.442695
        %v2331 = vpow.pop %v2330
        %v2332 = vmul.f32 %v2328, 1.442695
        %v2333 = vpow.pop %v2332
        %v2334 = vmul.f32 %v2329, 1.442695
        %v2335 = vpow.pop %v2334
        %v2336 = vsel %vm1221, %v2331, 0.0
        %2337 = vadd.xlane.f32.xlu0 %v2336
        %v2338 = vpop.xlane.xlu0 %2337
        %v2339 = vsel %vm1221, %v2333, 0.0
        %2340 = vadd.xlane.f32.xlu0 %v2339
        %v2341 = vpop.xlane.xlu0 %2340
        %v2342 = vsel %vm1228, %v2335, 0.0
        %2343 = vadd.xlane.f32.xlu0 %v2342
        %v2344 = vpop.xlane.xlu0 %2343
        %v2345 = vrcp.pop %v2338
        %v2346 = vmul.f32 %v2338, %v2345
        %v2347 = vsub.f32 1.0, %v2346
        %v2348 = vmul.f32 %v2345, %v2347
        %v2349 = vadd.f32 %v2345, %v2348
        %vm2350 = vweird.f32 %v2338
        %vm2351 = vweird.f32 %v2345
        %vm2352 = vmor %vm2350, %vm2351
        %v2353 = vsel %vm2352, %v2345, %v2349
        %v2354 = vand.u32 2147483647, %v2338
        %vm2355 = vcmp.eq.f32.partialorder %v2354, 8.507059e+37
        %v2356 = vand.u32 %v2338, 2147483648
        %v2357 = vor.u32 1.1754944e-38, %v2356
        %v2358 = vsel %vm2355, %v2357, %v2353
        %v2359 = vmul.f32 %v2331, %v2358
        %v2360 = vrcp.pop %v2341
        %v2361 = vmul.f32 %v2341, %v2360
        %v2362 = vsub.f32 1.0, %v2361
        %v2363 = vmul.f32 %v2360, %v2362
        %v2364 = vadd.f32 %v2360, %v2363
        %vm2365 = vweird.f32 %v2341
        %vm2366 = vweird.f32 %v2360
        %vm2367 = vmor %vm2365, %vm2366
        %v2368 = vsel %vm2367, %v2360, %v2364
        %v2369 = vand.u32 2147483647, %v2341
        %vm2370 = vcmp.eq.f32.partialorder %v2369, 8.507059e+37
        %v2371 = vand.u32 %v2341, 2147483648
        %v2372 = vor.u32 1.1754944e-38, %v2371
        %v2373 = vsel %vm2370, %v2372, %v2368
        %v2374 = vmul.f32 %v2333, %v2373
        %v2375 = vrcp.pop %v2344
        %v2376 = vmul.f32 %v2344, %v2375
        %v2377 = vsub.f32 1.0, %v2376
        %v2378 = vmul.f32 %v2375, %v2377
        %v2379 = vadd.f32 %v2375, %v2378
        %vm2380 = vweird.f32 %v2344
        %vm2381 = vweird.f32 %v2375
        %vm2382 = vmor %vm2380, %vm2381
        %v2383 = vsel %vm2382, %v2375, %v2379
        %v2384 = vand.u32 2147483647, %v2344
        %vm2385 = vcmp.eq.f32.partialorder %v2384, 8.507059e+37
        %v2386 = vand.u32 %v2344, 2147483648
        %v2387 = vor.u32 1.1754944e-38, %v2386
        %v2388 = vsel %vm2385, %v2387, %v2383
        %v2389 = vmul.f32 %v2335, %v2388
        %v2390 = vpack.c.bf16 %v2374, %v2359
        %v2391 = vpack.c.bf16 %v2389, %v2389
        %2392 = vrot.lane.b32.xlu0 %v1961, 80
        %v2393 = vpop.permute.xlu0 %2392
        %2394 = vrot.lane.b32.xlu0 %v1962, 80
        %v2395 = vpop.permute.xlu0 %2394
        %v2398 = vsel %vm1221, %v2390, 0
        %v2401 = vsel %vm1221, %v2391, 0
        %v2404 = vand.u32 %v2395, %v1304
        %2406 = vmatpush.bf16.msra.mxu0 0
        %2407 = vmatpush.bf16.msra.mxu0 0
        %2408 = vmatpush.bf16.msra.mxu0 0
        %2409 = vmatpush.bf16.msra.mxu0 0
        %2410 = vmatpush.bf16.msra.mxu0 0
        %2411 = vmatpush.bf16.msra.mxu0 0
        %2412 = vmatpush.bf16.msra.mxu0 %v2404
        %2413 = vmatpush.bf16.msra.mxu0 %v2393
        %2414 = vmatmul.bf16.gmra.mxu0 %v2398
        %v2415 = vpop.f32.mrf.mxu0
        %v2416 = vadd.f32 0.0, %v2415
        %v2417 = vpop.f32.mrf.mxu0
        %v2418 = vadd.f32 0.0, %v2417
        %2419 = vmatmul.bf16.gmra.mxu0 %v2401
        %v2420 = vpop.f32.mrf.mxu0
        %v2421 = vadd.f32 0.0, %v2420
        %v2422 = vpop.f32.mrf.mxu0
        %2423 = vdwg.mxu0
        %2427 = vrot.lane.b32.xlu0 %v2128, 16
        %v2428 = vpop.permute.xlu0 %2427
        %2429 = vrot.lane.b32.xlu0 %v2130, 16
        %v2430 = vpop.permute.xlu0 %2429
        %2431 = vrot.lane.b32.xlu0 %v2133, 16
        %v2432 = vpop.permute.xlu0 %2431
        %2439 = vrot.lane.b32.xlu0 %v2272, 32
        %v2440 = vpop.permute.xlu0 %2439
        %2441 = vrot.lane.b32.xlu0 %v2274, 32
        %v2442 = vpop.permute.xlu0 %2441
        %2443 = vrot.lane.b32.xlu0 %v2277, 32
        %v2444 = vpop.permute.xlu0 %2443
        %2451 = vrot.lane.b32.xlu0 %v2416, 48
        %v2452 = vpop.permute.xlu0 %2451
        %2453 = vrot.lane.b32.xlu0 %v2418, 48
        %v2454 = vpop.permute.xlu0 %2453
        %2455 = vrot.lane.b32.xlu0 %v2421, 48
        %v2456 = vpop.permute.xlu0 %2455
        %v2460 = vsel %vm1190, %v1984, %v2428
        %v2461 = vsel %vm1190, %v1986, %v2430
        %v2462 = vsel %vm1190, %v1989, %v2432
        %v2463 = vsel %vm1803, %v2460, %v2440
        %v2464 = vsel %vm1803, %v2461, %v2442
        %v2465 = vsel %vm1803, %v2462, %v2444
        %v2466 = vsel %vm1807, %v2463, %v2452
        %v2467 = vsel %vm1807, %v2464, %v2454
        %v2468 = vsel %vm1807, %v2465, %v2456
        %v2472 = vrot.slane %v2466, 7
        %v2473 = vrot.slane %v2467, 7
        %v2474 = vsel %vm992, %v2472, %v2473
        %v2475 = vrot.slane %v2468, 7
        %v2476 = vsel %vm992, %v2473, %v2475
        %v2480 = vsel %vm992, %v1810, %v2472
        %v2481 = vpack.c.bf16 %v1809, %v1808
        %v2482 = vpack.c.bf16 %v2474, %v2480
        %v2483 = vpack.c.bf16 %v2476, %v2476
        %v2484 = vld [vmem:[%s10] sm:$0xf]
        %v2485 = vld [vmem:[%s10 + $0x4] sm:$0xf]
        %v2486 = vld [vmem:[%s10 + $0x8] sm:$0xf]
        %v2487 = vld [vmem:[%s10 + $0xc] sm:$0xf]
        %v2488 = vld [vmem:[%s10 + $0x10] sm:$0xf]
        %v2489 = vld [vmem:[%s10 + $0x14] sm:$0xf]
        %v2490 = vld [vmem:[%s10 + $0x18] sm:$0xf]
        %v2491 = vld [vmem:[%s10 + $0x1c] sm:$0xf]
        %v2492 = vld [vmem:[%s11] sm:$0x1]
        %v2494 = vperm.slane %v2492, 0
        %v2504 = vunpack.c.l.b16 %v2484
        %v2505 = vunpack.c.l.b16 %v2485
        %v2506 = vunpack.c.l.b16 %v2486
        %v2507 = vunpack.c.l.b16 %v2487
        %v2508 = vunpack.c.l.b16 %v2488
        %v2509 = vunpack.c.l.b16 %v2489
        %v2510 = vunpack.c.l.b16 %v2490
        %v2511 = vunpack.c.l.b16 %v2491
        %v2512 = vpack.c.b16 %v2505, %v2504
        %v2513 = vpack.c.b16 %v2507, %v2506
        %v2514 = vpack.c.b16 %v2509, %v2508
        %v2515 = vpack.c.b16 %v2511, %v2510
        %v2521 = vsel %vm830, %v2481, 0
        %v2524 = vsel %vm830, %v2482, 0
        %v2527 = vsel %vm830, %v2483, 0
        %2529 = vmatpush.bf16.msra.mxu0 0
        %2530 = vmatpush.bf16.msra.mxu0 0
        %2531 = vmatpush.bf16.msra.mxu0 0
        %2532 = vmatpush.bf16.msra.mxu0 0
        %2533 = vmatpush.bf16.msra.mxu0 %v2515
        %2534 = vmatpush.bf16.msra.mxu0 %v2514
        %2535 = vmatpush.bf16.msra.mxu0 %v2513
        %2536 = vmatpush.bf16.msra.mxu0 %v2512
        %2537 = vmatmul.bf16.gmra.mxu0 %v2521
        %v2538 = vpop.f32.mrf.mxu0
        %v2539 = vadd.f32 %v2494, %v2538
        %v2540 = vpop.f32.mrf.mxu0
        %v2541 = vadd.f32 %v2494, %v2540
        %2542 = vmatmul.bf16.gmra.mxu0 %v2524
        %v2543 = vpop.f32.mrf.mxu0
        %v2544 = vadd.f32 %v2494, %v2543
        %v2545 = vpop.f32.mrf.mxu0
        %v2546 = vadd.f32 %v2494, %v2545
        %2547 = vmatmul.bf16.gmra.mxu0 %v2527
        %v2548 = vpop.f32.mrf.mxu0
        %v2549 = vadd.f32 %v2494, %v2548
        %v2550 = vpop.f32.mrf.mxu0
        %2551 = vdwg.mxu0
        %v2552 = vadd.f32 %v825, %v2539
        %v2553 = vadd.f32 %v826, %v2541
        %v2554 = vadd.f32 %v827, %v2544
        %vm2558 = vcmask 1046528
        %v2559 = vrot.slane %v2544, 1
        %v2560 = vrot.slane %v2546, 1
        %v2561 = vsel %vm2558, %v2559, %v2560
        %v2562 = vrot.slane %v2549, 1
        %v2563 = vsel %vm2558, %v2560, %v2562
        %v2567 = vadd.f32 %v819, %v2561
        %v2568 = vadd.f32 %v820, %v2563
        %v2569 = vadd.f32 %v821, %v2562
        %v2570 = vld [vmem:[%s5] sm:$0x1]
        %v2571 = vld [vmem:[%s6] sm:$0x1]
        %v2572 = vsel %vm830, %v2539, 0.0
        %2573 = vadd.xlane.f32.xlu0 %v2572
        %v2574 = vpop.xlane.xlu0 %2573
        %v2575 = vsel %vm830, %v2541, 0.0
        %2576 = vadd.xlane.f32.xlu0 %v2575
        %v2577 = vpop.xlane.xlu0 %2576
        %v2578 = vsel %vm837, %v2544, 0.0
        %2579 = vadd.xlane.f32.xlu0 %v2578
        %v2580 = vpop.xlane.xlu0 %2579
        %v2581 = vmul.f32 %v2574, %v847
        %v2582 = vmul.f32 %v2577, %v847
        %v2583 = vmul.f32 %v2580, %v847
        %v2584 = vsub.f32 %v2539, %v2581
        %v2585 = vsub.f32 %v2541, %v2582
        %v2586 = vsub.f32 %v2544, %v2583
        %v2587 = vmul.f32 %v2584, %v2584
        %v2588 = vmul.f32 %v2585, %v2585
        %v2589 = vmul.f32 %v2586, %v2586
        %v2590 = vsel %vm830, %v2587, 0.0
        %2591 = vadd.xlane.f32.xlu0 %v2590
        %v2592 = vpop.xlane.xlu0 %2591
        %v2593 = vsel %vm830, %v2588, 0.0
        %2594 = vadd.xlane.f32.xlu0 %v2593
        %v2595 = vpop.xlane.xlu0 %2594
        %v2596 = vsel %vm837, %v2589, 0.0
        %2597 = vadd.xlane.f32.xlu0 %v2596
        %v2598 = vpop.xlane.xlu0 %2597
        %v2599 = vmul.f32 %v2592, %v847
        %v2600 = vmul.f32 %v2595, %v847
        %v2601 = vmul.f32 %v2598, %v847
        %v2602 = vadd.f32 %v2599, 1e-05
        %v2603 = vadd.f32 %v2600, 1e-05
        %v2604 = vadd.f32 %v2601, 1e-05
        %v2605 = vrsqrt.pop %v2602
        %v2606 = vmul.f32 %v2605, %v2602
        %v2607 = vmul.f32 %v2606, %v2605
        %v2608 = vmul.f32 0.5, %v2607
        %v2609 = vsub.f32 1.5, %v2608
        %v2610 = vmul.f32 %v2605, %v2609
        %vm2611 = vweird.f32 %v2602
        %vm2612 = vweird.f32 %v2605
        %vm2613 = vmor %vm2611, %vm2612
        %v2614 = vsel %vm2613, %v2605, %v2610
        %v2615 = vrsqrt.pop %v2603
        %v2616 = vmul.f32 %v2615, %v2603
        %v2617 = vmul.f32 %v2616, %v2615
        %v2618 = vmul.f32 0.5, %v2617
        %v2619 = vsub.f32 1.5, %v2618
        %v2620 = vmul.f32 %v2615, %v2619
        %vm2621 = vweird.f32 %v2603
        %vm2622 = vweird.f32 %v2615
        %vm2623 = vmor %vm2621, %vm2622
        %v2624 = vsel %vm2623, %v2615, %v2620
        %v2625 = vrsqrt.pop %v2604
        %v2626 = vmul.f32 %v2625, %v2604
        %v2627 = vmul.f32 %v2626, %v2625
        %v2628 = vmul.f32 0.5, %v2627
        %v2629 = vsub.f32 1.5, %v2628
        %v2630 = vmul.f32 %v2625, %v2629
        %vm2631 = vweird.f32 %v2604
        %vm2632 = vweird.f32 %v2625
        %vm2633 = vmor %vm2631, %vm2632
        %v2634 = vsel %vm2633, %v2625, %v2630
        %v2635 = vmul.f32 %v2584, %v2614
        %v2636 = vmul.f32 %v2585, %v2624
        %v2637 = vmul.f32 %v2586, %v2634
        %v2639 = vperm.slane %v2570, 0
        %v2641 = vmul.f32 %v2635, %v2639
        %v2642 = vmul.f32 %v2636, %v2639
        %v2643 = vmul.f32 %v2637, %v2639
        %v2645 = vperm.slane %v2571, 0
        %v2647 = vadd.f32 %v2641, %v2645
        %v2648 = vadd.f32 %v2642, %v2645
        %v2649 = vadd.f32 %v2643, %v2645
        %vm2650 = vcmask 523265
        %v2651 = vsel %vm2650, %v2544, 0.0
        %2652 = vadd.xlane.f32.xlu0 %v2651
        %v2653 = vpop.xlane.xlu0 %2652
        %v2654 = vsel %vm830, %v2546, 0.0
        %2655 = vadd.xlane.f32.xlu0 %v2654
        %v2656 = vpop.xlane.xlu0 %2655
        %vm2657 = vcmask 517120
        %v2658 = vsel %vm2657, %v2549, 0.0
        %2659 = vadd.xlane.f32.xlu0 %v2658
        %v2660 = vpop.xlane.xlu0 %2659
        %v2661 = vmul.f32 %v2653, %v847
        %v2662 = vmul.f32 %v2656, %v847
        %v2663 = vmul.f32 %v2660, %v847
        %v2664 = vsub.f32 %v2544, %v2661
        %v2665 = vsub.f32 %v2546, %v2662
        %v2666 = vsub.f32 %v2549, %v2663
        %v2667 = vmul.f32 %v2664, %v2664
        %v2668 = vmul.f32 %v2665, %v2665
        %v2669 = vmul.f32 %v2666, %v2666
        %v2670 = vsel %vm2650, %v2667, 0.0
        %2671 = vadd.xlane.f32.xlu0 %v2670
        %v2672 = vpop.xlane.xlu0 %2671
        %v2673 = vsel %vm830, %v2668, 0.0
        %2674 = vadd.xlane.f32.xlu0 %v2673
        %v2675 = vpop.xlane.xlu0 %2674
        %v2676 = vsel %vm2657, %v2669, 0.0
        %2677 = vadd.xlane.f32.xlu0 %v2676
        %v2678 = vpop.xlane.xlu0 %2677
        %v2679 = vmul.f32 %v2672, %v847
        %v2680 = vmul.f32 %v2675, %v847
        %v2681 = vmul.f32 %v2678, %v847
        %v2682 = vadd.f32 %v2679, 1e-05
        %v2683 = vadd.f32 %v2680, 1e-05
        %v2684 = vadd.f32 %v2681, 1e-05
        %v2685 = vrsqrt.pop %v2682
        %v2686 = vmul.f32 %v2685, %v2682
        %v2687 = vmul.f32 %v2686, %v2685
        %v2688 = vmul.f32 0.5, %v2687
        %v2689 = vsub.f32 1.5, %v2688
        %v2690 = vmul.f32 %v2685, %v2689
        %vm2691 = vweird.f32 %v2682
        %vm2692 = vweird.f32 %v2685
        %vm2693 = vmor %vm2691, %vm2692
        %v2694 = vsel %vm2693, %v2685, %v2690
        %v2695 = vrsqrt.pop %v2683
        %v2696 = vmul.f32 %v2695, %v2683
        %v2697 = vmul.f32 %v2696, %v2695
        %v2698 = vmul.f32 0.5, %v2697
        %v2699 = vsub.f32 1.5, %v2698
        %v2700 = vmul.f32 %v2695, %v2699
        %vm2701 = vweird.f32 %v2683
        %vm2702 = vweird.f32 %v2695
        %vm2703 = vmor %vm2701, %vm2702
        %v2704 = vsel %vm2703, %v2695, %v2700
        %v2705 = vrsqrt.pop %v2684
        %v2706 = vmul.f32 %v2705, %v2684
        %v2707 = vmul.f32 %v2706, %v2705
        %v2708 = vmul.f32 0.5, %v2707
        %v2709 = vsub.f32 1.5, %v2708
        %v2710 = vmul.f32 %v2705, %v2709
        %vm2711 = vweird.f32 %v2684
        %vm2712 = vweird.f32 %v2705
        %vm2713 = vmor %vm2711, %vm2712
        %v2714 = vsel %vm2713, %v2705, %v2710
        %v2715 = vmul.f32 %v2664, %v2694
        %v2716 = vmul.f32 %v2665, %v2704
        %v2717 = vmul.f32 %v2666, %v2714
        %v2718 = vmul.f32 %v2715, %v2639
        %v2719 = vmul.f32 %v2716, %v2639
        %v2720 = vmul.f32 %v2717, %v2639
        %v2721 = vadd.f32 %v2718, %v2645
        %v2722 = vadd.f32 %v2719, %v2645
        %v2723 = vadd.f32 %v2720, %v2645
        %v2724 = vsel %vm992, %v2649, %v2721
        %v2725 = vpack.c.bf16 %v2648, %v2647
        %v2726 = vpack.c.bf16 %v2722, %v2724
        %v2727 = vpack.c.bf16 %v2723, %v2723
        %v2728 = vld [vmem:[%s17] sm:$0xff]
        %v2729 = vld [vmem:[%s17 + $0x8] sm:$0xff]
        %v2730 = vld [vmem:[%s17 + $0x10] sm:$0xff]
        %v2731 = vld [vmem:[%s17 + $0x18] sm:$0xff]
        %v2732 = vld [vmem:[%s17 + $0x20] sm:$0xff]
        %v2733 = vld [vmem:[%s17 + $0x28] sm:$0xff]
        %v2734 = vld [vmem:[%s17 + $0x30] sm:$0xff]
        %v2735 = vld [vmem:[%s17 + $0x38] sm:$0xff]
        %v2736 = vld [vmem:[%s18] sm:$0x3]
        %v2738 = vperm.slane %v2736, 0
        %v2739 = vperm.slane %v2736, 1
        %v2750 = vunpack.c.l.b16 %v2728
        %v2751 = vunpack.c.h.b16 %v2728
        %v2752 = vunpack.c.l.b16 %v2729
        %v2753 = vunpack.c.h.b16 %v2729
        %v2754 = vunpack.c.l.b16 %v2730
        %v2755 = vunpack.c.h.b16 %v2730
        %v2756 = vunpack.c.l.b16 %v2731
        %v2757 = vunpack.c.h.b16 %v2731
        %v2758 = vunpack.c.l.b16 %v2732
        %v2759 = vunpack.c.h.b16 %v2732
        %v2760 = vunpack.c.l.b16 %v2733
        %v2761 = vunpack.c.h.b16 %v2733
        %v2762 = vunpack.c.l.b16 %v2734
        %v2763 = vunpack.c.h.b16 %v2734
        %v2764 = vunpack.c.l.b16 %v2735
        %v2765 = vunpack.c.h.b16 %v2735
        %v2766 = vpack.c.b16 %v2752, %v2750
        %v2767 = vpack.c.b16 %v2753, %v2751
        %v2768 = vpack.c.b16 %v2756, %v2754
        %v2769 = vpack.c.b16 %v2757, %v2755
        %v2770 = vpack.c.b16 %v2760, %v2758
        %v2771 = vpack.c.b16 %v2761, %v2759
        %v2772 = vpack.c.b16 %v2764, %v2762
        %v2773 = vpack.c.b16 %v2765, %v2763
        %v2783 = vsel %vm830, %v2725, 0
        %v2786 = vsel %vm830, %v2726, 0
        %v2789 = vsel %vm830, %v2727, 0
        %2791 = vmatpush.bf16.msra.mxu0 0
        %2792 = vmatpush.bf16.msra.mxu0 0
        %2793 = vmatpush.bf16.msra.mxu0 0
        %2794 = vmatpush.bf16.msra.mxu0 0
        %2795 = vmatpush.bf16.msra.mxu0 %v2772
        %2796 = vmatpush.bf16.msra.mxu0 %v2770
        %2797 = vmatpush.bf16.msra.mxu0 %v2768
        %2798 = vmatpush.bf16.msra.mxu0 %v2766
        %2799 = vmatmul.bf16.gmra.mxu0 %v2783
        %v2800 = vpop.f32.mrf.mxu0
        %v2801 = vadd.f32 %v2738, %v2800
        %v2802 = vpop.f32.mrf.mxu0
        %v2803 = vadd.f32 %v2738, %v2802
        %2804 = vmatmul.bf16.gmra.mxu0 %v2786
        %v2805 = vpop.f32.mrf.mxu0
        %v2806 = vadd.f32 %v2738, %v2805
        %v2807 = vpop.f32.mrf.mxu0
        %v2808 = vadd.f32 %v2738, %v2807
        %2809 = vmatmul.bf16.gmra.mxu0 %v2789
        %v2810 = vpop.f32.mrf.mxu0
        %v2811 = vadd.f32 %v2738, %v2810
        %v2812 = vpop.f32.mrf.mxu0
        %2813 = vdwg.mxu0
        %2814 = vmatpush.bf16.msra.mxu0 0
        %2815 = vmatpush.bf16.msra.mxu0 0
        %2816 = vmatpush.bf16.msra.mxu0 0
        %2817 = vmatpush.bf16.msra.mxu0 0
        %2818 = vmatpush.bf16.msra.mxu0 %v2773
        %2819 = vmatpush.bf16.msra.mxu0 %v2771
        %2820 = vmatpush.bf16.msra.mxu0 %v2769
        %2821 = vmatpush.bf16.msra.mxu0 %v2767
        %2822 = vmatmul.bf16.gmra.mxu0 %v2783
        %v2823 = vpop.f32.mrf.mxu0
        %v2824 = vadd.f32 %v2739, %v2823
        %v2825 = vpop.f32.mrf.mxu0
        %v2826 = vadd.f32 %v2739, %v2825
        %2827 = vmatmul.bf16.gmra.mxu0 %v2786
        %v2828 = vpop.f32.mrf.mxu0
        %v2829 = vadd.f32 %v2739, %v2828
        %v2830 = vpop.f32.mrf.mxu0
        %v2831 = vadd.f32 %v2739, %v2830
        %2832 = vmatmul.bf16.gmra.mxu0 %v2789
        %v2833 = vpop.f32.mrf.mxu0
        %v2834 = vadd.f32 %v2739, %v2833
        %v2835 = vpop.f32.mrf.mxu0
        %2836 = vdwg.mxu0
        %v2837 = vmul.f32 %v2801, 0.5
        %v2838 = vmul.f32 %v2824, 0.5
        %v2839 = vmul.f32 %v2803, 0.5
        %v2840 = vmul.f32 %v2826, 0.5
        %v2841 = vmul.f32 %v2806, 0.5
        %v2842 = vmul.f32 %v2829, 0.5
        %v2843 = vmul.f32 %v2808, 0.5
        %v2844 = vmul.f32 %v2831, 0.5
        %v2845 = vmul.f32 %v2811, 0.5
        %v2846 = vmul.f32 %v2834, 0.5
        %v2847 = vmul.f32 %v2801, 0.044715
        %v2848 = vmul.f32 %v2824, 0.044715
        %v2849 = vmul.f32 %v2803, 0.044715
        %v2850 = vmul.f32 %v2826, 0.044715
        %v2851 = vmul.f32 %v2806, 0.044715
        %v2852 = vmul.f32 %v2829, 0.044715
        %v2853 = vmul.f32 %v2808, 0.044715
        %v2854 = vmul.f32 %v2831, 0.044715
        %v2855 = vmul.f32 %v2811, 0.044715
        %v2856 = vmul.f32 %v2834, 0.044715
        %v2857 = vmul.f32 %v2847, %v2801
        %v2858 = vmul.f32 %v2848, %v2824
        %v2859 = vmul.f32 %v2849, %v2803
        %v2860 = vmul.f32 %v2850, %v2826
        %v2861 = vmul.f32 %v2851, %v2806
        %v2862 = vmul.f32 %v2852, %v2829
        %v2863 = vmul.f32 %v2853, %v2808
        %v2864 = vmul.f32 %v2854, %v2831
        %v2865 = vmul.f32 %v2855, %v2811
        %v2866 = vmul.f32 %v2856, %v2834
        %v2867 = vmul.f32 %v2857, %v2801
        %v2868 = vmul.f32 %v2858, %v2824
        %v2869 = vmul.f32 %v2859, %v2803
        %v2870 = vmul.f32 %v2860, %v2826
        %v2871 = vmul.f32 %v2861, %v2806
        %v2872 = vmul.f32 %v2862, %v2829
        %v2873 = vmul.f32 %v2863, %v2808
        %v2874 = vmul.f32 %v2864, %v2831
        %v2875 = vmul.f32 %v2865, %v2811
        %v2876 = vmul.f32 %v2866, %v2834
        %v2877 = vadd.f32 %v2801, %v2867
        %v2878 = vadd.f32 %v2824, %v2868
        %v2879 = vadd.f32 %v2803, %v2869
        %v2880 = vadd.f32 %v2826, %v2870
        %v2881 = vadd.f32 %v2806, %v2871
        %v2882 = vadd.f32 %v2829, %v2872
        %v2883 = vadd.f32 %v2808, %v2873
        %v2884 = vadd.f32 %v2831, %v2874
        %v2885 = vadd.f32 %v2811, %v2875
        %v2886 = vadd.f32 %v2834, %v2876
        %v2887 = vmul.f32 %v2877, 0.7978846
        %v2888 = vmul.f32 %v2878, 0.7978846
        %v2889 = vmul.f32 %v2879, 0.7978846
        %v2890 = vmul.f32 %v2880, 0.7978846
        %v2891 = vmul.f32 %v2881, 0.7978846
        %v2892 = vmul.f32 %v2882, 0.7978846
        %v2893 = vmul.f32 %v2883, 0.7978846
        %v2894 = vmul.f32 %v2884, 0.7978846
        %v2895 = vmul.f32 %v2885, 0.7978846
        %v2896 = vmul.f32 %v2886, 0.7978846
        %v2897 = vtanh.pop %v2887
        %v2898 = vtanh.pop %v2888
        %v2899 = vtanh.pop %v2889
        %v2900 = vtanh.pop %v2890
        %v2901 = vtanh.pop %v2891
        %v2902 = vtanh.pop %v2892
        %v2903 = vtanh.pop %v2893
        %v2904 = vtanh.pop %v2894
        %v2905 = vtanh.pop %v2895
        %v2906 = vtanh.pop %v2896
        %v2907 = vadd.f32 %v2897, 1.0
        %v2908 = vadd.f32 %v2898, 1.0
        %v2909 = vadd.f32 %v2899, 1.0
        %v2910 = vadd.f32 %v2900, 1.0
        %v2911 = vadd.f32 %v2901, 1.0
        %v2912 = vadd.f32 %v2902, 1.0
        %v2913 = vadd.f32 %v2903, 1.0
        %v2914 = vadd.f32 %v2904, 1.0
        %v2915 = vadd.f32 %v2905, 1.0
        %v2916 = vadd.f32 %v2906, 1.0
        %v2917 = vmul.f32 %v2837, %v2907
        %v2918 = vmul.f32 %v2838, %v2908
        %v2919 = vmul.f32 %v2839, %v2909
        %v2920 = vmul.f32 %v2840, %v2910
        %v2921 = vmul.f32 %v2841, %v2911
        %v2922 = vmul.f32 %v2842, %v2912
        %v2923 = vmul.f32 %v2843, %v2913
        %v2924 = vmul.f32 %v2844, %v2914
        %v2925 = vmul.f32 %v2845, %v2915
        %v2926 = vmul.f32 %v2846, %v2916
        %v2927 = vpack.c.bf16 %v2919, %v2917
        %v2928 = vpack.c.bf16 %v2920, %v2918
        %v2929 = vpack.c.bf16 %v2923, %v2921
        %v2930 = vpack.c.bf16 %v2924, %v2922
        %v2931 = vpack.c.bf16 %v2925, %v2925
        %v2932 = vpack.c.bf16 %v2926, %v2926
        %v2933 = vld [vmem:[%s19] sm:$0xf]
        %v2934 = vld [vmem:[%s19 + $0x4] sm:$0xf]
        %v2935 = vld [vmem:[%s19 + $0x8] sm:$0xf]
        %v2936 = vld [vmem:[%s19 + $0xc] sm:$0xf]
        %v2937 = vld [vmem:[%s19 + $0x10] sm:$0xf]
        %v2938 = vld [vmem:[%s19 + $0x14] sm:$0xf]
        %v2939 = vld [vmem:[%s19 + $0x18] sm:$0xf]
        %v2940 = vld [vmem:[%s19 + $0x1c] sm:$0xf]
        %v2941 = vld [vmem:[%s19 + $0x20] sm:$0xf]
        %v2942 = vld [vmem:[%s19 + $0x24] sm:$0xf]
        %v2943 = vld [vmem:[%s19 + $0x28] sm:$0xf]
        %v2944 = vld [vmem:[%s19 + $0x2c] sm:$0xf]
        %v2945 = vld [vmem:[%s19 + $0x30] sm:$0xf]
        %v2946 = vld [vmem:[%s19 + $0x34] sm:$0xf]
        %v2947 = vld [vmem:[%s19 + $0x38] sm:$0xf]
        %v2948 = vld [vmem:[%s19 + $0x3c] sm:$0xf]
        %v2949 = vld [vmem:[%s19 + $0x40] sm:$0xf]
        %v2950 = vld [vmem:[%s19 + $0x44] sm:$0xf]
        %v2951 = vld [vmem:[%s19 + $0x48] sm:$0xf]
        %v2952 = vld [vmem:[%s19 + $0x4c] sm:$0xf]
        %v2953 = vld [vmem:[%s19 + $0x50] sm:$0xf]
        %v2954 = vld [vmem:[%s19 + $0x54] sm:$0xf]
        %v2955 = vld [vmem:[%s19 + $0x58] sm:$0xf]
        %v2956 = vld [vmem:[%s19 + $0x5c] sm:$0xf]
        %v2957 = vld [vmem:[%s19 + $0x60] sm:$0xf]
        %v2958 = vld [vmem:[%s19 + $0x64] sm:$0xf]
        %v2959 = vld [vmem:[%s19 + $0x68] sm:$0xf]
        %v2960 = vld [vmem:[%s19 + $0x6c] sm:$0xf]
        %v2961 = vld [vmem:[%s19 + $0x70] sm:$0xf]
        %v2962 = vld [vmem:[%s19 + $0x74] sm:$0xf]
        %v2963 = vld [vmem:[%s19 + $0x78] sm:$0xf]
        %v2964 = vld [vmem:[%s19 + $0x7c] sm:$0xf]
        %v2965 = vld [vmem:[%s20] sm:$0x1]
        %v2967 = vperm.slane %v2965, 0
        %v3001 = vunpack.c.l.b16 %v2933
        %v3002 = vunpack.c.l.b16 %v2934
        %v3003 = vunpack.c.l.b16 %v2935
        %v3004 = vunpack.c.l.b16 %v2936
        %v3005 = vunpack.c.l.b16 %v2937
        %v3006 = vunpack.c.l.b16 %v2938
        %v3007 = vunpack.c.l.b16 %v2939
        %v3008 = vunpack.c.l.b16 %v2940
        %v3009 = vunpack.c.l.b16 %v2941
        %v3010 = vunpack.c.l.b16 %v2942
        %v3011 = vunpack.c.l.b16 %v2943
        %v3012 = vunpack.c.l.b16 %v2944
        %v3013 = vunpack.c.l.b16 %v2945
        %v3014 = vunpack.c.l.b16 %v2946
        %v3015 = vunpack.c.l.b16 %v2947
        %v3016 = vunpack.c.l.b16 %v2948
        %v3017 = vunpack.c.l.b16 %v2949
        %v3018 = vunpack.c.l.b16 %v2950
        %v3019 = vunpack.c.l.b16 %v2951
        %v3020 = vunpack.c.l.b16 %v2952
        %v3021 = vunpack.c.l.b16 %v2953
        %v3022 = vunpack.c.l.b16 %v2954
        %v3023 = vunpack.c.l.b16 %v2955
        %v3024 = vunpack.c.l.b16 %v2956
        %v3025 = vunpack.c.l.b16 %v2957
        %v3026 = vunpack.c.l.b16 %v2958
        %v3027 = vunpack.c.l.b16 %v2959
        %v3028 = vunpack.c.l.b16 %v2960
        %v3029 = vunpack.c.l.b16 %v2961
        %v3030 = vunpack.c.l.b16 %v2962
        %v3031 = vunpack.c.l.b16 %v2963
        %v3032 = vunpack.c.l.b16 %v2964
        %v3033 = vpack.c.b16 %v3002, %v3001
        %v3034 = vpack.c.b16 %v3004, %v3003
        %v3035 = vpack.c.b16 %v3006, %v3005
        %v3036 = vpack.c.b16 %v3008, %v3007
        %v3037 = vpack.c.b16 %v3010, %v3009
        %v3038 = vpack.c.b16 %v3012, %v3011
        %v3039 = vpack.c.b16 %v3014, %v3013
        %v3040 = vpack.c.b16 %v3016, %v3015
        %v3041 = vpack.c.b16 %v3018, %v3017
        %v3042 = vpack.c.b16 %v3020, %v3019
        %v3043 = vpack.c.b16 %v3022, %v3021
        %v3044 = vpack.c.b16 %v3024, %v3023
        %v3045 = vpack.c.b16 %v3026, %v3025
        %v3046 = vpack.c.b16 %v3028, %v3027
        %v3047 = vpack.c.b16 %v3030, %v3029
        %v3048 = vpack.c.b16 %v3032, %v3031
        %3065 = vmatpush.bf16.msra.mxu0 %v3040
        %3066 = vmatpush.bf16.msra.mxu0 %v3039
        %3067 = vmatpush.bf16.msra.mxu0 %v3038
        %3068 = vmatpush.bf16.msra.mxu0 %v3037
        %3069 = vmatpush.bf16.msra.mxu0 %v3036
        %3070 = vmatpush.bf16.msra.mxu0 %v3035
        %3071 = vmatpush.bf16.msra.mxu0 %v3034
        %3072 = vmatpush.bf16.msra.mxu0 %v3033
        %3073 = vmatmul.bf16.gmra.mxu0 %v2927
        %v3074 = vpop.f32.mrf.mxu0
        %v3075 = vadd.f32 %v2967, %v3074
        %v3076 = vpop.f32.mrf.mxu0
        %v3077 = vadd.f32 %v2967, %v3076
        %3078 = vmatmul.bf16.gmra.mxu0 %v2929
        %v3079 = vpop.f32.mrf.mxu0
        %v3080 = vadd.f32 %v2967, %v3079
        %v3081 = vpop.f32.mrf.mxu0
        %v3082 = vadd.f32 %v2967, %v3081
        %3083 = vmatmul.bf16.gmra.mxu0 %v2931
        %v3084 = vpop.f32.mrf.mxu0
        %v3085 = vadd.f32 %v2967, %v3084
        %v3086 = vpop.f32.mrf.mxu0
        %3087 = vdwg.mxu0
        %3088 = vmatpush.bf16.msra.mxu0 %v3048
        %3089 = vmatpush.bf16.msra.mxu0 %v3047
        %3090 = vmatpush.bf16.msra.mxu0 %v3046
        %3091 = vmatpush.bf16.msra.mxu0 %v3045
        %3092 = vmatpush.bf16.msra.mxu0 %v3044
        %3093 = vmatpush.bf16.msra.mxu0 %v3043
        %3094 = vmatpush.bf16.msra.mxu0 %v3042
        %3095 = vmatpush.bf16.msra.mxu0 %v3041
        %3096 = vmatmul.bf16.gmra.mxu0 %v2928
        %v3097 = vpop.f32.mrf.mxu0
        %v3098 = vadd.f32 %v3075, %v3097
        %v3099 = vpop.f32.mrf.mxu0
        %v3100 = vadd.f32 %v3077, %v3099
        %3101 = vmatmul.bf16.gmra.mxu0 %v2930
        %v3102 = vpop.f32.mrf.mxu0
        %v3103 = vadd.f32 %v3080, %v3102
        %v3104 = vpop.f32.mrf.mxu0
        %v3105 = vadd.f32 %v3082, %v3104
        %3106 = vmatmul.bf16.gmra.mxu0 %v2932
        %v3107 = vpop.f32.mrf.mxu0
        %v3108 = vadd.f32 %v3085, %v3107
        %v3109 = vpop.f32.mrf.mxu0
        %3110 = vdwg.mxu0
        %v3111 = vadd.f32 %v2552, %v3098
        %v3112 = vadd.f32 %v2553, %v3100
        %v3113 = vadd.f32 %v2554, %v3103
        %v3117 = vrot.slane %v3103, 1
        %v3118 = vrot.slane %v3105, 1
        %v3119 = vsel %vm2558, %v3117, %v3118
        %v3120 = vrot.slane %v3108, 1
        %v3121 = vsel %vm2558, %v3118, %v3120
        %v3125 = vadd.f32 %v2567, %v3119
        %v3126 = vadd.f32 %v2568, %v3121
        %v3127 = vadd.f32 %v2569, %v3120
        %v3128 = vsel %vm830, %v3111, 0.0
        %3129 = vadd.xlane.f32.xlu0 %v3128
        %v3130 = vpop.xlane.xlu0 %3129
        %v3131 = vsel %vm830, %v3112, 0.0
        %3132 = vadd.xlane.f32.xlu0 %v3131
        %v3133 = vpop.xlane.xlu0 %3132
        %v3134 = vsel %vm837, %v3113, 0.0
        %3135 = vadd.xlane.f32.xlu0 %v3134
        %v3136 = vpop.xlane.xlu0 %3135
        %v3137 = vmul.f32 %v3130, %v847
        %v3138 = vmul.f32 %v3133, %v847
        %v3139 = vmul.f32 %v3136, %v847
        %v3140 = vsub.f32 %v3111, %v3137
        %v3141 = vsub.f32 %v3112, %v3138
        %v3142 = vsub.f32 %v3113, %v3139
        %v3143 = vmul.f32 %v3140, %v3140
        %v3144 = vmul.f32 %v3141, %v3141
        %v3145 = vmul.f32 %v3142, %v3142
        %v3146 = vsel %vm830, %v3143, 0.0
        %3147 = vadd.xlane.f32.xlu0 %v3146
        %v3148 = vpop.xlane.xlu0 %3147
        %v3149 = vsel %vm830, %v3144, 0.0
        %3150 = vadd.xlane.f32.xlu0 %v3149
        %v3151 = vpop.xlane.xlu0 %3150
        %v3152 = vsel %vm837, %v3145, 0.0
        %3153 = vadd.xlane.f32.xlu0 %v3152
        %v3154 = vpop.xlane.xlu0 %3153
        %v3155 = vmul.f32 %v3148, %v847
        %v3156 = vmul.f32 %v3151, %v847
        %v3157 = vmul.f32 %v3154, %v847
        %v3158 = vadd.f32 %v3155, 1e-05
        %v3159 = vadd.f32 %v3156, 1e-05
        %v3160 = vadd.f32 %v3157, 1e-05
        %v3161 = vrsqrt.pop %v3158
        %v3162 = vmul.f32 %v3161, %v3158
        %v3163 = vmul.f32 %v3162, %v3161
        %v3164 = vmul.f32 0.5, %v3163
        %v3165 = vsub.f32 1.5, %v3164
        %v3166 = vmul.f32 %v3161, %v3165
        %vm3167 = vweird.f32 %v3158
        %vm3168 = vweird.f32 %v3161
        %vm3169 = vmor %vm3167, %vm3168
        %v3170 = vsel %vm3169, %v3161, %v3166
        %v3171 = vrsqrt.pop %v3159
        %v3172 = vmul.f32 %v3171, %v3159
        %v3173 = vmul.f32 %v3172, %v3171
        %v3174 = vmul.f32 0.5, %v3173
        %v3175 = vsub.f32 1.5, %v3174
        %v3176 = vmul.f32 %v3171, %v3175
        %vm3177 = vweird.f32 %v3159
        %vm3178 = vweird.f32 %v3171
        %vm3179 = vmor %vm3177, %vm3178
        %v3180 = vsel %vm3179, %v3171, %v3176
        %v3181 = vrsqrt.pop %v3160
        %v3182 = vmul.f32 %v3181, %v3160
        %v3183 = vmul.f32 %v3182, %v3181
        %v3184 = vmul.f32 0.5, %v3183
        %v3185 = vsub.f32 1.5, %v3184
        %v3186 = vmul.f32 %v3181, %v3185
        %vm3187 = vweird.f32 %v3160
        %vm3188 = vweird.f32 %v3181
        %vm3189 = vmor %vm3187, %vm3188
        %v3190 = vsel %vm3189, %v3181, %v3186
        %v3191 = vmul.f32 %v3140, %v3170
        %v3192 = vmul.f32 %v3141, %v3180
        %v3193 = vmul.f32 %v3142, %v3190
        %v3194 = vmul.f32 %v3191, %v906
        %v3195 = vmul.f32 %v3192, %v906
        %v3196 = vmul.f32 %v3193, %v906
        %v3197 = vadd.f32 %v3194, %v912
        %v3198 = vadd.f32 %v3195, %v912
        %v3199 = vadd.f32 %v3196, %v912
        %v3200 = vpack.c.bf16 %v3198, %v3197
        %v3201 = vpack.c.bf16 %v3199, %v3199
        %v3202 = vsel %vm830, %v3125, 0.0
        %3203 = vadd.xlane.f32.xlu0 %v3202
        %v3204 = vpop.xlane.xlu0 %3203
        %v3205 = vsel %vm830, %v3126, 0.0
        %3206 = vadd.xlane.f32.xlu0 %v3205
        %v3207 = vpop.xlane.xlu0 %3206
        %v3208 = vsel %vm837, %v3127, 0.0
        %3209 = vadd.xlane.f32.xlu0 %v3208
        %v3210 = vpop.xlane.xlu0 %3209
        %v3211 = vmul.f32 %v3204, %v847
        %v3212 = vmul.f32 %v3207, %v847
        %v3213 = vmul.f32 %v3210, %v847
        %v3214 = vsub.f32 %v3125, %v3211
        %v3215 = vsub.f32 %v3126, %v3212
        %v3216 = vsub.f32 %v3127, %v3213
        %v3217 = vmul.f32 %v3214, %v3214
        %v3218 = vmul.f32 %v3215, %v3215
        %v3219 = vmul.f32 %v3216, %v3216
        %v3220 = vsel %vm830, %v3217, 0.0
        %3221 = vadd.xlane.f32.xlu0 %v3220
        %v3222 = vpop.xlane.xlu0 %3221
        %v3223 = vsel %vm830, %v3218, 0.0
        %3224 = vadd.xlane.f32.xlu0 %v3223
        %v3225 = vpop.xlane.xlu0 %3224
        %v3226 = vsel %vm837, %v3219, 0.0
        %3227 = vadd.xlane.f32.xlu0 %v3226
        %v3228 = vpop.xlane.xlu0 %3227
        %v3229 = vmul.f32 %v3222, %v847
        %v3230 = vmul.f32 %v3225, %v847
        %v3231 = vmul.f32 %v3228, %v847
        %v3232 = vadd.f32 %v3229, 1e-05
        %v3233 = vadd.f32 %v3230, 1e-05
        %v3234 = vadd.f32 %v3231, 1e-05
        %v3235 = vrsqrt.pop %v3232
        %v3236 = vmul.f32 %v3235, %v3232
        %v3237 = vmul.f32 %v3236, %v3235
        %v3238 = vmul.f32 0.5, %v3237
        %v3239 = vsub.f32 1.5, %v3238
        %v3240 = vmul.f32 %v3235, %v3239
        %vm3241 = vweird.f32 %v3232
        %vm3242 = vweird.f32 %v3235
        %vm3243 = vmor %vm3241, %vm3242
        %v3244 = vsel %vm3243, %v3235, %v3240
        %v3245 = vrsqrt.pop %v3233
        %v3246 = vmul.f32 %v3245, %v3233
        %v3247 = vmul.f32 %v3246, %v3245
        %v3248 = vmul.f32 0.5, %v3247
        %v3249 = vsub.f32 1.5, %v3248
        %v3250 = vmul.f32 %v3245, %v3249
        %vm3251 = vweird.f32 %v3233
        %vm3252 = vweird.f32 %v3245
        %vm3253 = vmor %vm3251, %vm3252
        %v3254 = vsel %vm3253, %v3245, %v3250
        %v3255 = vrsqrt.pop %v3234
        %v3256 = vmul.f32 %v3255, %v3234
        %v3257 = vmul.f32 %v3256, %v3255
        %v3258 = vmul.f32 0.5, %v3257
        %v3259 = vsub.f32 1.5, %v3258
        %v3260 = vmul.f32 %v3255, %v3259
        %vm3261 = vweird.f32 %v3234
        %vm3262 = vweird.f32 %v3255
        %vm3263 = vmor %vm3261, %vm3262
        %v3264 = vsel %vm3263, %v3255, %v3260
        %v3265 = vmul.f32 %v3214, %v3244
        %v3266 = vmul.f32 %v3215, %v3254
        %v3267 = vmul.f32 %v3216, %v3264
        %v3268 = vmul.f32 %v3265, %v906
        %v3269 = vmul.f32 %v3266, %v906
        %v3270 = vmul.f32 %v3267, %v906
        %v3271 = vadd.f32 %v3268, %v912
        %v3272 = vadd.f32 %v3269, %v912
        %v3273 = vadd.f32 %v3270, %v912
        %v3274 = vpack.c.bf16 %v3272, %v3271
        %v3275 = vpack.c.bf16 %v3273, %v3273
        %v3276 = vld [vmem:[%s12] sm:$0xf]
        %v3277 = vld [vmem:[%s12 + $0x4] sm:$0xf]
        %v3278 = vld [vmem:[%s12 + $0x8] sm:$0xf]
        %v3279 = vld [vmem:[%s12 + $0xc] sm:$0xf]
        %v3280 = vld [vmem:[%s12 + $0x10] sm:$0xf]
        %v3281 = vld [vmem:[%s12 + $0x14] sm:$0xf]
        %v3282 = vld [vmem:[%s12 + $0x18] sm:$0xf]
        %v3283 = vld [vmem:[%s12 + $0x1c] sm:$0xf]
        %v3292 = vunpack.c.l.b16 %v3276
        %v3293 = vunpack.c.l.b16 %v3277
        %v3294 = vunpack.c.l.b16 %v3278
        %v3295 = vunpack.c.l.b16 %v3279
        %v3296 = vunpack.c.l.b16 %v3280
        %v3297 = vunpack.c.l.b16 %v3281
        %v3298 = vunpack.c.l.b16 %v3282
        %v3299 = vunpack.c.l.b16 %v3283
        %v3300 = vpack.c.b16 %v3293, %v3292
        %v3301 = vpack.c.b16 %v3295, %v3294
        %v3302 = vpack.c.b16 %v3297, %v3296
        %v3303 = vpack.c.b16 %v3299, %v3298
        %v3309 = vsel %vm830, %v3200, 0
        %v3312 = vsel %vm830, %v3201, 0
        %3314 = vmatpush.bf16.msra.mxu0 0
        %3315 = vmatpush.bf16.msra.mxu0 0
        %3316 = vmatpush.bf16.msra.mxu0 0
        %3317 = vmatpush.bf16.msra.mxu0 0
        %3318 = vmatpush.bf16.msra.mxu0 %v3303
        %3319 = vmatpush.bf16.msra.mxu0 %v3302
        %3320 = vmatpush.bf16.msra.mxu0 %v3301
        %3321 = vmatpush.bf16.msra.mxu0 %v3300
        %3322 = vmatmul.bf16.gmra.mxu0 %v3309
        %v3323 = vpop.f32.mrf.mxu0
        %v3324 = vadd.f32 0.0, %v3323
        %v3325 = vpop.f32.mrf.mxu0
        %v3326 = vadd.f32 0.0, %v3325
        %3327 = vmatmul.bf16.gmra.mxu0 %v3312
        %v3328 = vpop.f32.mrf.mxu0
        %v3329 = vadd.f32 0.0, %v3328
        %v3330 = vpop.f32.mrf.mxu0
        %3331 = vdwg.mxu0
        %v3332 = vmul.f32 %v3324, 0.25
        %v3333 = vmul.f32 %v3326, 0.25
        %v3334 = vmul.f32 %v3329, 0.25
        %v3335 = vld [vmem:[%s13] sm:$0xf]
        %v3336 = vld [vmem:[%s13 + $0x4] sm:$0xf]
        %v3337 = vld [vmem:[%s13 + $0x8] sm:$0xf]
        %v3338 = vld [vmem:[%s13 + $0xc] sm:$0xf]
        %v3339 = vld [vmem:[%s13 + $0x10] sm:$0xf]
        %v3340 = vld [vmem:[%s13 + $0x14] sm:$0xf]
        %v3341 = vld [vmem:[%s13 + $0x18] sm:$0xf]
        %v3342 = vld [vmem:[%s13 + $0x1c] sm:$0xf]
        %v3351 = vunpack.c.l.b16 %v3335
        %v3352 = vunpack.c.l.b16 %v3336
        %v3353 = vunpack.c.l.b16 %v3337
        %v3354 = vunpack.c.l.b16 %v3338
        %v3355 = vunpack.c.l.b16 %v3339
        %v3356 = vunpack.c.l.b16 %v3340
        %v3357 = vunpack.c.l.b16 %v3341
        %v3358 = vunpack.c.l.b16 %v3342
        %v3359 = vpack.c.b16 %v3352, %v3351
        %v3360 = vpack.c.b16 %v3354, %v3353
        %v3361 = vpack.c.b16 %v3356, %v3355
        %v3362 = vpack.c.b16 %v3358, %v3357
        %v3368 = vsel %vm830, %v3274, 0
        %v3371 = vsel %vm830, %v3275, 0
        %3373 = vmatpush.bf16.msra.mxu0 0
        %3374 = vmatpush.bf16.msra.mxu0 0
        %3375 = vmatpush.bf16.msra.mxu0 0
        %3376 = vmatpush.bf16.msra.mxu0 0
        %3377 = vmatpush.bf16.msra.mxu0 %v3362
        %3378 = vmatpush.bf16.msra.mxu0 %v3361
        %3379 = vmatpush.bf16.msra.mxu0 %v3360
        %3380 = vmatpush.bf16.msra.mxu0 %v3359
        %3381 = vmatmul.bf16.gmra.mxu0 %v3368
        %v3382 = vpop.f32.mrf.mxu0
        %v3383 = vadd.f32 0.0, %v3382
        %v3384 = vpop.f32.mrf.mxu0
        %v3385 = vadd.f32 0.0, %v3384
        %3386 = vmatmul.bf16.gmra.mxu0 %v3371
        %v3387 = vpop.f32.mrf.mxu0
        %v3388 = vadd.f32 0.0, %v3387
        %v3389 = vpop.f32.mrf.mxu0
        %3390 = vdwg.mxu0
        %v3391 = vld [vmem:[#allocation2] sm:$0xf]
        %v3392 = vld [vmem:[#allocation2 + $0x4] sm:$0xf]
        %v3393 = vld [vmem:[#allocation2 + $0x8] sm:$0xf]
        %v3394 = vld [vmem:[#allocation2 + $0xc] sm:$0xf]
        %v3395 = vld [vmem:[#allocation2 + $0x10] sm:$0xf]
        %v3396 = vld [vmem:[#allocation2 + $0x14] sm:$0xf]
        %v3397 = vld [vmem:[#allocation2 + $0x18] sm:$0xf]
        %v3398 = vld [vmem:[#allocation2 + $0x1c] sm:$0xf]
        %v3407 = vunpack.c.l.b16 %v3391
        %v3408 = vunpack.c.l.b16 %v3392
        %v3409 = vunpack.c.l.b16 %v3393
        %v3410 = vunpack.c.l.b16 %v3394
        %v3411 = vunpack.c.l.b16 %v3395
        %v3412 = vunpack.c.l.b16 %v3396
        %v3413 = vunpack.c.l.b16 %v3397
        %v3414 = vunpack.c.l.b16 %v3398
        %v3415 = vpack.c.b16 %v3408, %v3407
        %v3416 = vpack.c.b16 %v3410, %v3409
        %v3417 = vpack.c.b16 %v3412, %v3411
        %v3418 = vpack.c.b16 %v3414, %v3413
        %3423 = vmatpush.bf16.msra.mxu0 0
        %3424 = vmatpush.bf16.msra.mxu0 0
        %3425 = vmatpush.bf16.msra.mxu0 0
        %3426 = vmatpush.bf16.msra.mxu0 0
        %3427 = vmatpush.bf16.msra.mxu0 %v3418
        %3428 = vmatpush.bf16.msra.mxu0 %v3417
        %3429 = vmatpush.bf16.msra.mxu0 %v3416
        %3430 = vmatpush.bf16.msra.mxu0 %v3415
        %3431 = vmatmul.bf16.gmra.mxu0 %v3368
        %v3432 = vpop.f32.mrf.mxu0
        %v3433 = vadd.f32 0.0, %v3432
        %v3434 = vpop.f32.mrf.mxu0
        %v3435 = vadd.f32 0.0, %v3434
        %3436 = vmatmul.bf16.gmra.mxu0 %v3371
        %v3437 = vpop.f32.mrf.mxu0
        %v3438 = vadd.f32 0.0, %v3437
        %v3439 = vpop.f32.mrf.mxu0
        %3440 = vdwg.mxu0
        %v3441 = vpack.c.bf16 %v3333, %v3332
        %v3442 = vpack.c.bf16 %v3334, %v3334
        %v3443 = vpack.c.bf16 %v3385, %v3383
        %v3444 = vpack.c.bf16 %v3388, %v3388
        %v3445 = vpack.c.bf16 %v3435, %v3433
        %v3446 = vpack.c.bf16 %v3438, %v3438
        %v3448 = vsel %vm1190, %v3441, 0
        %v3451 = vsel %vm1190, %v3442, 0
        %v3454 = vsel %vm1190, %v3443, 0
        %v3457 = vsel %vm1190, %v3444, 0
        %3459 = vmatpush.bf16.xpose.msra.mxu0 0
        %3460 = vmatpush.bf16.xpose.msra.mxu0 0
        %3461 = vmatpush.bf16.xpose.msra.mxu0 0
        %3462 = vmatpush.bf16.xpose.msra.mxu0 0
        %3463 = vmatpush.bf16.xpose.msra.mxu0 0
        %3464 = vmatpush.bf16.xpose.msra.mxu0 0
        %3465 = vmatpush.bf16.xpose.msra.mxu0 %v3457
        %3466 = vmatpush.bf16.xpose.msra.mxu0 %v3454
        %3467 = vmatmul.bf16.gmra.mxu0 %v3448
        %v3468 = vpop.f32.mrf.mxu0
        %v3469 = vadd.f32 0.0, %v3468
        %v3470 = vpop.f32.mrf.mxu0
        %v3471 = vadd.f32 0.0, %v3470
        %3472 = vmatmul.bf16.gmra.mxu0 %v3451
        %v3473 = vpop.f32.mrf.mxu0
        %v3474 = vadd.f32 0.0, %v3473
        %v3475 = vpop.f32.mrf.mxu0
        %3476 = vdwg.mxu0
        %v3477 = vsel %vm1221, %v3469, -inf
        %3478 = vmax.xlane.f32.xlu0 %v3477
        %v3479 = vpop.xlane.xlu0 %3478
        %v3480 = vsel %vm1221, %v3471, -inf
        %3481 = vmax.xlane.f32.xlu0 %v3480
        %v3482 = vpop.xlane.xlu0 %3481
        %v3483 = vsel %vm1228, %v3474, -inf
        %3484 = vmax.xlane.f32.xlu0 %v3483
        %v3485 = vpop.xlane.xlu0 %3484
        %v3486 = vsub.f32 %v3469, %v3479
        %v3487 = vsub.f32 %v3471, %v3482
        %v3488 = vsub.f32 %v3474, %v3485
        %v3489 = vmul.f32 %v3486, 1.442695
        %v3490 = vpow.pop %v3489
        %v3491 = vmul.f32 %v3487, 1.442695
        %v3492 = vpow.pop %v3491
        %v3493 = vmul.f32 %v3488, 1.442695
        %v3494 = vpow.pop %v3493
        %v3495 = vsel %vm1221, %v3490, 0.0
        %3496 = vadd.xlane.f32.xlu0 %v3495
        %v3497 = vpop.xlane.xlu0 %3496
        %v3498 = vsel %vm1221, %v3492, 0.0
        %3499 = vadd.xlane.f32.xlu0 %v3498
        %v3500 = vpop.xlane.xlu0 %3499
        %v3501 = vsel %vm1228, %v3494, 0.0
        %3502 = vadd.xlane.f32.xlu0 %v3501
        %v3503 = vpop.xlane.xlu0 %3502
        %v3504 = vrcp.pop %v3497
        %v3505 = vmul.f32 %v3497, %v3504
        %v3506 = vsub.f32 1.0, %v3505
        %v3507 = vmul.f32 %v3504, %v3506
        %v3508 = vadd.f32 %v3504, %v3507
        %vm3509 = vweird.f32 %v3497
        %vm3510 = vweird.f32 %v3504
        %vm3511 = vmor %vm3509, %vm3510
        %v3512 = vsel %vm3511, %v3504, %v3508
        %v3513 = vand.u32 2147483647, %v3497
        %vm3514 = vcmp.eq.f32.partialorder %v3513, 8.507059e+37
        %v3515 = vand.u32 %v3497, 2147483648
        %v3516 = vor.u32 1.1754944e-38, %v3515
        %v3517 = vsel %vm3514, %v3516, %v3512
        %v3518 = vmul.f32 %v3490, %v3517
        %v3519 = vrcp.pop %v3500
        %v3520 = vmul.f32 %v3500, %v3519
        %v3521 = vsub.f32 1.0, %v3520
        %v3522 = vmul.f32 %v3519, %v3521
        %v3523 = vadd.f32 %v3519, %v3522
        %vm3524 = vweird.f32 %v3500
        %vm3525 = vweird.f32 %v3519
        %vm3526 = vmor %vm3524, %vm3525
        %v3527 = vsel %vm3526, %v3519, %v3523
        %v3528 = vand.u32 2147483647, %v3500
        %vm3529 = vcmp.eq.f32.partialorder %v3528, 8.507059e+37
        %v3530 = vand.u32 %v3500, 2147483648
        %v3531 = vor.u32 1.1754944e-38, %v3530
        %v3532 = vsel %vm3529, %v3531, %v3527
        %v3533 = vmul.f32 %v3492, %v3532
        %v3534 = vrcp.pop %v3503
        %v3535 = vmul.f32 %v3503, %v3534
        %v3536 = vsub.f32 1.0, %v3535
        %v3537 = vmul.f32 %v3534, %v3536
        %v3538 = vadd.f32 %v3534, %v3537
        %vm3539 = vweird.f32 %v3503
        %vm3540 = vweird.f32 %v3534
        %vm3541 = vmor %vm3539, %vm3540
        %v3542 = vsel %vm3541, %v3534, %v3538
        %v3543 = vand.u32 2147483647, %v3503
        %vm3544 = vcmp.eq.f32.partialorder %v3543, 8.507059e+37
        %v3545 = vand.u32 %v3503, 2147483648
        %v3546 = vor.u32 1.1754944e-38, %v3545
        %v3547 = vsel %vm3544, %v3546, %v3542
        %v3548 = vmul.f32 %v3494, %v3547
        %v3549 = vpack.c.bf16 %v3533, %v3518
        %v3550 = vpack.c.bf16 %v3548, %v3548
        %v3552 = vsel %vm1221, %v3549, 0
        %v3555 = vsel %vm1221, %v3550, 0
        %v3558 = vand.u32 %v3446, %v1304
        %3560 = vmatpush.bf16.msra.mxu0 0
        %3561 = vmatpush.bf16.msra.mxu0 0
        %3562 = vmatpush.bf16.msra.mxu0 0
        %3563 = vmatpush.bf16.msra.mxu0 0
        %3564 = vmatpush.bf16.msra.mxu0 0
        %3565 = vmatpush.bf16.msra.mxu0 0
        %3566 = vmatpush.bf16.msra.mxu0 %v3558
        %3567 = vmatpush.bf16.msra.mxu0 %v3445
        %3568 = vmatmul.bf16.gmra.mxu0 %v3552
        %v3569 = vpop.f32.mrf.mxu0
        %v3570 = vadd.f32 0.0, %v3569
        %v3571 = vpop.f32.mrf.mxu0
        %v3572 = vadd.f32 0.0, %v3571
        %3573 = vmatmul.bf16.gmra.mxu0 %v3555
        %v3574 = vpop.f32.mrf.mxu0
        %v3575 = vadd.f32 0.0, %v3574
        %v3576 = vpop.f32.mrf.mxu0
        %3577 = vdwg.mxu0
        %3580 = vrot.lane.b32.xlu0 %v3441, 112
        %v3581 = vpop.permute.xlu0 %3580
        %3582 = vrot.lane.b32.xlu0 %v3442, 112
        %v3583 = vpop.permute.xlu0 %3582
        %3586 = vrot.lane.b32.xlu0 %v3443, 112
        %v3587 = vpop.permute.xlu0 %3586
        %3588 = vrot.lane.b32.xlu0 %v3444, 112
        %v3589 = vpop.permute.xlu0 %3588
        %v3591 = vsel %vm1190, %v3581, 0
        %v3594 = vsel %vm1190, %v3583, 0
        %v3597 = vsel %vm1190, %v3587, 0
        %v3600 = vsel %vm1190, %v3589, 0
        %3602 = vmatpush.bf16.xpose.msra.mxu0 0
        %3603 = vmatpush.bf16.xpose.msra.mxu0 0
        %3604 = vmatpush.bf16.xpose.msra.mxu0 0
        %3605 = vmatpush.bf16.xpose.msra.mxu0 0
        %3606 = vmatpush.bf16.xpose.msra.mxu0 0
        %3607 = vmatpush.bf16.xpose.msra.mxu0 0
        %3608 = vmatpush.bf16.xpose.msra.mxu0 %v3600
        %3609 = vmatpush.bf16.xpose.msra.mxu0 %v3597
        %3610 = vmatmul.bf16.gmra.mxu0 %v3591
        %v3611 = vpop.f32.mrf.mxu0
        %v3612 = vadd.f32 0.0, %v3611
        %v3613 = vpop.f32.mrf.mxu0
        %v3614 = vadd.f32 0.0, %v3613
        %3615 = vmatmul.bf16.gmra.mxu0 %v3594
        %v3616 = vpop.f32.mrf.mxu0
        %v3617 = vadd.f32 0.0, %v3616
        %v3618 = vpop.f32.mrf.mxu0
        %3619 = vdwg.mxu0
        %v3620 = vsel %vm1221, %v3612, -inf
        %3621 = vmax.xlane.f32.xlu0 %v3620
        %v3622 = vpop.xlane.xlu0 %3621
        %v3623 = vsel %vm1221, %v3614, -inf
        %3624 = vmax.xlane.f32.xlu0 %v3623
        %v3625 = vpop.xlane.xlu0 %3624
        %v3626 = vsel %vm1228, %v3617, -inf
        %3627 = vmax.xlane.f32.xlu0 %v3626
        %v3628 = vpop.xlane.xlu0 %3627
        %v3629 = vsub.f32 %v3612, %v3622
        %v3630 = vsub.f32 %v3614, %v3625
        %v3631 = vsub.f32 %v3617, %v3628
        %v3632 = vmul.f32 %v3629, 1.442695
        %v3633 = vpow.pop %v3632
        %v3634 = vmul.f32 %v3630, 1.442695
        %v3635 = vpow.pop %v3634
        %v3636 = vmul.f32 %v3631, 1.442695
        %v3637 = vpow.pop %v3636
        %v3638 = vsel %vm1221, %v3633, 0.0
        %3639 = vadd.xlane.f32.xlu0 %v3638
        %v3640 = vpop.xlane.xlu0 %3639
        %v3641 = vsel %vm1221, %v3635, 0.0
        %3642 = vadd.xlane.f32.xlu0 %v3641
        %v3643 = vpop.xlane.xlu0 %3642
        %v3644 = vsel %vm1228, %v3637, 0.0
        %3645 = vadd.xlane.f32.xlu0 %v3644
        %v3646 = vpop.xlane.xlu0 %3645
        %v3647 = vrcp.pop %v3640
        %v3648 = vmul.f32 %v3640, %v3647
        %v3649 = vsub.f32 1.0, %v3648
        %v3650 = vmul.f32 %v3647, %v3649
        %v3651 = vadd.f32 %v3647, %v3650
        %vm3652 = vweird.f32 %v3640
        %vm3653 = vweird.f32 %v3647
        %vm3654 = vmor %vm3652, %vm3653
        %v3655 = vsel %vm3654, %v3647, %v3651
        %v3656 = vand.u32 2147483647, %v3640
        %vm3657 = vcmp.eq.f32.partialorder %v3656, 8.507059e+37
        %v3658 = vand.u32 %v3640, 2147483648
        %v3659 = vor.u32 1.1754944e-38, %v3658
        %v3660 = vsel %vm3657, %v3659, %v3655
        %v3661 = vmul.f32 %v3633, %v3660
        %v3662 = vrcp.pop %v3643
        %v3663 = vmul.f32 %v3643, %v3662
        %v3664 = vsub.f32 1.0, %v3663
        %v3665 = vmul.f32 %v3662, %v3664
        %v3666 = vadd.f32 %v3662, %v3665
        %vm3667 = vweird.f32 %v3643
        %vm3668 = vweird.f32 %v3662
        %vm3669 = vmor %vm3667, %vm3668
        %v3670 = vsel %vm3669, %v3662, %v3666
        %v3671 = vand.u32 2147483647, %v3643
        %vm3672 = vcmp.eq.f32.partialorder %v3671, 8.507059e+37
        %v3673 = vand.u32 %v3643, 2147483648
        %v3674 = vor.u32 1.1754944e-38, %v3673
        %v3675 = vsel %vm3672, %v3674, %v3670
        %v3676 = vmul.f32 %v3635, %v3675
        %v3677 = vrcp.pop %v3646
        %v3678 = vmul.f32 %v3646, %v3677
        %v3679 = vsub.f32 1.0, %v3678
        %v3680 = vmul.f32 %v3677, %v3679
        %v3681 = vadd.f32 %v3677, %v3680
        %vm3682 = vweird.f32 %v3646
        %vm3683 = vweird.f32 %v3677
        %vm3684 = vmor %vm3682, %vm3683
        %v3685 = vsel %vm3684, %v3677, %v3681
        %v3686 = vand.u32 2147483647, %v3646
        %vm3687 = vcmp.eq.f32.partialorder %v3686, 8.507059e+37
        %v3688 = vand.u32 %v3646, 2147483648
        %v3689 = vor.u32 1.1754944e-38, %v3688
        %v3690 = vsel %vm3687, %v3689, %v3685
        %v3691 = vmul.f32 %v3637, %v3690
        %v3692 = vadd.f32 %v3518, %v3661
        %v3693 = vadd.f32 %v3533, %v3676
        %v3694 = vadd.f32 %v3548, %v3691
        %v3695 = vpack.c.bf16 %v3676, %v3661
        %v3696 = vpack.c.bf16 %v3691, %v3691
        %3699 = vrot.lane.b32.xlu0 %v3445, 112
        %v3700 = vpop.permute.xlu0 %3699
        %3701 = vrot.lane.b32.xlu0 %v3446, 112
        %v3702 = vpop.permute.xlu0 %3701
        %v3705 = vsel %vm1221, %v3695, 0
        %v3708 = vsel %vm1221, %v3696, 0
        %v3711 = vand.u32 %v3702, %v1304
        %3713 = vmatpush.bf16.msra.mxu0 0
        %3714 = vmatpush.bf16.msra.mxu0 0
        %3715 = vmatpush.bf16.msra.mxu0 0
        %3716 = vmatpush.bf16.msra.mxu0 0
        %3717 = vmatpush.bf16.msra.mxu0 0
        %3718 = vmatpush.bf16.msra.mxu0 0
        %3719 = vmatpush.bf16.msra.mxu0 %v3711
        %3720 = vmatpush.bf16.msra.mxu0 %v3700
        %3721 = vmatmul.bf16.gmra.mxu0 %v3705
        %v3722 = vpop.f32.mrf.mxu0
        %v3723 = vadd.f32 0.0, %v3722
        %v3724 = vpop.f32.mrf.mxu0
        %v3725 = vadd.f32 0.0, %v3724
        %3726 = vmatmul.bf16.gmra.mxu0 %v3708
        %v3727 = vpop.f32.mrf.mxu0
        %v3728 = vadd.f32 0.0, %v3727
        %v3729 = vpop.f32.mrf.mxu0
        %3730 = vdwg.mxu0
        %3731 = vrot.lane.b32.xlu0 %v3441, 96
        %v3732 = vpop.permute.xlu0 %3731
        %3733 = vrot.lane.b32.xlu0 %v3442, 96
        %v3734 = vpop.permute.xlu0 %3733
        %3735 = vrot.lane.b32.xlu0 %v3443, 96
        %v3736 = vpop.permute.xlu0 %3735
        %3737 = vrot.lane.b32.xlu0 %v3444, 96
        %v3738 = vpop.permute.xlu0 %3737
        %v3740 = vsel %vm1190, %v3732, 0
        %v3743 = vsel %vm1190, %v3734, 0
        %v3746 = vsel %vm1190, %v3736, 0
        %v3749 = vsel %vm1190, %v3738, 0
        %3751 = vmatpush.bf16.xpose.msra.mxu0 0
        %3752 = vmatpush.bf16.xpose.msra.mxu0 0
        %3753 = vmatpush.bf16.xpose.msra.mxu0 0
        %3754 = vmatpush.bf16.xpose.msra.mxu0 0
        %3755 = vmatpush.bf16.xpose.msra.mxu0 0
        %3756 = vmatpush.bf16.xpose.msra.mxu0 0
        %3757 = vmatpush.bf16.xpose.msra.mxu0 %v3749
        %3758 = vmatpush.bf16.xpose.msra.mxu0 %v3746
        %3759 = vmatmul.bf16.gmra.mxu0 %v3740
        %v3760 = vpop.f32.mrf.mxu0
        %v3761 = vadd.f32 0.0, %v3760
        %v3762 = vpop.f32.mrf.mxu0
        %v3763 = vadd.f32 0.0, %v3762
        %3764 = vmatmul.bf16.gmra.mxu0 %v3743
        %v3765 = vpop.f32.mrf.mxu0
        %v3766 = vadd.f32 0.0, %v3765
        %v3767 = vpop.f32.mrf.mxu0
        %3768 = vdwg.mxu0
        %v3769 = vsel %vm1221, %v3761, -inf
        %3770 = vmax.xlane.f32.xlu0 %v3769
        %v3771 = vpop.xlane.xlu0 %3770
        %v3772 = vsel %vm1221, %v3763, -inf
        %3773 = vmax.xlane.f32.xlu0 %v3772
        %v3774 = vpop.xlane.xlu0 %3773
        %v3775 = vsel %vm1228, %v3766, -inf
        %3776 = vmax.xlane.f32.xlu0 %v3775
        %v3777 = vpop.xlane.xlu0 %3776
        %v3778 = vsub.f32 %v3761, %v3771
        %v3779 = vsub.f32 %v3763, %v3774
        %v3780 = vsub.f32 %v3766, %v3777
        %v3781 = vmul.f32 %v3778, 1.442695
        %v3782 = vpow.pop %v3781
        %v3783 = vmul.f32 %v3779, 1.442695
        %v3784 = vpow.pop %v3783
        %v3785 = vmul.f32 %v3780, 1.442695
        %v3786 = vpow.pop %v3785
        %v3787 = vsel %vm1221, %v3782, 0.0
        %3788 = vadd.xlane.f32.xlu0 %v3787
        %v3789 = vpop.xlane.xlu0 %3788
        %v3790 = vsel %vm1221, %v3784, 0.0
        %3791 = vadd.xlane.f32.xlu0 %v3790
        %v3792 = vpop.xlane.xlu0 %3791
        %v3793 = vsel %vm1228, %v3786, 0.0
        %3794 = vadd.xlane.f32.xlu0 %v3793
        %v3795 = vpop.xlane.xlu0 %3794
        %v3796 = vrcp.pop %v3789
        %v3797 = vmul.f32 %v3789, %v3796
        %v3798 = vsub.f32 1.0, %v3797
        %v3799 = vmul.f32 %v3796, %v3798
        %v3800 = vadd.f32 %v3796, %v3799
        %vm3801 = vweird.f32 %v3789
        %vm3802 = vweird.f32 %v3796
        %vm3803 = vmor %vm3801, %vm3802
        %v3804 = vsel %vm3803, %v3796, %v3800
        %v3805 = vand.u32 2147483647, %v3789
        %vm3806 = vcmp.eq.f32.partialorder %v3805, 8.507059e+37
        %v3807 = vand.u32 %v3789, 2147483648
        %v3808 = vor.u32 1.1754944e-38, %v3807
        %v3809 = vsel %vm3806, %v3808, %v3804
        %v3810 = vmul.f32 %v3782, %v3809
        %v3811 = vrcp.pop %v3792
        %v3812 = vmul.f32 %v3792, %v3811
        %v3813 = vsub.f32 1.0, %v3812
        %v3814 = vmul.f32 %v3811, %v3813
        %v3815 = vadd.f32 %v3811, %v3814
        %vm3816 = vweird.f32 %v3792
        %vm3817 = vweird.f32 %v3811
        %vm3818 = vmor %vm3816, %vm3817
        %v3819 = vsel %vm3818, %v3811, %v3815
        %v3820 = vand.u32 2147483647, %v3792
        %vm3821 = vcmp.eq.f32.partialorder %v3820, 8.507059e+37
        %v3822 = vand.u32 %v3792, 2147483648
        %v3823 = vor.u32 1.1754944e-38, %v3822
        %v3824 = vsel %vm3821, %v3823, %v3819
        %v3825 = vmul.f32 %v3784, %v3824
        %v3826 = vrcp.pop %v3795
        %v3827 = vmul.f32 %v3795, %v3826
        %v3828 = vsub.f32 1.0, %v3827
        %v3829 = vmul.f32 %v3826, %v3828
        %v3830 = vadd.f32 %v3826, %v3829
        %vm3831 = vweird.f32 %v3795
        %vm3832 = vweird.f32 %v3826
        %vm3833 = vmor %vm3831, %vm3832
        %v3834 = vsel %vm3833, %v3826, %v3830
        %v3835 = vand.u32 2147483647, %v3795
        %vm3836 = vcmp.eq.f32.partialorder %v3835, 8.507059e+37
        %v3837 = vand.u32 %v3795, 2147483648
        %v3838 = vor.u32 1.1754944e-38, %v3837
        %v3839 = vsel %vm3836, %v3838, %v3834
        %v3840 = vmul.f32 %v3786, %v3839
        %v3841 = vadd.f32 %v3692, %v3810
        %v3842 = vadd.f32 %v3693, %v3825
        %v3843 = vadd.f32 %v3694, %v3840
        %v3844 = vpack.c.bf16 %v3825, %v3810
        %v3845 = vpack.c.bf16 %v3840, %v3840
        %3846 = vrot.lane.b32.xlu0 %v3445, 96
        %v3847 = vpop.permute.xlu0 %3846
        %3848 = vrot.lane.b32.xlu0 %v3446, 96
        %v3849 = vpop.permute.xlu0 %3848
        %v3852 = vsel %vm1221, %v3844, 0
        %v3855 = vsel %vm1221, %v3845, 0
        %v3858 = vand.u32 %v3849, %v1304
        %3860 = vmatpush.bf16.msra.mxu0 0
        %3861 = vmatpush.bf16.msra.mxu0 0
        %3862 = vmatpush.bf16.msra.mxu0 0
        %3863 = vmatpush.bf16.msra.mxu0 0
        %3864 = vmatpush.bf16.msra.mxu0 0
        %3865 = vmatpush.bf16.msra.mxu0 0
        %3866 = vmatpush.bf16.msra.mxu0 %v3858
        %3867 = vmatpush.bf16.msra.mxu0 %v3847
        %3868 = vmatmul.bf16.gmra.mxu0 %v3852
        %v3869 = vpop.f32.mrf.mxu0
        %v3870 = vadd.f32 0.0, %v3869
        %v3871 = vpop.f32.mrf.mxu0
        %v3872 = vadd.f32 0.0, %v3871
        %3873 = vmatmul.bf16.gmra.mxu0 %v3855
        %v3874 = vpop.f32.mrf.mxu0
        %v3875 = vadd.f32 0.0, %v3874
        %v3876 = vpop.f32.mrf.mxu0
        %3877 = vdwg.mxu0
        %3878 = vrot.lane.b32.xlu0 %v3441, 80
        %v3879 = vpop.permute.xlu0 %3878
        %3880 = vrot.lane.b32.xlu0 %v3442, 80
        %v3881 = vpop.permute.xlu0 %3880
        %3882 = vrot.lane.b32.xlu0 %v3443, 80
        %v3883 = vpop.permute.xlu0 %3882
        %3884 = vrot.lane.b32.xlu0 %v3444, 80
        %v3885 = vpop.permute.xlu0 %3884
        %v3887 = vsel %vm1190, %v3879, 0
        %v3890 = vsel %vm1190, %v3881, 0
        %v3893 = vsel %vm1190, %v3883, 0
        %v3896 = vsel %vm1190, %v3885, 0
        %3898 = vmatpush.bf16.xpose.msra.mxu0 0
        %3899 = vmatpush.bf16.xpose.msra.mxu0 0
        %3900 = vmatpush.bf16.xpose.msra.mxu0 0
        %3901 = vmatpush.bf16.xpose.msra.mxu0 0
        %3902 = vmatpush.bf16.xpose.msra.mxu0 0
        %3903 = vmatpush.bf16.xpose.msra.mxu0 0
        %3904 = vmatpush.bf16.xpose.msra.mxu0 %v3896
        %3905 = vmatpush.bf16.xpose.msra.mxu0 %v3893
        %3906 = vmatmul.bf16.gmra.mxu0 %v3887
        %v3907 = vpop.f32.mrf.mxu0
        %v3908 = vadd.f32 0.0, %v3907
        %v3909 = vpop.f32.mrf.mxu0
        %v3910 = vadd.f32 0.0, %v3909
        %3911 = vmatmul.bf16.gmra.mxu0 %v3890
        %v3912 = vpop.f32.mrf.mxu0
        %v3913 = vadd.f32 0.0, %v3912
        %v3914 = vpop.f32.mrf.mxu0
        %3915 = vdwg.mxu0
        %v3916 = vsel %vm1221, %v3908, -inf
        %3917 = vmax.xlane.f32.xlu0 %v3916
        %v3918 = vpop.xlane.xlu0 %3917
        %v3919 = vsel %vm1221, %v3910, -inf
        %3920 = vmax.xlane.f32.xlu0 %v3919
        %v3921 = vpop.xlane.xlu0 %3920
        %v3922 = vsel %vm1228, %v3913, -inf
        %3923 = vmax.xlane.f32.xlu0 %v3922
        %v3924 = vpop.xlane.xlu0 %3923
        %v3925 = vsub.f32 %v3908, %v3918
        %v3926 = vsub.f32 %v3910, %v3921
        %v3927 = vsub.f32 %v3913, %v3924
        %v3928 = vmul.f32 %v3925, 1.442695
        %v3929 = vpow.pop %v3928
        %v3930 = vmul.f32 %v3926, 1.442695
        %v3931 = vpow.pop %v3930
        %v3932 = vmul.f32 %v3927, 1.442695
        %v3933 = vpow.pop %v3932
        %v3934 = vsel %vm1221, %v3929, 0.0
        %3935 = vadd.xlane.f32.xlu0 %v3934
        %v3936 = vpop.xlane.xlu0 %3935
        %v3937 = vsel %vm1221, %v3931, 0.0
        %3938 = vadd.xlane.f32.xlu0 %v3937
        %v3939 = vpop.xlane.xlu0 %3938
        %v3940 = vsel %vm1228, %v3933, 0.0
        %3941 = vadd.xlane.f32.xlu0 %v3940
        %v3942 = vpop.xlane.xlu0 %3941
        %v3943 = vrcp.pop %v3936
        %v3944 = vmul.f32 %v3936, %v3943
        %v3945 = vsub.f32 1.0, %v3944
        %v3946 = vmul.f32 %v3943, %v3945
        %v3947 = vadd.f32 %v3943, %v3946
        %vm3948 = vweird.f32 %v3936
        %vm3949 = vweird.f32 %v3943
        %vm3950 = vmor %vm3948, %vm3949
        %v3951 = vsel %vm3950, %v3943, %v3947
        %v3952 = vand.u32 2147483647, %v3936
        %vm3953 = vcmp.eq.f32.partialorder %v3952, 8.507059e+37
        %v3954 = vand.u32 %v3936, 2147483648
        %v3955 = vor.u32 1.1754944e-38, %v3954
        %v3956 = vsel %vm3953, %v3955, %v3951
        %v3957 = vmul.f32 %v3929, %v3956
        %v3958 = vrcp.pop %v3939
        %v3959 = vmul.f32 %v3939, %v3958
        %v3960 = vsub.f32 1.0, %v3959
        %v3961 = vmul.f32 %v3958, %v3960
        %v3962 = vadd.f32 %v3958, %v3961
        %vm3963 = vweird.f32 %v3939
        %vm3964 = vweird.f32 %v3958
        %vm3965 = vmor %vm3963, %vm3964
        %v3966 = vsel %vm3965, %v3958, %v3962
        %v3967 = vand.u32 2147483647, %v3939
        %vm3968 = vcmp.eq.f32.partialorder %v3967, 8.507059e+37
        %v3969 = vand.u32 %v3939, 2147483648
        %v3970 = vor.u32 1.1754944e-38, %v3969
        %v3971 = vsel %vm3968, %v3970, %v3966
        %v3972 = vmul.f32 %v3931, %v3971
        %v3973 = vrcp.pop %v3942
        %v3974 = vmul.f32 %v3942, %v3973
        %v3975 = vsub.f32 1.0, %v3974
        %v3976 = vmul.f32 %v3973, %v3975
        %v3977 = vadd.f32 %v3973, %v3976
        %vm3978 = vweird.f32 %v3942
        %vm3979 = vweird.f32 %v3973
        %vm3980 = vmor %vm3978, %vm3979
        %v3981 = vsel %vm3980, %v3973, %v3977
        %v3982 = vand.u32 2147483647, %v3942
        %vm3983 = vcmp.eq.f32.partialorder %v3982, 8.507059e+37
        %v3984 = vand.u32 %v3942, 2147483648
        %v3985 = vor.u32 1.1754944e-38, %v3984
        %v3986 = vsel %vm3983, %v3985, %v3981
        %v3987 = vmul.f32 %v3933, %v3986
        %v3988 = vadd.f32 %v3841, %v3957
        %v3989 = vadd.f32 %v3842, %v3972
        %v3990 = vadd.f32 %v3843, %v3987
        %v3991 = vpack.c.bf16 %v3972, %v3957
        %v3992 = vpack.c.bf16 %v3987, %v3987
        %3993 = vrot.lane.b32.xlu0 %v3445, 80
        %v3994 = vpop.permute.xlu0 %3993
        %3995 = vrot.lane.b32.xlu0 %v3446, 80
        %v3996 = vpop.permute.xlu0 %3995
        %v3999 = vsel %vm1221, %v3991, 0
        %v4002 = vsel %vm1221, %v3992, 0
        %v4005 = vand.u32 %v3996, %v1304
        %4007 = vmatpush.bf16.msra.mxu0 0
        %4008 = vmatpush.bf16.msra.mxu0 0
        %4009 = vmatpush.bf16.msra.mxu0 0
        %4010 = vmatpush.bf16.msra.mxu0 0
        %4011 = vmatpush.bf16.msra.mxu0 0
        %4012 = vmatpush.bf16.msra.mxu0 0
        %4013 = vmatpush.bf16.msra.mxu0 %v4005
        %4014 = vmatpush.bf16.msra.mxu0 %v3994
        %4015 = vmatmul.bf16.gmra.mxu0 %v3999
        %v4016 = vpop.f32.mrf.mxu0
        %v4017 = vadd.f32 0.0, %v4016
        %v4018 = vpop.f32.mrf.mxu0
        %v4019 = vadd.f32 0.0, %v4018
        %4020 = vmatmul.bf16.gmra.mxu0 %v4002
        %v4021 = vpop.f32.mrf.mxu0
        %v4022 = vadd.f32 0.0, %v4021
        %v4023 = vpop.f32.mrf.mxu0
        %4024 = vdwg.mxu0
        %4028 = vrot.lane.b32.xlu0 %v3723, 16
        %v4029 = vpop.permute.xlu0 %4028
        %4030 = vrot.lane.b32.xlu0 %v3725, 16
        %v4031 = vpop.permute.xlu0 %4030
        %4032 = vrot.lane.b32.xlu0 %v3728, 16
        %v4033 = vpop.permute.xlu0 %4032
        %4040 = vrot.lane.b32.xlu0 %v3870, 32
        %v4041 = vpop.permute.xlu0 %4040
        %4042 = vrot.lane.b32.xlu0 %v3872, 32
        %v4043 = vpop.permute.xlu0 %4042
        %4044 = vrot.lane.b32.xlu0 %v3875, 32
        %v4045 = vpop.permute.xlu0 %4044
        %4052 = vrot.lane.b32.xlu0 %v4017, 48
        %v4053 = vpop.permute.xlu0 %4052
        %4054 = vrot.lane.b32.xlu0 %v4019, 48
        %v4055 = vpop.permute.xlu0 %4054
        %4056 = vrot.lane.b32.xlu0 %v4022, 48
        %v4057 = vpop.permute.xlu0 %4056
        %v4061 = vsel %vm1190, %v3570, %v4029
        %v4062 = vsel %vm1190, %v3572, %v4031
        %v4063 = vsel %vm1190, %v3575, %v4033
        %v4064 = vsel %vm1803, %v4061, %v4041
        %v4065 = vsel %vm1803, %v4062, %v4043
        %v4066 = vsel %vm1803, %v4063, %v4045
        %v4067 = vsel %vm1807, %v4064, %v4053
        %v4068 = vsel %vm1807, %v4065, %v4055
        %v4069 = vsel %vm1807, %v4066, %v4057
        %v4070 = vpack.c.bf16 %v4068, %v4067
        %v4071 = vpack.c.bf16 %v4069, %v4069
        %v4072 = vld [vmem:[#allocation5] sm:$0xf]
        %v4073 = vld [vmem:[#allocation5 + $0x4] sm:$0xf]
        %v4074 = vld [vmem:[#allocation5 + $0x8] sm:$0xf]
        %v4075 = vld [vmem:[#allocation5 + $0xc] sm:$0xf]
        %v4076 = vld [vmem:[#allocation5 + $0x10] sm:$0xf]
        %v4077 = vld [vmem:[#allocation5 + $0x14] sm:$0xf]
        %v4078 = vld [vmem:[#allocation5 + $0x18] sm:$0xf]
        %v4079 = vld [vmem:[#allocation5 + $0x1c] sm:$0xf]
        %v4080 = vld [vmem:[%s16] sm:$0x1]
        %v4082 = vperm.slane %v4080, 0
        %v4092 = vunpack.c.l.b16 %v4072
        %v4093 = vunpack.c.l.b16 %v4073
        %v4094 = vunpack.c.l.b16 %v4074
        %v4095 = vunpack.c.l.b16 %v4075
        %v4096 = vunpack.c.l.b16 %v4076
        %v4097 = vunpack.c.l.b16 %v4077
        %v4098 = vunpack.c.l.b16 %v4078
        %v4099 = vunpack.c.l.b16 %v4079
        %v4100 = vpack.c.b16 %v4093, %v4092
        %v4101 = vpack.c.b16 %v4095, %v4094
        %v4102 = vpack.c.b16 %v4097, %v4096
        %v4103 = vpack.c.b16 %v4099, %v4098
        %v4109 = vsel %vm830, %v4070, 0
        %v4112 = vsel %vm830, %v4071, 0
        %4114 = vmatpush.bf16.msra.mxu0 0
        %4115 = vmatpush.bf16.msra.mxu0 0
        %4116 = vmatpush.bf16.msra.mxu0 0
        %4117 = vmatpush.bf16.msra.mxu0 0
        %4118 = vmatpush.bf16.msra.mxu0 %v4103
        %4119 = vmatpush.bf16.msra.mxu0 %v4102
        %4120 = vmatpush.bf16.msra.mxu0 %v4101
        %4121 = vmatpush.bf16.msra.mxu0 %v4100
        %4122 = vmatmul.bf16.gmra.mxu0 %v4109
        %v4123 = vpop.f32.mrf.mxu0
        %v4124 = vadd.f32 %v4082, %v4123
        %v4125 = vpop.f32.mrf.mxu0
        %v4126 = vadd.f32 %v4082, %v4125
        %4127 = vmatmul.bf16.gmra.mxu0 %v4112
        %v4128 = vpop.f32.mrf.mxu0
        %v4129 = vadd.f32 %v4082, %v4128
        %v4130 = vpop.f32.mrf.mxu0
        %4131 = vdwg.mxu0
        %v4132 = vmax.f32 %v4124, 0.0
        %v4133 = vmax.f32 %v4126, 0.0
        %v4134 = vmax.f32 %v4129, 0.0
        %v4135 = vmul.f32 %v4132, -2.0
        %v4136 = vmul.f32 %v4133, -2.0
        %v4137 = vmul.f32 %v4134, -2.0
        %v4138 = vmul.f32 %v4135, 1.442695
        %v4139 = vpow.pop %v4138
        %v4140 = vmul.f32 %v4136, 1.442695
        %v4141 = vpow.pop %v4140
        %v4142 = vmul.f32 %v4137, 1.442695
        %v4143 = vpow.pop %v4142
        %v4144 = vsub.f32 1.0, %v4139
        %v4145 = vsub.f32 1.0, %v4141
        %v4146 = vsub.f32 1.0, %v4143
        %v4147 = vmul.f32 %v4139, 0.01831564
        %v4148 = vmul.f32 %v4141, 0.01831564
        %v4149 = vmul.f32 %v4143, 0.01831564
        %v4150 = vadd.f32 %v4147, 1.0
        %v4151 = vadd.f32 %v4148, 1.0
        %v4152 = vadd.f32 %v4149, 1.0
        %v4153 = vrcp.pop %v4150
        %v4154 = vmul.f32 %v4150, %v4153
        %v4155 = vsub.f32 1.0, %v4154
        %v4156 = vmul.f32 %v4153, %v4155
        %v4157 = vadd.f32 %v4153, %v4156
        %vm4158 = vweird.f32 %v4150
        %vm4159 = vweird.f32 %v4153
        %vm4160 = vmor %vm4158, %vm4159
        %v4161 = vsel %vm4160, %v4153, %v4157
        %v4162 = vand.u32 2147483647, %v4150
        %vm4163 = vcmp.eq.f32.partialorder %v4162, 8.507059e+37
        %v4164 = vand.u32 %v4150, 2147483648
        %v4165 = vor.u32 1.1754944e-38, %v4164
        %v4166 = vsel %vm4163, %v4165, %v4161
        %v4167 = vmul.f32 %v4144, %v4166
        %v4168 = vrcp.pop %v4151
        %v4169 = vmul.f32 %v4151, %v4168
        %v4170 = vsub.f32 1.0, %v4169
        %v4171 = vmul.f32 %v4168, %v4170
        %v4172 = vadd.f32 %v4168, %v4171
        %vm4173 = vweird.f32 %v4151
        %vm4174 = vweird.f32 %v4168
        %vm4175 = vmor %vm4173, %vm4174
        %v4176 = vsel %vm4175, %v4168, %v4172
        %v4177 = vand.u32 2147483647, %v4151
        %vm4178 = vcmp.eq.f32.partialorder %v4177, 8.507059e+37
        %v4179 = vand.u32 %v4151, 2147483648
        %v4180 = vor.u32 1.1754944e-38, %v4179
        %v4181 = vsel %vm4178, %v4180, %v4176
        %v4182 = vmul.f32 %v4145, %v4181
        %v4183 = vrcp.pop %v4152
        %v4184 = vmul.f32 %v4152, %v4183
        %v4185 = vsub.f32 1.0, %v4184
        %v4186 = vmul.f32 %v4183, %v4185
        %v4187 = vadd.f32 %v4183, %v4186
        %vm4188 = vweird.f32 %v4152
        %vm4189 = vweird.f32 %v4183
        %vm4190 = vmor %vm4188, %vm4189
        %v4191 = vsel %vm4190, %v4183, %v4187
        %v4192 = vand.u32 2147483647, %v4152
        %vm4193 = vcmp.eq.f32.partialorder %v4192, 8.507059e+37
        %v4194 = vand.u32 %v4152, 2147483648
        %v4195 = vor.u32 1.1754944e-38, %v4194
        %v4196 = vsel %vm4193, %v4195, %v4191
        %v4197 = vmul.f32 %v4146, %v4196
        %v4198 = vadd.f32 %v3111, %v4167
        %v4199 = vadd.f32 %v3112, %v4182
        %v4200 = vadd.f32 %v3113, %v4197
        %v4201 = vsel %vm830, %v4167, 0.0
        %4202 = vadd.xlane.f32.xlu0 %v4201
        %v4203 = vpop.xlane.xlu0 %4202
        %v4204 = vsel %vm830, %v4182, 0.0
        %4205 = vadd.xlane.f32.xlu0 %v4204
        %v4206 = vpop.xlane.xlu0 %4205
        %v4207 = vsel %vm837, %v4197, 0.0
        %4208 = vadd.xlane.f32.xlu0 %v4207
        %v4209 = vpop.xlane.xlu0 %4208
        %v4210 = vmul.f32 %v4203, %v847
        %v4211 = vmul.f32 %v4206, %v847
        %v4212 = vmul.f32 %v4209, %v847
        %v4213 = vsub.f32 %v4167, %v4210
        %v4214 = vsub.f32 %v4182, %v4211
        %v4215 = vsub.f32 %v4197, %v4212
        %v4216 = vmul.f32 %v4213, %v4213
        %v4217 = vmul.f32 %v4214, %v4214
        %v4218 = vmul.f32 %v4215, %v4215
        %v4219 = vsel %vm830, %v4216, 0.0
        %4220 = vadd.xlane.f32.xlu0 %v4219
        %v4221 = vpop.xlane.xlu0 %4220
        %v4222 = vsel %vm830, %v4217, 0.0
        %4223 = vadd.xlane.f32.xlu0 %v4222
        %v4224 = vpop.xlane.xlu0 %4223
        %v4225 = vsel %vm837, %v4218, 0.0
        %4226 = vadd.xlane.f32.xlu0 %v4225
        %v4227 = vpop.xlane.xlu0 %4226
        %v4228 = vmul.f32 %v4221, %v847
        %v4229 = vmul.f32 %v4224, %v847
        %v4230 = vmul.f32 %v4227, %v847
        %v4231 = vadd.f32 %v4228, 1e-05
        %v4232 = vadd.f32 %v4229, 1e-05
        %v4233 = vadd.f32 %v4230, 1e-05
        %v4234 = vrsqrt.pop %v4231
        %v4235 = vmul.f32 %v4234, %v4231
        %v4236 = vmul.f32 %v4235, %v4234
        %v4237 = vmul.f32 0.5, %v4236
        %v4238 = vsub.f32 1.5, %v4237
        %v4239 = vmul.f32 %v4234, %v4238
        %vm4240 = vweird.f32 %v4231
        %vm4241 = vweird.f32 %v4234
        %vm4242 = vmor %vm4240, %vm4241
        %v4243 = vsel %vm4242, %v4234, %v4239
        %v4244 = vrsqrt.pop %v4232
        %v4245 = vmul.f32 %v4244, %v4232
        %v4246 = vmul.f32 %v4245, %v4244
        %v4247 = vmul.f32 0.5, %v4246
        %v4248 = vsub.f32 1.5, %v4247
        %v4249 = vmul.f32 %v4244, %v4248
        %vm4250 = vweird.f32 %v4232
        %vm4251 = vweird.f32 %v4244
        %vm4252 = vmor %vm4250, %vm4251
        %v4253 = vsel %vm4252, %v4244, %v4249
        %v4254 = vrsqrt.pop %v4233
        %v4255 = vmul.f32 %v4254, %v4233
        %v4256 = vmul.f32 %v4255, %v4254
        %v4257 = vmul.f32 0.5, %v4256
        %v4258 = vsub.f32 1.5, %v4257
        %v4259 = vmul.f32 %v4254, %v4258
        %vm4260 = vweird.f32 %v4233
        %vm4261 = vweird.f32 %v4254
        %vm4262 = vmor %vm4260, %vm4261
        %v4263 = vsel %vm4262, %v4254, %v4259
        %v4264 = vmul.f32 %v4213, %v4243
        %v4265 = vmul.f32 %v4214, %v4253
        %v4266 = vmul.f32 %v4215, %v4263
        %v4267 = vmul.f32 %v4264, %v2639
        %v4268 = vmul.f32 %v4265, %v2639
        %v4269 = vmul.f32 %v4266, %v2639
        %v4270 = vadd.f32 %v4267, %v2645
        %v4271 = vadd.f32 %v4268, %v2645
        %v4272 = vadd.f32 %v4269, %v2645
        %v4273 = vpack.c.bf16 %v4271, %v4270
        %v4274 = vpack.c.bf16 %v4272, %v4272
        %v4276 = vsel %vm830, %v4273, 0
        %v4279 = vsel %vm830, %v4274, 0
        %4281 = vmatpush.bf16.msra.mxu0 0
        %4282 = vmatpush.bf16.msra.mxu0 0
        %4283 = vmatpush.bf16.msra.mxu0 0
        %4284 = vmatpush.bf16.msra.mxu0 0
        %4285 = vmatpush.bf16.msra.mxu0 %v2772
        %4286 = vmatpush.bf16.msra.mxu0 %v2770
        %4287 = vmatpush.bf16.msra.mxu0 %v2768
        %4288 = vmatpush.bf16.msra.mxu0 %v2766
        %4289 = vmatmul.bf16.gmra.mxu0 %v4276
        %v4290 = vpop.f32.mrf.mxu0
        %v4291 = vadd.f32 %v2738, %v4290
        %v4292 = vpop.f32.mrf.mxu0
        %v4293 = vadd.f32 %v2738, %v4292
        %4294 = vmatmul.bf16.gmra.mxu0 %v4279
        %v4295 = vpop.f32.mrf.mxu0
        %v4296 = vadd.f32 %v2738, %v4295
        %v4297 = vpop.f32.mrf.mxu0
        %4298 = vdwg.mxu0
        %4299 = vmatpush.bf16.msra.mxu0 0
        %4300 = vmatpush.bf16.msra.mxu0 0
        %4301 = vmatpush.bf16.msra.mxu0 0
        %4302 = vmatpush.bf16.msra.mxu0 0
        %4303 = vmatpush.bf16.msra.mxu0 %v2773
        %4304 = vmatpush.bf16.msra.mxu0 %v2771
        %4305 = vmatpush.bf16.msra.mxu0 %v2769
        %4306 = vmatpush.bf16.msra.mxu0 %v2767
        %4307 = vmatmul.bf16.gmra.mxu0 %v4276
        %v4308 = vpop.f32.mrf.mxu0
        %v4309 = vadd.f32 %v2739, %v4308
        %v4310 = vpop.f32.mrf.mxu0
        %v4311 = vadd.f32 %v2739, %v4310
        %4312 = vmatmul.bf16.gmra.mxu0 %v4279
        %v4313 = vpop.f32.mrf.mxu0
        %v4314 = vadd.f32 %v2739, %v4313
        %v4315 = vpop.f32.mrf.mxu0
        %4316 = vdwg.mxu0
        %v4317 = vmul.f32 %v4291, 0.5
        %v4318 = vmul.f32 %v4309, 0.5
        %v4319 = vmul.f32 %v4293, 0.5
        %v4320 = vmul.f32 %v4311, 0.5
        %v4321 = vmul.f32 %v4296, 0.5
        %v4322 = vmul.f32 %v4314, 0.5
        %v4323 = vmul.f32 %v4291, 0.044715
        %v4324 = vmul.f32 %v4309, 0.044715
        %v4325 = vmul.f32 %v4293, 0.044715
        %v4326 = vmul.f32 %v4311, 0.044715
        %v4327 = vmul.f32 %v4296, 0.044715
        %v4328 = vmul.f32 %v4314, 0.044715
        %v4329 = vmul.f32 %v4323, %v4291
        %v4330 = vmul.f32 %v4324, %v4309
        %v4331 = vmul.f32 %v4325, %v4293
        %v4332 = vmul.f32 %v4326, %v4311
        %v4333 = vmul.f32 %v4327, %v4296
        %v4334 = vmul.f32 %v4328, %v4314
        %v4335 = vmul.f32 %v4329, %v4291
        %v4336 = vmul.f32 %v4330, %v4309
        %v4337 = vmul.f32 %v4331, %v4293
        %v4338 = vmul.f32 %v4332, %v4311
        %v4339 = vmul.f32 %v4333, %v4296
        %v4340 = vmul.f32 %v4334, %v4314
        %v4341 = vadd.f32 %v4291, %v4335
        %v4342 = vadd.f32 %v4309, %v4336
        %v4343 = vadd.f32 %v4293, %v4337
        %v4344 = vadd.f32 %v4311, %v4338
        %v4345 = vadd.f32 %v4296, %v4339
        %v4346 = vadd.f32 %v4314, %v4340
        %v4347 = vmul.f32 %v4341, 0.7978846
        %v4348 = vmul.f32 %v4342, 0.7978846
        %v4349 = vmul.f32 %v4343, 0.7978846
        %v4350 = vmul.f32 %v4344, 0.7978846
        %v4351 = vmul.f32 %v4345, 0.7978846
        %v4352 = vmul.f32 %v4346, 0.7978846
        %v4353 = vtanh.pop %v4347
        %v4354 = vtanh.pop %v4348
        %v4355 = vtanh.pop %v4349
        %v4356 = vtanh.pop %v4350
        %v4357 = vtanh.pop %v4351
        %v4358 = vtanh.pop %v4352
        %v4359 = vadd.f32 %v4353, 1.0
        %v4360 = vadd.f32 %v4354, 1.0
        %v4361 = vadd.f32 %v4355, 1.0
        %v4362 = vadd.f32 %v4356, 1.0
        %v4363 = vadd.f32 %v4357, 1.0
        %v4364 = vadd.f32 %v4358, 1.0
        %v4365 = vmul.f32 %v4317, %v4359
        %v4366 = vmul.f32 %v4318, %v4360
        %v4367 = vmul.f32 %v4319, %v4361
        %v4368 = vmul.f32 %v4320, %v4362
        %v4369 = vmul.f32 %v4321, %v4363
        %v4370 = vmul.f32 %v4322, %v4364
        %v4371 = vpack.c.bf16 %v4367, %v4365
        %v4372 = vpack.c.bf16 %v4368, %v4366
        %v4373 = vpack.c.bf16 %v4369, %v4369
        %v4374 = vpack.c.bf16 %v4370, %v4370
        %4375 = vmatpush.bf16.msra.mxu0 %v3040
        %4376 = vmatpush.bf16.msra.mxu0 %v3039
        %4377 = vmatpush.bf16.msra.mxu0 %v3038
        %4378 = vmatpush.bf16.msra.mxu0 %v3037
        %4379 = vmatpush.bf16.msra.mxu0 %v3036
        %4380 = vmatpush.bf16.msra.mxu0 %v3035
        %4381 = vmatpush.bf16.msra.mxu0 %v3034
        %4382 = vmatpush.bf16.msra.mxu0 %v3033
        %4383 = vmatmul.bf16.gmra.mxu0 %v4371
        %v4384 = vpop.f32.mrf.mxu0
        %v4385 = vadd.f32 %v2967, %v4384
        %v4386 = vpop.f32.mrf.mxu0
        %v4387 = vadd.f32 %v2967, %v4386
        %4388 = vmatmul.bf16.gmra.mxu0 %v4373
        %v4389 = vpop.f32.mrf.mxu0
        %v4390 = vadd.f32 %v2967, %v4389
        %v4391 = vpop.f32.mrf.mxu0
        %4392 = vdwg.mxu0
        %4393 = vmatpush.bf16.msra.mxu0 %v3048
        %4394 = vmatpush.bf16.msra.mxu0 %v3047
        %4395 = vmatpush.bf16.msra.mxu0 %v3046
        %4396 = vmatpush.bf16.msra.mxu0 %v3045
        %4397 = vmatpush.bf16.msra.mxu0 %v3044
        %4398 = vmatpush.bf16.msra.mxu0 %v3043
        %4399 = vmatpush.bf16.msra.mxu0 %v3042
        %4400 = vmatpush.bf16.msra.mxu0 %v3041
        %4401 = vmatmul.bf16.gmra.mxu0 %v4372
        %v4402 = vpop.f32.mrf.mxu0
        %v4403 = vadd.f32 %v4385, %v4402
        %v4404 = vpop.f32.mrf.mxu0
        %v4405 = vadd.f32 %v4387, %v4404
        %4406 = vmatmul.bf16.gmra.mxu0 %v4374
        %v4407 = vpop.f32.mrf.mxu0
        %v4408 = vadd.f32 %v4390, %v4407
        %v4409 = vpop.f32.mrf.mxu0
        %4410 = vdwg.mxu0
        %v4411 = vadd.f32 %v4198, %v4403
        %v4412 = vadd.f32 %v4199, %v4405
        %v4413 = vadd.f32 %v4200, %v4408
        %4414 = vxpose.xlu0.b32.start [1/16] %v3988, 128
        %4415 = vxpose.xlu0.b32.cont [2/16] %v3989, 128
        %4416 = vxpose.xlu0.b32.cont [3/16] %v3990, 128
        %4417 = vxpose.xlu0.b32.cont [4/16] 0.0, 128
        %4418 = vxpose.xlu0.b32.cont [5/16] 0.0, 128
        %4419 = vxpose.xlu0.b32.cont [6/16] 0.0, 128
        %4420 = vxpose.xlu0.b32.cont [7/16] 0.0, 128
        %4421 = vxpose.xlu0.b32.cont [8/16] 0.0, 128
        %4422 = vxpose.xlu0.b32.cont [9/16] 0.0, 128
        %4423 = vxpose.xlu0.b32.cont [10/16] 0.0, 128
        %4424 = vxpose.xlu0.b32.cont [11/16] 0.0, 128
        %4425 = vxpose.xlu0.b32.cont [12/16] 0.0, 128
        %4426 = vxpose.xlu0.b32.cont [13/16] 0.0, 128
        %4427 = vxpose.xlu0.b32.cont [14/16] 0.0, 128
        %4428 = vxpose.xlu0.b32.cont [15/16] 0.0, 128
        %4429 = vxpose.xlu0.b32.end [16/16] 0.0, 128
        %v4430 = vpop.trf.xlu0
        %v4431 = vpop.trf.xlu0
        %v4432 = vpop.trf.xlu0
        %v4433 = vpop.trf.xlu0
        %v4434 = vpop.trf.xlu0
        %v4435 = vpop.trf.xlu0
        %v4436 = vpop.trf.xlu0
        %v4437 = vpop.trf.xlu0
        %v4438 = vpop.trf.xlu0
        %v4439 = vpop.trf.xlu0
        %v4440 = vpop.trf.xlu0
        %v4441 = vpop.trf.xlu0
        %v4442 = vpop.trf.xlu0
        %v4443 = vpop.trf.xlu0
        %v4444 = vpop.trf.xlu0
        %v4445 = vpop.trf.xlu0
        %v4447 = vsel %vm1221, %v4430, 0
        %v4450 = vsel %vm1221, %v4431, 0
        %v4453 = vsel %vm1221, %v4432, 0
        %v4456 = vsel %vm992, 0.05882353, 0
        %4458 = vmatpush.msra.mxu0 0.0
        %4459 = vmatpush.msra.mxu0 0.0
        %4460 = vmatpush.msra.mxu0 0.0
        %4461 = vmatpush.msra.mxu0 0.0
        %4462 = vmatpush.msra.mxu0 0.0
        %4463 = vmatpush.msra.mxu0 0.0
        %4464 = vmatpush.msra.mxu0 0.0
        %4465 = vmatpush.msra.mxu0 0.0
        %4466 = vmatpush.msra.mxu0 0.0
        %4467 = vmatpush.msra.mxu0 0.0
        %4468 = vmatpush.msra.mxu0 0.0
        %4469 = vmatpush.msra.mxu0 0.0
        %4470 = vmatpush.msra.mxu0 0.0
        %4471 = vmatpush.msra.mxu0 %v4456
        %4472 = vmatpush.msra.mxu0 0.05882353
        %4473 = vmatpush.msra.mxu0 0.05882353
        %4474 = vmatmul.f32.gmra.mxu0 %v4447
        %v4475 = vpop.f32.mrf.mxu0
        %v4476 = vadd.f32 0.0, %v4475
        %4477 = vmatmul.f32.gmra.mxu0 %v4450
        %v4478 = vpop.f32.mrf.mxu0
        %v4479 = vadd.f32 0.0, %v4478
        %4480 = vmatmul.f32.gmra.mxu0 %v4453
        %v4481 = vpop.f32.mrf.mxu0
        %v4482 = vadd.f32 0.0, %v4481
        %4483 = vdwg.mxu0
        %v4484 = vsub.f32 0.0, %v4476
        %v4485 = vsub.f32 0.0, %v4479
        %v4486 = vsub.f32 0.0, %v4482
        %v4487 = vmul.f32 %v4484, 1.442695
        %v4488 = vpow.pop %v4487
        %v4489 = vmul.f32 %v4485, 1.442695
        %v4490 = vpow.pop %v4489
        %v4491 = vmul.f32 %v4486, 1.442695
        %v4492 = vpow.pop %v4491
        %v4493 = vadd.f32 %v4488, 1.0
        %v4494 = vadd.f32 %v4490, 1.0
        %v4495 = vadd.f32 %v4492, 1.0
        %v4496 = vrcp.pop %v4493
        %v4497 = vmul.f32 %v4493, %v4496
        %v4498 = vsub.f32 1.0, %v4497
        %v4499 = vmul.f32 %v4496, %v4498
        %v4500 = vadd.f32 %v4496, %v4499
        %vm4501 = vweird.f32 %v4493
        %vm4502 = vweird.f32 %v4496
        %vm4503 = vmor %vm4501, %vm4502
        %v4504 = vsel %vm4503, %v4496, %v4500
        %v4505 = vand.u32 2147483647, %v4493
        %vm4506 = vcmp.eq.f32.partialorder %v4505, 8.507059e+37
        %v4507 = vand.u32 %v4493, 2147483648
        %v4508 = vor.u32 1.1754944e-38, %v4507
        %v4509 = vsel %vm4506, %v4508, %v4504
        %v4510 = vmul.f32 1.0, %v4509
        %v4511 = vrcp.pop %v4494
        %v4512 = vmul.f32 %v4494, %v4511
        %v4513 = vsub.f32 1.0, %v4512
        %v4514 = vmul.f32 %v4511, %v4513
        %v4515 = vadd.f32 %v4511, %v4514
        %vm4516 = vweird.f32 %v4494
        %vm4517 = vweird.f32 %v4511
        %vm4518 = vmor %vm4516, %vm4517
        %v4519 = vsel %vm4518, %v4511, %v4515
        %v4520 = vand.u32 2147483647, %v4494
        %vm4521 = vcmp.eq.f32.partialorder %v4520, 8.507059e+37
        %v4522 = vand.u32 %v4494, 2147483648
        %v4523 = vor.u32 1.1754944e-38, %v4522
        %v4524 = vsel %vm4521, %v4523, %v4519
        %v4525 = vmul.f32 1.0, %v4524
        %v4526 = vrcp.pop %v4495
        %v4527 = vmul.f32 %v4495, %v4526
        %v4528 = vsub.f32 1.0, %v4527
        %v4529 = vmul.f32 %v4526, %v4528
        %v4530 = vadd.f32 %v4526, %v4529
        %vm4531 = vweird.f32 %v4495
        %vm4532 = vweird.f32 %v4526
        %vm4533 = vmor %vm4531, %vm4532
        %v4534 = vsel %vm4533, %v4526, %v4530
        %v4535 = vand.u32 2147483647, %v4495
        %vm4536 = vcmp.eq.f32.partialorder %v4535, 8.507059e+37
        %v4537 = vand.u32 %v4495, 2147483648
        %v4538 = vor.u32 1.1754944e-38, %v4537
        %v4539 = vsel %vm4536, %v4538, %v4534
        %v4540 = vmul.f32 1.0, %v4539
        %v4541 = vld [vmem:[%s21] sm:$0x1]
        %v4543 = vperm.slane %v4541, 0
        %v4545 = vmul.f32 %v3125, %v4543
        %v4546 = vmul.f32 %v3126, %v4543
        %v4547 = vmul.f32 %v3127, %v4543
        %4549 = vset.pattern.permute.xlu0 0
        %4550 = vperm.xlu0 %4549, %v4510
        %v4551 = vpop.permute.xlu0 %4550
        %4554 = vset.pattern.permute.xlu0 0
        %4555 = vperm.xlu0 %4554, %v4525
        %v4556 = vpop.permute.xlu0 %4555
        %4559 = vset.pattern.permute.xlu0 0
        %4560 = vperm.xlu0 %4559, %v4540
        %v4561 = vpop.permute.xlu0 %4560
        %v4563 = vmul.f32 %v4545, %v4551
        %v4564 = vmul.f32 %v4546, %v4556
        %v4565 = vmul.f32 %v4547, %v4561
        %v4566 = vadd.f32 %v3125, %v4563
        %v4567 = vadd.f32 %v3126, %v4564
        %v4568 = vadd.f32 %v3127, %v4565
        %4569 = vst.msk [vmem:[%s809] sm:$0xff] %vm830, %v4411
        %4570 = vst.msk [vmem:[%s809 + $0x8] sm:$0xff] %vm830, %v4412
        %4571 = vst.msk [vmem:[%s809 + $0x10] sm:$0x1] %vm837, %v4413
        %4572 = vst.msk [vmem:[%s814] sm:$0xff] %vm830, %v4566
        %4573 = vst.msk [vmem:[%s814 + $0x8] sm:$0xff] %vm830, %v4567
        %4574 = vst.msk [vmem:[%s814 + $0x10] sm:$0x1] %vm837, %v4568
        %4578 = vrot.lane.b32.xlu0 %v3988, 127
        %v4579 = vpop.permute.xlu0 %4578
        %4580 = vrot.lane.b32.xlu0 %v3989, 127
        %v4581 = vpop.permute.xlu0 %4580
        %4582 = vrot.lane.b32.xlu0 %v3990, 127
        %v4583 = vpop.permute.xlu0 %4582
        %vm4587 = vcmask 130049
        %4588 = vst.msk [vmem:[%s794 - $0x1] sm:$0xfe] %vm4587, %v4579
        %4589 = vst.msk [vmem:[%s794 + $0x7] sm:$0xff] %vm1190, %v4581
        %vm4590 = vcmask 122880
        %4591 = vst.msk [vmem:[%s794 + $0xf] sm:$0x1] %vm4590, %v4583
        %p4592 = scmp.lt.s32.totalorder %s41, 1
        %s4593 = scalar_select %p4592, %s41, 1
        %s4594 = smul.addr %s4593, 3
        %s4595 = smul.addr %s4594, 8
        %s4596 = scalar_lea.vmem %s22, %s4595
        %p4597 = scmp.lt.s32.totalorder %s41, 1
        %s4598 = scalar_select %p4597, %s41, 1
        %s4599 = smul.addr %s4598, 3
        %s4600 = smul.addr %s4599, 8
        %s4601 = scalar_lea.vmem %s23, %s4600
        %s4602 = sand.u32 %s573, 1
        %s4603 = scalar_lea.sflag [#allocation4], %s4602
        %s4604 = sand.u32 %s573, 1
        %s4605 = smul.addr %s4604, 16
        %s4606 = scalar_lea.vmem [#allocation7], %s4605
        // Predicated region
        $region117: #{tpu_custom_call.1} parent=107 // pred_check
          %p4607 = pneg %p531
        $region118: #{tpu_custom_call.1} parent=107 // pred_check_branch
          %4609 = sbr.rel (%p4607) target = $region120
        $region119: #{tpu_custom_call.1} parent=107 // pred_region
          _
        $region120: #{tpu_custom_call.1} parent=107 // pred_fallthru
          _
        // Predicated region
        $region121: #{tpu_custom_call.1} parent=107 // pred_check
          %p4610 = pneg %p557
        $region122: #{tpu_custom_call.1} parent=107 // pred_check_branch
          %4612 = sbr.rel (%p4610) target = $region124
        $region123: #{tpu_custom_call.1} parent=107 // pred_region
          _
        $region124: #{tpu_custom_call.1} parent=107 // pred_fallthru
          _
        // Predicated region
        $region125: #{tpu_custom_call.1} parent=107 // pred_check
          %p4613 = pneg %p583
        $region126: #{tpu_custom_call.1} parent=107 // pred_check_branch
          %4615 = sbr.rel (%p4613) target = $region128
        $region127: #{tpu_custom_call.1} parent=107 // pred_region
          %4617 = vsyncadd %s4603, 0
          %s4618 = smul.addr %s41, 2
          %s4619 = smul.addr %s4618, 8
          %s4620 = scalar_lea.hbm %s24, %s4619
          %s4621 = sshll.u32 %s4606, 4
          %s4622 = int_to_ptr.vmem [resolvable:$true] %s4621
          %s4623 = sshll.u32 %s4620, 4
          %s4624 = int_to_ptr.hbm [resolvable:$true] %s4623
          %4629 = dma.vmem_to_hbm [thread:$0]  %s4622, 256, %s4624, %s4603, 128, 128, 8
        $region128: #{tpu_custom_call.1} parent=107 // pred_fallthru
          _
      $region108: #{tpu_custom_call.1} parent=5 // pred_fallthru
        _
      %p4630 = scmp.le.s32.totalorder 2, %s36
      // Predicated region
      $region129: #{tpu_custom_call.1} parent=5 // pred_check
        %p4631 = pneg %p4630
      $region130: #{tpu_custom_call.1} parent=5 // pred_check_branch
        %4633 = sbr.rel (%p4631) target = $region132
      $region131: #{tpu_custom_call.1} parent=5 // pred_region
        %s4634 = ssub.s32 %s36, 2
        // Predicated region
        $region133: #{tpu_custom_call.1} parent=131 // pred_check
          %p4635 = pneg %p537
        $region134: #{tpu_custom_call.1} parent=131 // pred_check_branch
          %4637 = sbr.rel (%p4635) target = $region136
        $region135: #{tpu_custom_call.1} parent=131 // pred_region
          %p4638 = scmp.lt.s32.totalorder %s42, 1
          %s4639 = scalar_select %p4638, %s42, 1
          %s4640 = smul.addr %s4639, 3
          %s4641 = smul.addr %s4640, 8
          %s4642 = scalar_lea.vmem %s22, %s4641
        $region136: #{tpu_custom_call.1} parent=131 // pred_fallthru
          _
        // Predicated region
        $region137: #{tpu_custom_call.1} parent=131 // pred_check
          %p4643 = pneg %p563
        $region138: #{tpu_custom_call.1} parent=131 // pred_check_branch
          %4645 = sbr.rel (%p4643) target = $region140
        $region139: #{tpu_custom_call.1} parent=131 // pred_region
          %p4646 = scmp.lt.s32.totalorder %s42, 1
          %s4647 = scalar_select %p4646, %s42, 1
          %s4648 = smul.addr %s4647, 3
          %s4649 = smul.addr %s4648, 8
          %s4650 = scalar_lea.vmem %s23, %s4649
        $region140: #{tpu_custom_call.1} parent=131 // pred_fallthru
          _
        // Predicated region
        $region141: #{tpu_custom_call.1} parent=131 // pred_check
          %p4651 = pneg %p589
        $region142: #{tpu_custom_call.1} parent=131 // pred_check_branch
          %4653 = sbr.rel (%p4651) target = $region144
        $region143: #{tpu_custom_call.1} parent=131 // pred_region
          %s4654 = sand.u32 %s574, 1
          %s4655 = scalar_lea.sflag [#allocation4], %s4654
          %s4656 = sand.u32 %s574, 1
          %s4657 = smul.addr %s4656, 16
          %s4658 = scalar_lea.vmem [#allocation7], %s4657
          %4660 = dma.done %s4655, 256
        $region144: #{tpu_custom_call.1} parent=131 // pred_fallthru
          _
      $region132: #{tpu_custom_call.1} parent=5 // pred_fallthru
        _
    $region6: #{tpu_custom_call.1} parent=1 // loop_footer
      %s40 = sadd.s32 1, %s36
    $region7: #{tpu_custom_call.1} parent=1 // loop_footer_branch
      %35 = sbr.rel target = $region3
    $region8: #{tpu_custom_call.1} parent=1 // loop_exit
      _
    %4661 = vsyncpa [#allocation3], 1
    %s4662 = scalar_lea.sflag [#allocation3], 1
    %4663 = vsyncpa %s4662, 1
    %4664 = vsyncpa [#allocation6], 1
    %4665 = vsyncpa [#allocation4], 1
    %s4666 = scalar_lea.sflag [#allocation4], 1
    %4667 = vsyncpa %s4666, 1

</llo_original>
